<compile_context>
chip_gen: v6e
topology: v6e:2x2x1
jax: 0.10.0
libtpu: 0.0.40
codegen_flags: <defaults>
</compile_context>

<pallas_src>
import functools
import math

import jax
import jax.numpy as jnp
from jax import lax
from jax.experimental import pallas as pl
from jax.experimental.pallas import tpu as pltpu


# Row indices inside the packed per-layer (L, 16, Dmax) bias/LN/mask tensor.
_R_LN1W, _R_LN1B = 0, 1
_R_BQ, _R_BK, _R_BV, _R_BO = 2, 3, 4, 5
_R_LN2W, _R_LN2B = 6, 7
_R_B1, _R_B2 = 8, 9
_R_KMASK = 10
_N_ROWS = 16  # padded to a sublane-friendly count


# -----------------------------------------------------------------------------
# Helpers
# -----------------------------------------------------------------------------
def _gelu_exact(x):
    # exact erf GELU (used on the XLA side; matches torch F.gelu / nn.GELU defaults)
    return 0.5 * x * (1.0 + lax.erf(x * (1.0 / math.sqrt(2.0))))


def _gelu_tanh(x):
    # tanh-approximate GELU for the in-kernel MLP activation (tanh runs on the EUP).
    # TODO(synk): switch to the exact erf form in-kernel if bit-level torch parity is required.
    c = math.sqrt(2.0 / math.pi)
    return 0.5 * x * (1.0 + jnp.tanh(c * (x + 0.044715 * x * x * x)))


def _layer_norm(x, w, b, eps=1e-5):
    mu = jnp.mean(x, axis=-1, keepdims=True)
    var = jnp.mean((x - mu) ** 2, axis=-1, keepdims=True)
    return (x - mu) * lax.rsqrt(var + eps) * w + b


# -----------------------------------------------------------------------------
# Fused encoder-stack kernel
# -----------------------------------------------------------------------------
def _encoder_stack_kernel(
    x_ref,                       # (B*S_pad, D) f32 tokens
    wq_ref, wk_ref, wv_ref,      # (1, H, D, hd) bf16 (head-major)
    wo_ref,                      # (1, H, hd, D) bf16
    w1_ref,                      # (1, D, dff)   bf16
    w2_ref,                      # (1, dff, D)   bf16
    bias_ref,                    # (1, 16, Dmax) f32 packed LN/bias/mask rows
    cls_ref,                     # (B, 1, D)     f32 output (class tokens)
    tok_ref,                     # VMEM scratch (B*S_pad, D) f32 carry across layers
    *, n_heads, batch, seq_pad,
):
    layer = pl.program_id(0)
    D = tok_ref.shape[-1]
    dff = w1_ref.shape[-1]
    hd = wq_ref.shape[-1]
    B, S = batch, seq_pad
    scale = 1.0 / math.sqrt(hd)

    # Load the token block into the VMEM carry once (first layer step).
    @pl.when(layer == 0)
    def _():
        tok_ref[...] = x_ref[...]

    x = tok_ref[...]                                       # (B*S, D) f32

    bias = bias_ref[0]                                     # (16, Dmax) f32
    ln1w, ln1b = bias[_R_LN1W:_R_LN1W + 1, :D], bias[_R_LN1B:_R_LN1B + 1, :D]
    ln2w, ln2b = bias[_R_LN2W:_R_LN2W + 1, :D], bias[_R_LN2B:_R_LN2B + 1, :D]
    bo_row = bias[_R_BO:_R_BO + 1, :D]
    b1_row = bias[_R_B1:_R_B1 + 1, :dff]
    b2_row = bias[_R_B2:_R_B2 + 1, :D]
    kbias = bias[_R_KMASK:_R_KMASK + 1, :S].reshape(1, 1, S)   # 0 / -1e30 key mask

    # ---- self-attention block (pre-norm): x = x + MHA(LN1(x)) ----
    h = _layer_norm(x, ln1w, ln1b)
    hb = h.astype(jnp.bfloat16)                            # shared LHS for all head dots

    attn = jnp.zeros((B * S, D), jnp.float32)
    for hix in range(n_heads):                             # static unroll over heads
        off = hix * hd
        bq_h = bias[_R_BQ:_R_BQ + 1, off:off + hd]
        bk_h = bias[_R_BK:_R_BK + 1, off:off + hd]
        bv_h = bias[_R_BV:_R_BV + 1, off:off + hd]

        # head-major weights: plain 2-D MXU dots, no activation lane-slicing
        q_h = jnp.dot(hb, wq_ref[0, hix], preferred_element_type=jnp.float32) + bq_h
        k_h = jnp.dot(hb, wk_ref[0, hix], preferred_element_type=jnp.float32) + bk_h
        v_h = jnp.dot(hb, wv_ref[0, hix], preferred_element_type=jnp.float32) + bv_h

        qb = q_h.reshape(B, S, hd).astype(jnp.bfloat16)    # leading-dim split: free
        kb = k_h.reshape(B, S, hd).astype(jnp.bfloat16)
        vb = v_h.reshape(B, S, hd).astype(jnp.bfloat16)

        s = jnp.einsum("bqd,bkd->bqk", qb, kb,
                       preferred_element_type=jnp.float32) * scale      # (B, S, S) f32
        s = s + kbias                                       # mask padded key positions
        s = s - jnp.max(s, axis=-1, keepdims=True)
        p = jnp.exp(s)
        p = p * pl.reciprocal(jnp.sum(p, axis=-1, keepdims=True), approx=True)

        ctx = jnp.einsum("bqk,bkd->bqd", p.astype(jnp.bfloat16), vb,
                         preferred_element_type=jnp.float32)            # (B, S, hd)
        ctxb = ctx.reshape(B * S, hd).astype(jnp.bfloat16)
        # accumulate this head's contribution through its slice of W_o (f32 acc)
        attn = attn + jnp.dot(ctxb, wo_ref[0, hix], preferred_element_type=jnp.float32)

    x = x + attn + bo_row

    # ---- feed-forward block (pre-norm): x = x + MLP(LN2(x)) ----
    h2 = _layer_norm(x, ln2w, ln2b)
    ff = jnp.dot(h2.astype(jnp.bfloat16), w1_ref[0],
                 preferred_element_type=jnp.float32) + b1_row
    ff = _gelu_tanh(ff)
    ff = jnp.dot(ff.astype(jnp.bfloat16), w2_ref[0],
                 preferred_element_type=jnp.float32) + b2_row
    x = x + ff

    tok_ref[...] = x
    # class token (row 0 of every batch element); lane-dense (B, 1, D) output block
    cls_ref[...] = x.reshape(B, S, D)[:, 0:1, :]


def encoder_stack(tokens, params, cfg, seq_len):
    """tokens: (B, S_pad, D) f32, S_pad a multiple of 8. Returns class tokens (B, D)."""
    B, S_pad, D = tokens.shape
    L, H = cfg["n_layers"], cfg["n_heads"]
    hd = D // H
    dff = params["w1"].shape[-1]
    d_max = max(D, dff, S_pad)

    # pack all per-layer small vectors + the key-padding additive bias into one tensor
    def row(v):                                   # (L, w) -> (L, 1, d_max)
        return jnp.pad(v, ((0, 0), (0, d_max - v.shape[-1])))[:, None, :]

    kmask = jnp.where(jnp.arange(S_pad) < seq_len, 0.0, -1e30).astype(jnp.float32)
    kmask = jnp.broadcast_to(kmask[None], (L, S_pad))
    pack = jnp.concatenate(
        [row(params["ln1_w"]), row(params["ln1_b"]),
         row(params["bq"]), row(params["bk"]), row(params["bv"]), row(params["bo"]),
         row(params["ln2_w"]), row(params["ln2_b"]),
         row(params["b1"]), row(params["b2"]),
         row(kmask)], axis=1)
    pack = jnp.pad(pack, ((0, 0), (0, _N_ROWS - pack.shape[1]), (0, 0)))

    x2d = tokens.reshape(B * S_pad, D)

    kernel = functools.partial(
        _encoder_stack_kernel, n_heads=H, batch=B, seq_pad=S_pad)

    cls = pl.pallas_call(
        kernel,
        out_shape=jax.ShapeDtypeStruct((B, 1, D), jnp.float32),
        grid=(L,),
        in_specs=[
            pl.BlockSpec((B * S_pad, D), lambda l: (0, 0)),           # tokens (resident)
            pl.BlockSpec((1, H, D, hd), lambda l: (l, 0, 0, 0)),      # wq (head-major)
            pl.BlockSpec((1, H, D, hd), lambda l: (l, 0, 0, 0)),      # wk
            pl.BlockSpec((1, H, D, hd), lambda l: (l, 0, 0, 0)),      # wv
            pl.BlockSpec((1, H, hd, D), lambda l: (l, 0, 0, 0)),      # wo
            pl.BlockSpec((1, D, dff), lambda l: (l, 0, 0)),           # mlp w1
            pl.BlockSpec((1, dff, D), lambda l: (l, 0, 0)),           # mlp w2
            pl.BlockSpec((1, _N_ROWS, d_max), lambda l: (l, 0, 0)),   # packed LN/bias/mask
        ],
        out_specs=pl.BlockSpec((B, 1, D), lambda l: (0, 0, 0)),
        scratch_shapes=[pltpu.VMEM((B * S_pad, D), jnp.float32)],
        compiler_params=pltpu.CompilerParams(
            dimension_semantics=("arbitrary",),
            # explicit scoped-VMEM budget (raise further for production shapes on
            # v5e/v6e; on v7x combine with bf16 weights + dff tiling, see header).
            vmem_limit_bytes=32 * 1024 * 1024),
    )(x2d, params["wq"], params["wk"], params["wv"], params["wo"],
      params["w1"], params["w2"], pack)
    return cls[:, 0, :]                                               # (B, D)


# -----------------------------------------------------------------------------
# Full forward: XLA glue (patch embed, class token, PE, output heads) + kernel
# -----------------------------------------------------------------------------
def ast_with_head_forward(params, x, cfg):
    ps, st = cfg["patch_size"], cfg["patch_stride"]
    sh = cfg["spec_shape"]
    D = cfg["d_model"]

    # nn.ZeroPad2d((0, mel_padding, 0, time_padding)) -> pad last dim by mel_padding,
    # second-to-last by time_padding (mel_padding derives from spec_shape[0], time from [1]).
    mel_pad = (st - (sh[0] - ps)) % st
    time_pad = (st - (sh[1] - ps)) % st
    x = jnp.pad(x, ((0, 0), (0, 0), (0, time_pad), (0, mel_pad)))

    # PatchEmbed conv (tiny glue, stays in XLA): (B,C,H,W) -> (B,D,oh,ow) -> (B,T,D)
    conv = lax.conv_general_dilated(
        x, params["patch_w"], window_strides=(st, st), padding="VALID",
        dimension_numbers=("NCHW", "OIHW", "NCHW"))
    B = x.shape[0]
    tokens = conv.reshape(B, D, -1).transpose(0, 2, 1) + params["patch_b"]

    emb = jnp.broadcast_to(params["embed_tokens"], (B, 1, D))
    seq = jnp.concatenate([emb, tokens], axis=1)
    seq_len = seq.shape[1]
    seq = seq + params["pe"][:, :seq_len, :]

    # pad S to a multiple of 8 (sublane aligned); padded keys masked in-kernel
    s_pad = -(-seq_len // 8) * 8
    if s_pad != seq_len:
        seq = jnp.pad(seq, ((0, 0), (0, s_pad - seq_len), (0, 0)))

    cls = encoder_stack(seq, params, cfg, seq_len)                    # (B, D)

    # out_proj + prediction_head (+ residual) + final_proj: (B, D) work, plain XLA
    t = cls @ params["out_w"] + params["out_b"]
    hh = _layer_norm(t, params["head_ln_w"], params["head_ln_b"])
    hh = _gelu_exact(hh @ params["head_w1"] + params["head_b1"])
    hh = hh @ params["head_w2"] + params["head_b2"]
    t = t + hh
    o = t @ params["final_w"] + params["final_b"]

    t0 = jax.nn.softplus(jnp.maximum(o[:, 0:1], 0.0))
    t1 = jax.nn.softplus(jnp.maximum(o[:, 1:2], 0.0))
    sustain = jax.nn.sigmoid(o[:, 2:3])
    t3 = jax.nn.softplus(jnp.maximum(o[:, 3:4], 0.0))
    return jnp.concatenate([t0, t1, sustain, t3], axis=1)             # (B, 4)


# -----------------------------------------------------------------------------
# Deterministic synthetic parameters (shapes follow the module's __init__)
# -----------------------------------------------------------------------------
def init_params(key, cfg):
    D, C = cfg["d_model"], cfg["in_channels"]
    ps, st = cfg["patch_size"], cfg["patch_stride"]
    sh = cfg["spec_shape"]
    L, H = cfg["n_layers"], cfg["n_heads"]
    hd = D // H
    d_out = cfg["d_out"]
    dff = D  # nn.TransformerEncoderLayer(d_model, n_heads, d_model, ...) -> dim_feedforward = d_model

    mel_pad = (st - (sh[0] - ps)) % st
    time_pad = (st - (sh[1] - ps)) % st
    out_h = (sh[0] + time_pad - ps) // st + 1
    out_w = (sh[1] + mel_pad - ps) // st + 1
    num_pos = out_h * out_w + 1                  # n_conditioning_outputs = 1

    keys = iter(jax.random.split(key, 64))

    def nrm(shape, scale=0.02, dtype=jnp.float32):
        return (scale * jax.random.normal(next(keys), shape)).astype(dtype)

    zeros = lambda s: jnp.zeros(s, jnp.float32)
    ones = lambda s: jnp.ones(s, jnp.float32)
    bf = jnp.bfloat16

    return {
        # patch embed (conv, OIHW) + positional encoding + class token
        "patch_w": nrm((D, C, ps, ps)),
        "patch_b": zeros((D,)),
        "pe": nrm((1, num_pos, D)),              # init='norm0.02'
        "embed_tokens": nrm((1, 1, D), 1e-6),
        # stacked per-layer encoder weights: bf16, head-major attention projections
        "wq": nrm((L, H, D, hd), dtype=bf),
        "wk": nrm((L, H, D, hd), dtype=bf),
        "wv": nrm((L, H, D, hd), dtype=bf),
        "wo": nrm((L, H, hd, D), dtype=bf),
        "w1": nrm((L, D, dff), dtype=bf),
        "w2": nrm((L, dff, D), dtype=bf),
        # stacked per-layer small vectors (packed into one tensor by the wrapper)
        "ln1_w": ones((L, D)), "ln1_b": zeros((L, D)),
        "bq": zeros((L, D)), "bk": zeros((L, D)), "bv": zeros((L, D)),
        "bo": zeros((L, D)),
        "ln2_w": ones((L, D)), "ln2_b": zeros((L, D)),
        "b1": zeros((L, dff)), "b2": zeros((L, D)),
        # out_proj + prediction head + final projection (XLA-side, f32)
        "out_w": nrm((D, D)), "out_b": zeros((D,)),
        "head_ln_w": ones((D,)), "head_ln_b": zeros((D,)),
        "head_w1": nrm((D, D)), "head_b1": zeros((D,)),
        "head_w2": nrm((D, D)), "head_b2": zeros((D,)),
        "final_w": nrm((D, d_out)), "final_b": zeros((d_out,)),
    }


# -----------------------------------------------------------------------------
if __name__ == "__main__":
    cfg = dict(
        d_model=32,
        d_out=16,
        n_heads=4,
        n_layers=2,
        patch_size=4,
        patch_stride=2,
        in_channels=2,
        spec_shape=(16, 16),
    )
    key = jax.random.PRNGKey(0)
    pkey, xkey = jax.random.split(key)
    params = init_params(pkey, cfg)

    # NCHW spectrogram input: (batch, channels, mel, time)
    x = jax.random.normal(
        xkey, (2, cfg["in_channels"]) + tuple(cfg["spec_shape"]), dtype=jnp.float32)

    fwd = jax.jit(functools.partial(ast_with_head_forward, cfg=cfg))
    out = jax.block_until_ready(fwd(params, x))

    assert out.shape == (2, 4), out.shape
    assert bool(jnp.all(jnp.isfinite(out)))
    # column 2 is sigmoid -> [0, 1]; columns 0, 1, 3 are softplus(relu(.)) >= log(2)
    assert bool(jnp.all((out[:, 2] >= 0.0) & (out[:, 2] <= 1.0)))
    assert bool(jnp.all(out[:, [0, 1, 3]] >= math.log(2.0) - 1e-4))
    print("KERNEL_OK")
</pallas_src>

<mosaic_0001>
module attributes {stable_mosaic.version = 11 : i64} {
  func.func @_encoder_stack_kernel(%arg0: i32, %arg1: memref<112x32xf32, #tpu.memory_space<vmem>>, %arg2: memref<1x4x32x8xbf16, #tpu.memory_space<vmem>>, %arg3: memref<1x4x32x8xbf16, #tpu.memory_space<vmem>>, %arg4: memref<1x4x32x8xbf16, #tpu.memory_space<vmem>>, %arg5: memref<1x4x8x32xbf16, #tpu.memory_space<vmem>>, %arg6: memref<1x32x32xbf16, #tpu.memory_space<vmem>>, %arg7: memref<1x32x32xbf16, #tpu.memory_space<vmem>>, %arg8: memref<1x16x56xf32, #tpu.memory_space<vmem>>, %arg9: memref<2x1x32xf32, #tpu.memory_space<vmem>>, %arg10: memref<112x32xf32, #tpu.memory_space<vmem>>) attributes {dimension_semantics = [#tpu.dimension_semantics<arbitrary>], iteration_bounds = array<i64: 2>, scalar_prefetch = 0 : i64, scratch_operands = 1 : i64, tpu.core_type = #tpu.core_type<tc>, window_params = [{pipeline_mode = #tpu.pipeline_mode<synchronous>, transform_indices = @transform_0, window_bounds = array<i64: 112, 32>}, {transform_indices = @transform_1, window_bounds = array<i64: 1, 4, 32, 8>}, {transform_indices = @transform_2, window_bounds = array<i64: 1, 4, 32, 8>}, {transform_indices = @transform_3, window_bounds = array<i64: 1, 4, 32, 8>}, {transform_indices = @transform_4, window_bounds = array<i64: 1, 4, 8, 32>}, {transform_indices = @transform_5, window_bounds = array<i64: 1, 32, 32>}, {transform_indices = @transform_6, window_bounds = array<i64: 1, 32, 32>}, {transform_indices = @transform_7, window_bounds = array<i64: 1, 16, 56>}, {pipeline_mode = #tpu.pipeline_mode<synchronous>, transform_indices = @transform_8, window_bounds = array<i64: 2, 1, 32>}]} {
    %c0_i32 = arith.constant 0 : i32
    %0 = arith.cmpi eq, %arg0, %c0_i32 : i32
    %1 = arith.extui %0 : i1 to i32
    %c0_i32_0 = arith.constant 0 : i32
    %2 = arith.cmpi ne, %1, %c0_i32_0 : i32
    scf.if %2 {
      %c0_129 = arith.constant 0 : index
      %c0_130 = arith.constant 0 : index
      %282 = vector.load %arg1[%c0_129, %c0_130] : memref<112x32xf32, #tpu.memory_space<vmem>>, vector<112x32xf32>
      %c0_131 = arith.constant 0 : index
      %c0_132 = arith.constant 0 : index
      %283 = vector.load %arg10[%c0_131, %c0_132] : memref<112x32xf32, #tpu.memory_space<vmem>>, vector<112x32xf32>
      tpu.vector_store %arg10[%c0_131, %c0_132], %282 {strides = array<i32>} : memref<112x32xf32, #tpu.memory_space<vmem>>, vector<112x32xf32>,
    } else {
    }
    %c0 = arith.constant 0 : index
    %c0_1 = arith.constant 0 : index
    %3 = vector.load %arg10[%c0, %c0_1] : memref<112x32xf32, #tpu.memory_space<vmem>>, vector<112x32xf32>
    %c0_2 = arith.constant 0 : index
    %c0_3 = arith.constant 0 : index
    %c0_4 = arith.constant 0 : index
    %4 = vector.load %arg8[%c0_2, %c0_3, %c0_4] : memref<1x16x56xf32, #tpu.memory_space<vmem>>, vector<1x16x56xf32>
    %5 = vector.shape_cast %4 : vector<1x16x56xf32> to vector<16x56xf32>
    %6 = vector.extract_strided_slice %5 {offsets = [0, 0], sizes = [1, 32], strides = [1, 1]} : vector<16x56xf32> to vector<1x32xf32>
    %7 = vector.extract_strided_slice %5 {offsets = [1, 0], sizes = [1, 32], strides = [1, 1]} : vector<16x56xf32> to vector<1x32xf32>
    %8 = vector.extract_strided_slice %5 {offsets = [6, 0], sizes = [1, 32], strides = [1, 1]} : vector<16x56xf32> to vector<1x32xf32>
    %9 = vector.extract_strided_slice %5 {offsets = [7, 0], sizes = [1, 32], strides = [1, 1]} : vector<16x56xf32> to vector<1x32xf32>
    %10 = vector.extract_strided_slice %5 {offsets = [5, 0], sizes = [1, 32], strides = [1, 1]} : vector<16x56xf32> to vector<1x32xf32>
    %11 = vector.extract_strided_slice %5 {offsets = [8, 0], sizes = [1, 32], strides = [1, 1]} : vector<16x56xf32> to vector<1x32xf32>
    %12 = vector.extract_strided_slice %5 {offsets = [9, 0], sizes = [1, 32], strides = [1, 1]} : vector<16x56xf32> to vector<1x32xf32>
    %13 = vector.extract_strided_slice %5 {offsets = [10, 0], sizes = [1, 56], strides = [1, 1]} : vector<16x56xf32> to vector<1x56xf32>
    %14 = vector.shape_cast %13 : vector<1x56xf32> to vector<1x1x56xf32>
    %cst = arith.constant dense<0.000000e+00> : vector<112xf32>
    %15 = vector.multi_reduction <add>, %3, %cst [1] : vector<112x32xf32> to vector<112xf32>
    %16 = vector.shape_cast %15 : vector<112xf32> to vector<112x1xf32>
    %cst_5 = arith.constant 3.200000e+01 : f32
    %17 = vector.broadcast %cst_5 : f32 to vector<112x1xf32>
    %18 = arith.divf %16, %17 : vector<112x1xf32>
    %19 = vector.broadcast %18 : vector<112x1xf32> to vector<112x32xf32>
    %20 = arith.subf %3, %19 : vector<112x32xf32>
    %21 = arith.mulf %20, %20 : vector<112x32xf32>
    %cst_6 = arith.constant dense<0.000000e+00> : vector<112xf32>
    %22 = vector.multi_reduction <add>, %21, %cst_6 [1] : vector<112x32xf32> to vector<112xf32>
    %23 = vector.shape_cast %22 : vector<112xf32> to vector<112x1xf32>
    %cst_7 = arith.constant 3.200000e+01 : f32
    %24 = vector.broadcast %cst_7 : f32 to vector<112x1xf32>
    %25 = arith.divf %23, %24 : vector<112x1xf32>
    %26 = vector.broadcast %18 : vector<112x1xf32> to vector<112x32xf32>
    %27 = arith.subf %3, %26 : vector<112x32xf32>
    %cst_8 = arith.constant 9.99999974E-6 : f32
    %28 = vector.broadcast %cst_8 : f32 to vector<112x1xf32>
    %29 = arith.addf %25, %28 : vector<112x1xf32>
    %30 = math.rsqrt %29 : vector<112x1xf32>
    %31 = vector.broadcast %30 : vector<112x1xf32> to vector<112x32xf32>
    %32 = arith.mulf %27, %31 : vector<112x32xf32>
    %33 = vector.broadcast %6 : vector<1x32xf32> to vector<112x32xf32>
    %34 = arith.mulf %32, %33 : vector<112x32xf32>
    %35 = vector.broadcast %7 : vector<1x32xf32> to vector<112x32xf32>
    %36 = arith.addf %34, %35 : vector<112x32xf32>
    %37 = arith.truncf %36 : vector<112x32xf32> to vector<112x32xbf16>
    %cst_9 = arith.constant 0.000000e+00 : f32
    %38 = vector.broadcast %cst_9 : f32 to vector<112x32xf32>
    %39 = vector.extract_strided_slice %5 {offsets = [2, 0], sizes = [1, 8], strides = [1, 1]} : vector<16x56xf32> to vector<1x8xf32>
    %40 = vector.extract_strided_slice %5 {offsets = [3, 0], sizes = [1, 8], strides = [1, 1]} : vector<16x56xf32> to vector<1x8xf32>
    %41 = vector.extract_strided_slice %5 {offsets = [4, 0], sizes = [1, 8], strides = [1, 1]} : vector<16x56xf32> to vector<1x8xf32>
    %c0_10 = arith.constant 0 : index
    %c0_11 = arith.constant 0 : index
    %c0_12 = arith.constant 0 : index
    %c0_13 = arith.constant 0 : index
    %42 = vector.load %arg2[%c0_10, %c0_11, %c0_12, %c0_13] : memref<1x4x32x8xbf16, #tpu.memory_space<vmem>>, vector<1x1x32x8xbf16>
    %43 = vector.shape_cast %42 : vector<1x1x32x8xbf16> to vector<32x8xbf16>
    %cst_14 = arith.constant dense<0.000000e+00> : vector<112x8xf32>
    %44 = tpu.matmul %37, %43, %cst_14 {dimension_numbers = #tpu.dot_dimension_numbers<[1], [0], [0], [1], [0, 0, 1, 1], [], []>} : vector<112x32xbf16>, vector<32x8xbf16>, vector<112x8xf32> -> vector<112x8xf32>
    %45 = vector.broadcast %39 : vector<1x8xf32> to vector<112x8xf32>
    %46 = arith.addf %44, %45 : vector<112x8xf32>
    %c0_15 = arith.constant 0 : index
    %c0_16 = arith.constant 0 : index
    %c0_17 = arith.constant 0 : index
    %c0_18 = arith.constant 0 : index
    %47 = vector.load %arg3[%c0_15, %c0_16, %c0_17, %c0_18] : memref<1x4x32x8xbf16, #tpu.memory_space<vmem>>, vector<1x1x32x8xbf16>
    %48 = vector.shape_cast %47 : vector<1x1x32x8xbf16> to vector<32x8xbf16>
    %cst_19 = arith.constant dense<0.000000e+00> : vector<112x8xf32>
    %49 = tpu.matmul %37, %48, %cst_19 {dimension_numbers = #tpu.dot_dimension_numbers<[1], [0], [0], [1], [0, 0, 1, 1], [], []>} : vector<112x32xbf16>, vector<32x8xbf16>, vector<112x8xf32> -> vector<112x8xf32>
    %50 = vector.broadcast %40 : vector<1x8xf32> to vector<112x8xf32>
    %51 = arith.addf %49, %50 : vector<112x8xf32>
    %c0_20 = arith.constant 0 : index
    %c0_21 = arith.constant 0 : index
    %c0_22 = arith.constant 0 : index
    %c0_23 = arith.constant 0 : index
    %52 = vector.load %arg4[%c0_20, %c0_21, %c0_22, %c0_23] : memref<1x4x32x8xbf16, #tpu.memory_space<vmem>>, vector<1x1x32x8xbf16>
    %53 = vector.shape_cast %52 : vector<1x1x32x8xbf16> to vector<32x8xbf16>
    %cst_24 = arith.constant dense<0.000000e+00> : vector<112x8xf32>
    %54 = tpu.matmul %37, %53, %cst_24 {dimension_numbers = #tpu.dot_dimension_numbers<[1], [0], [0], [1], [0, 0, 1, 1], [], []>} : vector<112x32xbf16>, vector<32x8xbf16>, vector<112x8xf32> -> vector<112x8xf32>
    %55 = vector.broadcast %41 : vector<1x8xf32> to vector<112x8xf32>
    %56 = arith.addf %54, %55 : vector<112x8xf32>
    %57 = vector.shape_cast %46 : vector<112x8xf32> to vector<2x56x8xf32>
    %58 = arith.truncf %57 : vector<2x56x8xf32> to vector<2x56x8xbf16>
    %59 = vector.shape_cast %51 : vector<112x8xf32> to vector<2x56x8xf32>
    %60 = arith.truncf %59 : vector<2x56x8xf32> to vector<2x56x8xbf16>
    %61 = vector.shape_cast %56 : vector<112x8xf32> to vector<2x56x8xf32>
    %62 = arith.truncf %61 : vector<2x56x8xf32> to vector<2x56x8xbf16>
    "tpu.trace_start"() <{level = 10 : i32, message = "bqd,bkd->bqk"}> : () -> ()
    %cst_25 = arith.constant dense<0.000000e+00> : vector<2x56x56xf32>
    %63 = tpu.matmul %58, %60, %cst_25 {dimension_numbers = #tpu.dot_dimension_numbers<[2], [2], [1], [1], [0, 0, 0, 1, 1, 1], [0], [0]>} : vector<2x56x8xbf16>, vector<2x56x8xbf16>, vector<2x56x56xf32> -> vector<2x56x56xf32>
    "tpu.trace_stop"() : () -> ()
    %cst_26 = arith.constant 0.353553385 : f32
    %64 = vector.broadcast %cst_26 : f32 to vector<2x56x56xf32>
    %65 = arith.mulf %63, %64 : vector<2x56x56xf32>
    %66 = vector.broadcast %14 : vector<1x1x56xf32> to vector<2x56x56xf32>
    %67 = arith.addf %65, %66 : vector<2x56x56xf32>
    %cst_27 = arith.constant dense<0xFF800000> : vector<2x56xf32>
    %68 = vector.multi_reduction <maximumf>, %67, %cst_27 [2] : vector<2x56x56xf32> to vector<2x56xf32>
    %69 = vector.shape_cast %68 : vector<2x56xf32> to vector<2x56x1xf32>
    %70 = vector.broadcast %69 : vector<2x56x1xf32> to vector<2x56x56xf32>
    %71 = arith.subf %67, %70 : vector<2x56x56xf32>
    %72 = math.exp %71 : vector<2x56x56xf32>
    %cst_28 = arith.constant dense<0.000000e+00> : vector<2x56xf32>
    %73 = vector.multi_reduction <add>, %72, %cst_28 [2] : vector<2x56x56xf32> to vector<2x56xf32>
    %74 = vector.shape_cast %73 : vector<2x56xf32> to vector<2x56x1xf32>
    %75 = tpu.reciprocal %74 {approx = true} : vector<2x56x1xf32> -> vector<2x56x1xf32>
    %76 = vector.broadcast %75 : vector<2x56x1xf32> to vector<2x56x56xf32>
    %77 = arith.mulf %72, %76 : vector<2x56x56xf32>
    %78 = arith.truncf %77 : vector<2x56x56xf32> to vector<2x56x56xbf16>
    "tpu.trace_start"() <{level = 10 : i32, message = "bqk,bkd->bqd"}> : () -> ()
    %cst_29 = arith.constant dense<0.000000e+00> : vector<2x56x8xf32>
    %79 = tpu.matmul %78, %62, %cst_29 {dimension_numbers = #tpu.dot_dimension_numbers<[2], [1], [1], [2], [0, 0, 0, 1, 1, 2], [0], [0]>} : vector<2x56x56xbf16>, vector<2x56x8xbf16>, vector<2x56x8xf32> -> vector<2x56x8xf32>
    "tpu.trace_stop"() : () -> ()
    %80 = vector.shape_cast %79 : vector<2x56x8xf32> to vector<112x8xf32>
    %81 = arith.truncf %80 : vector<112x8xf32> to vector<112x8xbf16>
    %c0_30 = arith.constant 0 : index
    %c0_31 = arith.constant 0 : index
    %c0_32 = arith.constant 0 : index
    %c0_33 = arith.constant 0 : index
    %82 = vector.load %arg5[%c0_30, %c0_31, %c0_32, %c0_33] : memref<1x4x8x32xbf16, #tpu.memory_space<vmem>>, vector<1x1x8x32xbf16>
    %83 = vector.shape_cast %82 : vector<1x1x8x32xbf16> to vector<8x32xbf16>
    %cst_34 = arith.constant dense<0.000000e+00> : vector<112x32xf32>
    %84 = tpu.matmul %81, %83, %cst_34 {dimension_numbers = #tpu.dot_dimension_numbers<[1], [0], [0], [1], [0, 0, 1, 1], [], []>} : vector<112x8xbf16>, vector<8x32xbf16>, vector<112x32xf32> -> vector<112x32xf32>
    %85 = arith.addf %38, %84 : vector<112x32xf32>
    %86 = vector.extract_strided_slice %5 {offsets = [2, 8], sizes = [1, 8], strides = [1, 1]} : vector<16x56xf32> to vector<1x8xf32>
    %87 = vector.extract_strided_slice %5 {offsets = [3, 8], sizes = [1, 8], strides = [1, 1]} : vector<16x56xf32> to vector<1x8xf32>
    %88 = vector.extract_strided_slice %5 {offsets = [4, 8], sizes = [1, 8], strides = [1, 1]} : vector<16x56xf32> to vector<1x8xf32>
    %c0_35 = arith.constant 0 : index
    %c1 = arith.constant 1 : index
    %c0_36 = arith.constant 0 : index
    %c0_37 = arith.constant 0 : index
    %89 = vector.load %arg2[%c0_35, %c1, %c0_36, %c0_37] : memref<1x4x32x8xbf16, #tpu.memory_space<vmem>>, vector<1x1x32x8xbf16>
    %90 = vector.shape_cast %89 : vector<1x1x32x8xbf16> to vector<32x8xbf16>
    %cst_38 = arith.constant dense<0.000000e+00> : vector<112x8xf32>
    %91 = tpu.matmul %37, %90, %cst_38 {dimension_numbers = #tpu.dot_dimension_numbers<[1], [0], [0], [1], [0, 0, 1, 1], [], []>} : vector<112x32xbf16>, vector<32x8xbf16>, vector<112x8xf32> -> vector<112x8xf32>
    %92 = vector.broadcast %86 : vector<1x8xf32> to vector<112x8xf32>
    %93 = arith.addf %91, %92 : vector<112x8xf32>
    %c0_39 = arith.constant 0 : index
    %c1_40 = arith.constant 1 : index
    %c0_41 = arith.constant 0 : index
    %c0_42 = arith.constant 0 : index
    %94 = vector.load %arg3[%c0_39, %c1_40, %c0_41, %c0_42] : memref<1x4x32x8xbf16, #tpu.memory_space<vmem>>, vector<1x1x32x8xbf16>
    %95 = vector.shape_cast %94 : vector<1x1x32x8xbf16> to vector<32x8xbf16>
    %cst_43 = arith.constant dense<0.000000e+00> : vector<112x8xf32>
    %96 = tpu.matmul %37, %95, %cst_43 {dimension_numbers = #tpu.dot_dimension_numbers<[1], [0], [0], [1], [0, 0, 1, 1], [], []>} : vector<112x32xbf16>, vector<32x8xbf16>, vector<112x8xf32> -> vector<112x8xf32>
    %97 = vector.broadcast %87 : vector<1x8xf32> to vector<112x8xf32>
    %98 = arith.addf %96, %97 : vector<112x8xf32>
    %c0_44 = arith.constant 0 : index
    %c1_45 = arith.constant 1 : index
    %c0_46 = arith.constant 0 : index
    %c0_47 = arith.constant 0 : index
    %99 = vector.load %arg4[%c0_44, %c1_45, %c0_46, %c0_47] : memref<1x4x32x8xbf16, #tpu.memory_space<vmem>>, vector<1x1x32x8xbf16>
    %100 = vector.shape_cast %99 : vector<1x1x32x8xbf16> to vector<32x8xbf16>
    %cst_48 = arith.constant dense<0.000000e+00> : vector<112x8xf32>
    %101 = tpu.matmul %37, %100, %cst_48 {dimension_numbers = #tpu.dot_dimension_numbers<[1], [0], [0], [1], [0, 0, 1, 1], [], []>} : vector<112x32xbf16>, vector<32x8xbf16>, vector<112x8xf32> -> vector<112x8xf32>
    %102 = vector.broadcast %88 : vector<1x8xf32> to vector<112x8xf32>
    %103 = arith.addf %101, %102 : vector<112x8xf32>
    %104 = vector.shape_cast %93 : vector<112x8xf32> to vector<2x56x8xf32>
    %105 = arith.truncf %104 : vector<2x56x8xf32> to vector<2x56x8xbf16>
    %106 = vector.shape_cast %98 : vector<112x8xf32> to vector<2x56x8xf32>
    %107 = arith.truncf %106 : vector<2x56x8xf32> to vector<2x56x8xbf16>
    %108 = vector.shape_cast %103 : vector<112x8xf32> to vector<2x56x8xf32>
    %109 = arith.truncf %108 : vector<2x56x8xf32> to vector<2x56x8xbf16>
    "tpu.trace_start"() <{level = 10 : i32, message = "bqd,bkd->bqk"}> : () -> ()
    %cst_49 = arith.constant dense<0.000000e+00> : vector<2x56x56xf32>
    %110 = tpu.matmul %105, %107, %cst_49 {dimension_numbers = #tpu.dot_dimension_numbers<[2], [2], [1], [1], [0, 0, 0, 1, 1, 1], [0], [0]>} : vector<2x56x8xbf16>, vector<2x56x8xbf16>, vector<2x56x56xf32> -> vector<2x56x56xf32>
    "tpu.trace_stop"() : () -> ()
    %cst_50 = arith.constant 0.353553385 : f32
    %111 = vector.broadcast %cst_50 : f32 to vector<2x56x56xf32>
    %112 = arith.mulf %110, %111 : vector<2x56x56xf32>
    %113 = vector.broadcast %14 : vector<1x1x56xf32> to vector<2x56x56xf32>
    %114 = arith.addf %112, %113 : vector<2x56x56xf32>
    %cst_51 = arith.constant dense<0xFF800000> : vector<2x56xf32>
    %115 = vector.multi_reduction <maximumf>, %114, %cst_51 [2] : vector<2x56x56xf32> to vector<2x56xf32>
    %116 = vector.shape_cast %115 : vector<2x56xf32> to vector<2x56x1xf32>
    %117 = vector.broadcast %116 : vector<2x56x1xf32> to vector<2x56x56xf32>
    %118 = arith.subf %114, %117 : vector<2x56x56xf32>
    %119 = math.exp %118 : vector<2x56x56xf32>
    %cst_52 = arith.constant dense<0.000000e+00> : vector<2x56xf32>
    %120 = vector.multi_reduction <add>, %119, %cst_52 [2] : vector<2x56x56xf32> to vector<2x56xf32>
    %121 = vector.shape_cast %120 : vector<2x56xf32> to vector<2x56x1xf32>
    %122 = tpu.reciprocal %121 {approx = true} : vector<2x56x1xf32> -> vector<2x56x1xf32>
    %123 = vector.broadcast %122 : vector<2x56x1xf32> to vector<2x56x56xf32>
    %124 = arith.mulf %119, %123 : vector<2x56x56xf32>
    %125 = arith.truncf %124 : vector<2x56x56xf32> to vector<2x56x56xbf16>
    "tpu.trace_start"() <{level = 10 : i32, message = "bqk,bkd->bqd"}> : () -> ()
    %cst_53 = arith.constant dense<0.000000e+00> : vector<2x56x8xf32>
    %126 = tpu.matmul %125, %109, %cst_53 {dimension_numbers = #tpu.dot_dimension_numbers<[2], [1], [1], [2], [0, 0, 0, 1, 1, 2], [0], [0]>} : vector<2x56x56xbf16>, vector<2x56x8xbf16>, vector<2x56x8xf32> -> vector<2x56x8xf32>
    "tpu.trace_stop"() : () -> ()
    %127 = vector.shape_cast %126 : vector<2x56x8xf32> to vector<112x8xf32>
    %128 = arith.truncf %127 : vector<112x8xf32> to vector<112x8xbf16>
    %c0_54 = arith.constant 0 : index
    %c1_55 = arith.constant 1 : index
    %c0_56 = arith.constant 0 : index
    %c0_57 = arith.constant 0 : index
    %129 = vector.load %arg5[%c0_54, %c1_55, %c0_56, %c0_57] : memref<1x4x8x32xbf16, #tpu.memory_space<vmem>>, vector<1x1x8x32xbf16>
    %130 = vector.shape_cast %129 : vector<1x1x8x32xbf16> to vector<8x32xbf16>
    %cst_58 = arith.constant dense<0.000000e+00> : vector<112x32xf32>
    %131 = tpu.matmul %128, %130, %cst_58 {dimension_numbers = #tpu.dot_dimension_numbers<[1], [0], [0], [1], [0, 0, 1, 1], [], []>} : vector<112x8xbf16>, vector<8x32xbf16>, vector<112x32xf32> -> vector<112x32xf32>
    %132 = arith.addf %85, %131 : vector<112x32xf32>
    %133 = vector.extract_strided_slice %5 {offsets = [2, 16], sizes = [1, 8], strides = [1, 1]} : vector<16x56xf32> to vector<1x8xf32>
    %134 = vector.extract_strided_slice %5 {offsets = [3, 16], sizes = [1, 8], strides = [1, 1]} : vector<16x56xf32> to vector<1x8xf32>
    %135 = vector.extract_strided_slice %5 {offsets = [4, 16], sizes = [1, 8], strides = [1, 1]} : vector<16x56xf32> to vector<1x8xf32>
    %c0_59 = arith.constant 0 : index
    %c2 = arith.constant 2 : index
    %c0_60 = arith.constant 0 : index
    %c0_61 = arith.constant 0 : index
    %136 = vector.load %arg2[%c0_59, %c2, %c0_60, %c0_61] : memref<1x4x32x8xbf16, #tpu.memory_space<vmem>>, vector<1x1x32x8xbf16>
    %137 = vector.shape_cast %136 : vector<1x1x32x8xbf16> to vector<32x8xbf16>
    %cst_62 = arith.constant dense<0.000000e+00> : vector<112x8xf32>
    %138 = tpu.matmul %37, %137, %cst_62 {dimension_numbers = #tpu.dot_dimension_numbers<[1], [0], [0], [1], [0, 0, 1, 1], [], []>} : vector<112x32xbf16>, vector<32x8xbf16>, vector<112x8xf32> -> vector<112x8xf32>
    %139 = vector.broadcast %133 : vector<1x8xf32> to vector<112x8xf32>
    %140 = arith.addf %138, %139 : vector<112x8xf32>
    %c0_63 = arith.constant 0 : index
    %c2_64 = arith.constant 2 : index
    %c0_65 = arith.constant 0 : index
    %c0_66 = arith.constant 0 : index
    %141 = vector.load %arg3[%c0_63, %c2_64, %c0_65, %c0_66] : memref<1x4x32x8xbf16, #tpu.memory_space<vmem>>, vector<1x1x32x8xbf16>
    %142 = vector.shape_cast %141 : vector<1x1x32x8xbf16> to vector<32x8xbf16>
    %cst_67 = arith.constant dense<0.000000e+00> : vector<112x8xf32>
    %143 = tpu.matmul %37, %142, %cst_67 {dimension_numbers = #tpu.dot_dimension_numbers<[1], [0], [0], [1], [0, 0, 1, 1], [], []>} : vector<112x32xbf16>, vector<32x8xbf16>, vector<112x8xf32> -> vector<112x8xf32>
    %144 = vector.broadcast %134 : vector<1x8xf32> to vector<112x8xf32>
    %145 = arith.addf %143, %144 : vector<112x8xf32>
    %c0_68 = arith.constant 0 : index
    %c2_69 = arith.constant 2 : index
    %c0_70 = arith.constant 0 : index
    %c0_71 = arith.constant 0 : index
    %146 = vector.load %arg4[%c0_68, %c2_69, %c0_70, %c0_71] : memref<1x4x32x8xbf16, #tpu.memory_space<vmem>>, vector<1x1x32x8xbf16>
    %147 = vector.shape_cast %146 : vector<1x1x32x8xbf16> to vector<32x8xbf16>
    %cst_72 = arith.constant dense<0.000000e+00> : vector<112x8xf32>
    %148 = tpu.matmul %37, %147, %cst_72 {dimension_numbers = #tpu.dot_dimension_numbers<[1], [0], [0], [1], [0, 0, 1, 1], [], []>} : vector<112x32xbf16>, vector<32x8xbf16>, vector<112x8xf32> -> vector<112x8xf32>
    %149 = vector.broadcast %135 : vector<1x8xf32> to vector<112x8xf32>
    %150 = arith.addf %148, %149 : vector<112x8xf32>
    %151 = vector.shape_cast %140 : vector<112x8xf32> to vector<2x56x8xf32>
    %152 = arith.truncf %151 : vector<2x56x8xf32> to vector<2x56x8xbf16>
    %153 = vector.shape_cast %145 : vector<112x8xf32> to vector<2x56x8xf32>
    %154 = arith.truncf %153 : vector<2x56x8xf32> to vector<2x56x8xbf16>
    %155 = vector.shape_cast %150 : vector<112x8xf32> to vector<2x56x8xf32>
    %156 = arith.truncf %155 : vector<2x56x8xf32> to vector<2x56x8xbf16>
    "tpu.trace_start"() <{level = 10 : i32, message = "bqd,bkd->bqk"}> : () -> ()
    %cst_73 = arith.constant dense<0.000000e+00> : vector<2x56x56xf32>
    %157 = tpu.matmul %152, %154, %cst_73 {dimension_numbers = #tpu.dot_dimension_numbers<[2], [2], [1], [1], [0, 0, 0, 1, 1, 1], [0], [0]>} : vector<2x56x8xbf16>, vector<2x56x8xbf16>, vector<2x56x56xf32> -> vector<2x56x56xf32>
    "tpu.trace_stop"() : () -> ()
    %cst_74 = arith.constant 0.353553385 : f32
    %158 = vector.broadcast %cst_74 : f32 to vector<2x56x56xf32>
    %159 = arith.mulf %157, %158 : vector<2x56x56xf32>
    %160 = vector.broadcast %14 : vector<1x1x56xf32> to vector<2x56x56xf32>
    %161 = arith.addf %159, %160 : vector<2x56x56xf32>
    %cst_75 = arith.constant dense<0xFF800000> : vector<2x56xf32>
    %162 = vector.multi_reduction <maximumf>, %161, %cst_75 [2] : vector<2x56x56xf32> to vector<2x56xf32>
    %163 = vector.shape_cast %162 : vector<2x56xf32> to vector<2x56x1xf32>
    %164 = vector.broadcast %163 : vector<2x56x1xf32> to vector<2x56x56xf32>
    %165 = arith.subf %161, %164 : vector<2x56x56xf32>
    %166 = math.exp %165 : vector<2x56x56xf32>
    %cst_76 = arith.constant dense<0.000000e+00> : vector<2x56xf32>
    %167 = vector.multi_reduction <add>, %166, %cst_76 [2] : vector<2x56x56xf32> to vector<2x56xf32>
    %168 = vector.shape_cast %167 : vector<2x56xf32> to vector<2x56x1xf32>
    %169 = tpu.reciprocal %168 {approx = true} : vector<2x56x1xf32> -> vector<2x56x1xf32>
    %170 = vector.broadcast %169 : vector<2x56x1xf32> to vector<2x56x56xf32>
    %171 = arith.mulf %166, %170 : vector<2x56x56xf32>
    %172 = arith.truncf %171 : vector<2x56x56xf32> to vector<2x56x56xbf16>
    "tpu.trace_start"() <{level = 10 : i32, message = "bqk,bkd->bqd"}> : () -> ()
    %cst_77 = arith.constant dense<0.000000e+00> : vector<2x56x8xf32>
    %173 = tpu.matmul %172, %156, %cst_77 {dimension_numbers = #tpu.dot_dimension_numbers<[2], [1], [1], [2], [0, 0, 0, 1, 1, 2], [0], [0]>} : vector<2x56x56xbf16>, vector<2x56x8xbf16>, vector<2x56x8xf32> -> vector<2x56x8xf32>
    "tpu.trace_stop"() : () -> ()
    %174 = vector.shape_cast %173 : vector<2x56x8xf32> to vector<112x8xf32>
    %175 = arith.truncf %174 : vector<112x8xf32> to vector<112x8xbf16>
    %c0_78 = arith.constant 0 : index
    %c2_79 = arith.constant 2 : index
    %c0_80 = arith.constant 0 : index
    %c0_81 = arith.constant 0 : index
    %176 = vector.load %arg5[%c0_78, %c2_79, %c0_80, %c0_81] : memref<1x4x8x32xbf16, #tpu.memory_space<vmem>>, vector<1x1x8x32xbf16>
    %177 = vector.shape_cast %176 : vector<1x1x8x32xbf16> to vector<8x32xbf16>
    %cst_82 = arith.constant dense<0.000000e+00> : vector<112x32xf32>
    %178 = tpu.matmul %175, %177, %cst_82 {dimension_numbers = #tpu.dot_dimension_numbers<[1], [0], [0], [1], [0, 0, 1, 1], [], []>} : vector<112x8xbf16>, vector<8x32xbf16>, vector<112x32xf32> -> vector<112x32xf32>
    %179 = arith.addf %132, %178 : vector<112x32xf32>
    %180 = vector.extract_strided_slice %5 {offsets = [2, 24], sizes = [1, 8], strides = [1, 1]} : vector<16x56xf32> to vector<1x8xf32>
    %181 = vector.extract_strided_slice %5 {offsets = [3, 24], sizes = [1, 8], strides = [1, 1]} : vector<16x56xf32> to vector<1x8xf32>
    %182 = vector.extract_strided_slice %5 {offsets = [4, 24], sizes = [1, 8], strides = [1, 1]} : vector<16x56xf32> to vector<1x8xf32>
    %c0_83 = arith.constant 0 : index
    %c3 = arith.constant 3 : index
    %c0_84 = arith.constant 0 : index
    %c0_85 = arith.constant 0 : index
    %183 = vector.load %arg2[%c0_83, %c3, %c0_84, %c0_85] : memref<1x4x32x8xbf16, #tpu.memory_space<vmem>>, vector<1x1x32x8xbf16>
    %184 = vector.shape_cast %183 : vector<1x1x32x8xbf16> to vector<32x8xbf16>
    %cst_86 = arith.constant dense<0.000000e+00> : vector<112x8xf32>
    %185 = tpu.matmul %37, %184, %cst_86 {dimension_numbers = #tpu.dot_dimension_numbers<[1], [0], [0], [1], [0, 0, 1, 1], [], []>} : vector<112x32xbf16>, vector<32x8xbf16>, vector<112x8xf32> -> vector<112x8xf32>
    %186 = vector.broadcast %180 : vector<1x8xf32> to vector<112x8xf32>
    %187 = arith.addf %185, %186 : vector<112x8xf32>
    %c0_87 = arith.constant 0 : index
    %c3_88 = arith.constant 3 : index
    %c0_89 = arith.constant 0 : index
    %c0_90 = arith.constant 0 : index
    %188 = vector.load %arg3[%c0_87, %c3_88, %c0_89, %c0_90] : memref<1x4x32x8xbf16, #tpu.memory_space<vmem>>, vector<1x1x32x8xbf16>
    %189 = vector.shape_cast %188 : vector<1x1x32x8xbf16> to vector<32x8xbf16>
    %cst_91 = arith.constant dense<0.000000e+00> : vector<112x8xf32>
    %190 = tpu.matmul %37, %189, %cst_91 {dimension_numbers = #tpu.dot_dimension_numbers<[1], [0], [0], [1], [0, 0, 1, 1], [], []>} : vector<112x32xbf16>, vector<32x8xbf16>, vector<112x8xf32> -> vector<112x8xf32>
    %191 = vector.broadcast %181 : vector<1x8xf32> to vector<112x8xf32>
    %192 = arith.addf %190, %191 : vector<112x8xf32>
    %c0_92 = arith.constant 0 : index
    %c3_93 = arith.constant 3 : index
    %c0_94 = arith.constant 0 : index
    %c0_95 = arith.constant 0 : index
    %193 = vector.load %arg4[%c0_92, %c3_93, %c0_94, %c0_95] : memref<1x4x32x8xbf16, #tpu.memory_space<vmem>>, vector<1x1x32x8xbf16>
    %194 = vector.shape_cast %193 : vector<1x1x32x8xbf16> to vector<32x8xbf16>
    %cst_96 = arith.constant dense<0.000000e+00> : vector<112x8xf32>
    %195 = tpu.matmul %37, %194, %cst_96 {dimension_numbers = #tpu.dot_dimension_numbers<[1], [0], [0], [1], [0, 0, 1, 1], [], []>} : vector<112x32xbf16>, vector<32x8xbf16>, vector<112x8xf32> -> vector<112x8xf32>
    %196 = vector.broadcast %182 : vector<1x8xf32> to vector<112x8xf32>
    %197 = arith.addf %195, %196 : vector<112x8xf32>
    %198 = vector.shape_cast %187 : vector<112x8xf32> to vector<2x56x8xf32>
    %199 = arith.truncf %198 : vector<2x56x8xf32> to vector<2x56x8xbf16>
    %200 = vector.shape_cast %192 : vector<112x8xf32> to vector<2x56x8xf32>
    %201 = arith.truncf %200 : vector<2x56x8xf32> to vector<2x56x8xbf16>
    %202 = vector.shape_cast %197 : vector<112x8xf32> to vector<2x56x8xf32>
    %203 = arith.truncf %202 : vector<2x56x8xf32> to vector<2x56x8xbf16>
    "tpu.trace_start"() <{level = 10 : i32, message = "bqd,bkd->bqk"}> : () -> ()
    %cst_97 = arith.constant dense<0.000000e+00> : vector<2x56x56xf32>
    %204 = tpu.matmul %199, %201, %cst_97 {dimension_numbers = #tpu.dot_dimension_numbers<[2], [2], [1], [1], [0, 0, 0, 1, 1, 1], [0], [0]>} : vector<2x56x8xbf16>, vector<2x56x8xbf16>, vector<2x56x56xf32> -> vector<2x56x56xf32>
    "tpu.trace_stop"() : () -> ()
    %cst_98 = arith.constant 0.353553385 : f32
    %205 = vector.broadcast %cst_98 : f32 to vector<2x56x56xf32>
    %206 = arith.mulf %204, %205 : vector<2x56x56xf32>
    %207 = vector.broadcast %14 : vector<1x1x56xf32> to vector<2x56x56xf32>
    %208 = arith.addf %206, %207 : vector<2x56x56xf32>
    %cst_99 = arith.constant dense<0xFF800000> : vector<2x56xf32>
    %209 = vector.multi_reduction <maximumf>, %208, %cst_99 [2] : vector<2x56x56xf32> to vector<2x56xf32>
    %210 = vector.shape_cast %209 : vector<2x56xf32> to vector<2x56x1xf32>
    %211 = vector.broadcast %210 : vector<2x56x1xf32> to vector<2x56x56xf32>
    %212 = arith.subf %208, %211 : vector<2x56x56xf32>
    %213 = math.exp %212 : vector<2x56x56xf32>
    %cst_100 = arith.constant dense<0.000000e+00> : vector<2x56xf32>
    %214 = vector.multi_reduction <add>, %213, %cst_100 [2] : vector<2x56x56xf32> to vector<2x56xf32>
    %215 = vector.shape_cast %214 : vector<2x56xf32> to vector<2x56x1xf32>
    %216 = tpu.reciprocal %215 {approx = true} : vector<2x56x1xf32> -> vector<2x56x1xf32>
    %217 = vector.broadcast %216 : vector<2x56x1xf32> to vector<2x56x56xf32>
    %218 = arith.mulf %213, %217 : vector<2x56x56xf32>
    %219 = arith.truncf %218 : vector<2x56x56xf32> to vector<2x56x56xbf16>
    "tpu.trace_start"() <{level = 10 : i32, message = "bqk,bkd->bqd"}> : () -> ()
    %cst_101 = arith.constant dense<0.000000e+00> : vector<2x56x8xf32>
    %220 = tpu.matmul %219, %203, %cst_101 {dimension_numbers = #tpu.dot_dimension_numbers<[2], [1], [1], [2], [0, 0, 0, 1, 1, 2], [0], [0]>} : vector<2x56x56xbf16>, vector<2x56x8xbf16>, vector<2x56x8xf32> -> vector<2x56x8xf32>
    "tpu.trace_stop"() : () -> ()
    %221 = vector.shape_cast %220 : vector<2x56x8xf32> to vector<112x8xf32>
    %222 = arith.truncf %221 : vector<112x8xf32> to vector<112x8xbf16>
    %c0_102 = arith.constant 0 : index
    %c3_103 = arith.constant 3 : index
    %c0_104 = arith.constant 0 : index
    %c0_105 = arith.constant 0 : index
    %223 = vector.load %arg5[%c0_102, %c3_103, %c0_104, %c0_105] : memref<1x4x8x32xbf16, #tpu.memory_space<vmem>>, vector<1x1x8x32xbf16>
    %224 = vector.shape_cast %223 : vector<1x1x8x32xbf16> to vector<8x32xbf16>
    %cst_106 = arith.constant dense<0.000000e+00> : vector<112x32xf32>
    %225 = tpu.matmul %222, %224, %cst_106 {dimension_numbers = #tpu.dot_dimension_numbers<[1], [0], [0], [1], [0, 0, 1, 1], [], []>} : vector<112x8xbf16>, vector<8x32xbf16>, vector<112x32xf32> -> vector<112x32xf32>
    %226 = arith.addf %179, %225 : vector<112x32xf32>
    %227 = arith.addf %3, %226 : vector<112x32xf32>
    %228 = vector.broadcast %10 : vector<1x32xf32> to vector<112x32xf32>
    %229 = arith.addf %227, %228 : vector<112x32xf32>
    %cst_107 = arith.constant dense<0.000000e+00> : vector<112xf32>
    %230 = vector.multi_reduction <add>, %229, %cst_107 [1] : vector<112x32xf32> to vector<112xf32>
    %231 = vector.shape_cast %230 : vector<112xf32> to vector<112x1xf32>
    %cst_108 = arith.constant 3.200000e+01 : f32
    %232 = vector.broadcast %cst_108 : f32 to vector<112x1xf32>
    %233 = arith.divf %231, %232 : vector<112x1xf32>
    %234 = vector.broadcast %233 : vector<112x1xf32> to vector<112x32xf32>
    %235 = arith.subf %229, %234 : vector<112x32xf32>
    %236 = arith.mulf %235, %235 : vector<112x32xf32>
    %cst_109 = arith.constant dense<0.000000e+00> : vector<112xf32>
    %237 = vector.multi_reduction <add>, %236, %cst_109 [1] : vector<112x32xf32> to vector<112xf32>
    %238 = vector.shape_cast %237 : vector<112xf32> to vector<112x1xf32>
    %cst_110 = arith.constant 3.200000e+01 : f32
    %239 = vector.broadcast %cst_110 : f32 to vector<112x1xf32>
    %240 = arith.divf %238, %239 : vector<112x1xf32>
    %241 = vector.broadcast %233 : vector<112x1xf32> to vector<112x32xf32>
    %242 = arith.subf %229, %241 : vector<112x32xf32>
    %cst_111 = arith.constant 9.99999974E-6 : f32
    %243 = vector.broadcast %cst_111 : f32 to vector<112x1xf32>
    %244 = arith.addf %240, %243 : vector<112x1xf32>
    %245 = math.rsqrt %244 : vector<112x1xf32>
    %246 = vector.broadcast %245 : vector<112x1xf32> to vector<112x32xf32>
    %247 = arith.mulf %242, %246 : vector<112x32xf32>
    %248 = vector.broadcast %8 : vector<1x32xf32> to vector<112x32xf32>
    %249 = arith.mulf %247, %248 : vector<112x32xf32>
    %250 = vector.broadcast %9 : vector<1x32xf32> to vector<112x32xf32>
    %251 = arith.addf %249, %250 : vector<112x32xf32>
    %252 = arith.truncf %251 : vector<112x32xf32> to vector<112x32xbf16>
    %c0_112 = arith.constant 0 : index
    %c0_113 = arith.constant 0 : index
    %c0_114 = arith.constant 0 : index
    %253 = vector.load %arg6[%c0_112, %c0_113, %c0_114] : memref<1x32x32xbf16, #tpu.memory_space<vmem>>, vector<1x32x32xbf16>
    %254 = vector.shape_cast %253 : vector<1x32x32xbf16> to vector<32x32xbf16>
    %cst_115 = arith.constant dense<0.000000e+00> : vector<112x32xf32>
    %255 = tpu.matmul %252, %254, %cst_115 {dimension_numbers = #tpu.dot_dimension_numbers<[1], [0], [0], [1], [0, 0, 1, 1], [], []>} : vector<112x32xbf16>, vector<32x32xbf16>, vector<112x32xf32> -> vector<112x32xf32>
    %256 = vector.broadcast %11 : vector<1x32xf32> to vector<112x32xf32>
    %257 = arith.addf %255, %256 : vector<112x32xf32>
    %cst_116 = arith.constant 5.000000e-01 : f32
    %258 = vector.broadcast %cst_116 : f32 to vector<112x32xf32>
    %259 = arith.mulf %258, %257 : vector<112x32xf32>
    %cst_117 = arith.constant 4.471500e-02 : f32
    %260 = vector.broadcast %cst_117 : f32 to vector<112x32xf32>
    %261 = arith.mulf %260, %257 : vector<112x32xf32>
    %262 = arith.mulf %261, %257 : vector<112x32xf32>
    %263 = arith.mulf %262, %257 : vector<112x32xf32>
    %264 = arith.addf %257, %263 : vector<112x32xf32>
    %cst_118 = arith.constant 0.797884583 : f32
    %265 = vector.broadcast %cst_118 : f32 to vector<112x32xf32>
    %266 = arith.mulf %265, %264 : vector<112x32xf32>
    %267 = math.tanh %266 : vector<112x32xf32>
    %cst_119 = arith.constant 1.000000e+00 : f32
    %268 = vector.broadcast %cst_119 : f32 to vector<112x32xf32>
    %269 = arith.addf %268, %267 : vector<112x32xf32>
    %270 = arith.mulf %259, %269 : vector<112x32xf32>
    %271 = arith.truncf %270 : vector<112x32xf32> to vector<112x32xbf16>
    %c0_120 = arith.constant 0 : index
    %c0_121 = arith.constant 0 : index
    %c0_122 = arith.constant 0 : index
    %272 = vector.load %arg7[%c0_120, %c0_121, %c0_122] : memref<1x32x32xbf16, #tpu.memory_space<vmem>>, vector<1x32x32xbf16>
    %273 = vector.shape_cast %272 : vector<1x32x32xbf16> to vector<32x32xbf16>
    %cst_123 = arith.constant dense<0.000000e+00> : vector<112x32xf32>
    %274 = tpu.matmul %271, %273, %cst_123 {dimension_numbers = #tpu.dot_dimension_numbers<[1], [0], [0], [1], [0, 0, 1, 1], [], []>} : vector<112x32xbf16>, vector<32x32xbf16>, vector<112x32xf32> -> vector<112x32xf32>
    %275 = vector.broadcast %12 : vector<1x32xf32> to vector<112x32xf32>
    %276 = arith.addf %274, %275 : vector<112x32xf32>
    %277 = arith.addf %229, %276 : vector<112x32xf32>
    %c0_124 = arith.constant 0 : index
    %c0_125 = arith.constant 0 : index
    %278 = vector.load %arg10[%c0_124, %c0_125] : memref<112x32xf32, #tpu.memory_space<vmem>>, vector<112x32xf32>
    tpu.vector_store %arg10[%c0_124, %c0_125], %277 {strides = array<i32>} : memref<112x32xf32, #tpu.memory_space<vmem>>, vector<112x32xf32>,
    %279 = vector.shape_cast %277 : vector<112x32xf32> to vector<2x56x32xf32>
    %280 = vector.extract_strided_slice %279 {offsets = [0, 0, 0], sizes = [2, 1, 32], strides = [1, 1, 1]} : vector<2x56x32xf32> to vector<2x1x32xf32>
    %c0_126 = arith.constant 0 : index
    %c0_127 = arith.constant 0 : index
    %c0_128 = arith.constant 0 : index
    %281 = vector.load %arg9[%c0_126, %c0_127, %c0_128] : memref<2x1x32xf32, #tpu.memory_space<vmem>>, vector<2x1x32xf32>
    tpu.vector_store %arg9[%c0_126, %c0_127, %c0_128], %280 {strides = array<i32>} : memref<2x1x32xf32, #tpu.memory_space<vmem>>, vector<2x1x32xf32>,
    return
  }
  func.func @transform_0(%arg0: i32) -> (i32, i32) {
    %c0_i32 = arith.constant 0 : i32
    %c0_i32_0 = arith.constant 0 : i32
    %c0_i32_1 = arith.constant 0 : i32
    return %c0_i32, %c0_i32_0 : i32, i32
  }
  func.func @transform_1(%arg0: i32) -> (i32, i32, i32, i32) {
    %c0_i32 = arith.constant 0 : i32
    %c0_i32_0 = arith.constant 0 : i32
    %c0_i32_1 = arith.constant 0 : i32
    %c0_i32_2 = arith.constant 0 : i32
    return %arg0, %c0_i32, %c0_i32_0, %c0_i32_1 : i32, i32, i32, i32
  }
  func.func @transform_2(%arg0: i32) -> (i32, i32, i32, i32) {
    %c0_i32 = arith.constant 0 : i32
    %c0_i32_0 = arith.constant 0 : i32
    %c0_i32_1 = arith.constant 0 : i32
    %c0_i32_2 = arith.constant 0 : i32
    return %arg0, %c0_i32, %c0_i32_0, %c0_i32_1 : i32, i32, i32, i32
  }
  func.func @transform_3(%arg0: i32) -> (i32, i32, i32, i32) {
    %c0_i32 = arith.constant 0 : i32
    %c0_i32_0 = arith.constant 0 : i32
    %c0_i32_1 = arith.constant 0 : i32
    %c0_i32_2 = arith.constant 0 : i32
    return %arg0, %c0_i32, %c0_i32_0, %c0_i32_1 : i32, i32, i32, i32
  }
  func.func @transform_4(%arg0: i32) -> (i32, i32, i32, i32) {
    %c0_i32 = arith.constant 0 : i32
    %c0_i32_0 = arith.constant 0 : i32
    %c0_i32_1 = arith.constant 0 : i32
    %c0_i32_2 = arith.constant 0 : i32
    return %arg0, %c0_i32, %c0_i32_0, %c0_i32_1 : i32, i32, i32, i32
  }
  func.func @transform_5(%arg0: i32) -> (i32, i32, i32) {
    %c0_i32 = arith.constant 0 : i32
    %c0_i32_0 = arith.constant 0 : i32
    %c0_i32_1 = arith.constant 0 : i32
    return %arg0, %c0_i32, %c0_i32_0 : i32, i32, i32
  }
  func.func @transform_6(%arg0: i32) -> (i32, i32, i32) {
    %c0_i32 = arith.constant 0 : i32
    %c0_i32_0 = arith.constant 0 : i32
    %c0_i32_1 = arith.constant 0 : i32
    return %arg0, %c0_i32, %c0_i32_0 : i32, i32, i32
  }
  func.func @transform_7(%arg0: i32) -> (i32, i32, i32) {
    %c0_i32 = arith.constant 0 : i32
    %c0_i32_0 = arith.constant 0 : i32
    %c0_i32_1 = arith.constant 0 : i32
    return %arg0, %c0_i32, %c0_i32_0 : i32, i32, i32
  }
  func.func @transform_8(%arg0: i32) -> (i32, i32, i32) {
    %c0_i32 = arith.constant 0 : i32
    %c0_i32_0 = arith.constant 0 : i32
    %c0_i32_1 = arith.constant 0 : i32
    %c0_i32_2 = arith.constant 0 : i32
    return %c0_i32, %c0_i32_0, %c0_i32_1 : i32, i32, i32
  }
}

</mosaic_0001>

<llo_original>
// kernel: ast_with_head_forward.1
$region0: #{ast_with_head_forward.1}
  #allocation0 [shape = 'u32[]', space=smem, size = 0x4, offset = 0x4, fixed_abs, tag = 'smem constant byte address 0x4 - core index']
  #allocation1 [shape = 'u32[144,128]{1,0:T(1,128)}', space=vmem, size = 0x12000, scoped, tag = 'internal scratch']
  #allocation2 [shape = 'f32[112,32]{1,0:T(8,128)}', space=vmem, size = 0xe000, scoped, tag = 'scratch operand']
  %s0 = inlined_call_operand.vmem [shape: f32[112,32], index: 0, kind: input, shape index: {}]
  %s1 = inlined_call_operand.vmem [shape: bf16[2,4,32,8], index: 1, kind: input, shape index: {}]
  %s2 = inlined_call_operand.vmem [shape: bf16[2,4,32,8], index: 2, kind: input, shape index: {}]
  %s3 = inlined_call_operand.vmem [shape: bf16[2,4,32,8], index: 3, kind: input, shape index: {}]
  %s4 = inlined_call_operand.vmem [shape: bf16[2,4,8,32], index: 4, kind: input, shape index: {}]
  %s5 = inlined_call_operand.vmem [shape: bf16[2,32,32], index: 5, kind: input, shape index: {}]
  %s6 = inlined_call_operand.vmem [shape: bf16[2,32,32], index: 6, kind: input, shape index: {}]
  %s7 = inlined_call_operand.vmem [shape: f32[2,16,56], index: 7, kind: input, shape index: {}]
  %s8 = inlined_call_operand.vmem [shape: f32[2,1,32], index: 8, kind: output, shape index: {}]
  %s9 = sld [smem:[#allocation0]]
  $region69: #{ast_with_head_forward.1} parent=0
    _
  %s11 = ssub.s32 1, %s9
  %s12 = scalar_select 0, %s11, %s9
  loop: start=0, step=1, limit=4
  $region2: #{ast_with_head_forward.1} parent=0 // loop_pre_header
    _
  $region3: #{ast_with_head_forward.1} parent=0 // loop_header
    %s14 = sphi 0, %s18
    %p15 = scmp.ge.s32.totalorder %s14, 4
    %s22 = sphi 0, %s22
    %s24 = sphi 0, %s22
    %s25 = sphi 0, %s24
    %s39 = sphi 0, %s25
    %s45 = sphi 0, %s47
    %s48 = sphi 0, %s45
    %s49 = sphi 0, %s48
    %s65 = sphi 0, %s49
    %s71 = sphi 0, %s73
    %s74 = sphi 0, %s71
    %s75 = sphi 0, %s74
    %s91 = sphi 0, %s75
    %s97 = sphi 0, %s99
    %s100 = sphi 0, %s97
    %s101 = sphi 0, %s100
    %s117 = sphi 0, %s101
    %s123 = sphi 0, %s125
    %s126 = sphi 0, %s123
    %s127 = sphi 0, %s126
    %s143 = sphi 0, %s127
    %s149 = sphi 0, %s151
    %s152 = sphi 0, %s149
    %s153 = sphi 0, %s152
    %s169 = sphi 0, %s153
    %s175 = sphi 0, %s177
    %s178 = sphi 0, %s175
    %s179 = sphi 0, %s178
    %s195 = sphi 0, %s179
    %s201 = sphi 0, %s203
    %s204 = sphi 0, %s201
    %s205 = sphi 0, %s204
    %s221 = sphi 0, %s205
    %s225 = sphi 0, %s225
    %s227 = sphi 0, %s225
    %s228 = sphi 0, %s227
    %s242 = sphi 0, %s228
  $region4: #{ast_with_head_forward.1} parent=0 // loop_header_branch
    %17 = sbr.rel (%p15) target = $region8
  $region5: #{ast_with_head_forward.1} parent=0 // loop_body
    %s19 = ssub.s32 %s14, 1
    %s20 = ssub.s32 %s14, 2
    %s21 = sadd.s32 %s14, 1
    %s23 = sadd.s32 %s22, 1
    %p26 = scmp.eq.s32.totalorder %s14, 1
    %p27 = scmp.ne.s32.totalorder %s22, %s24
    %p28 = scmp.eq.s32.totalorder %s14, 0
    %p29 = por %p27, %p28
    %p30 = scmp.ne.s32.totalorder %s22, %s24
    %p31 = scmp.eq.s32.totalorder %s19, 1
    %p32 = por %p30, %p31
    %p33 = scmp.ne.s32.totalorder %s24, %s25
    %p34 = scmp.eq.s32.totalorder %s19, 0
    %p35 = por %p33, %p34
    %p36 = scmp.ne.s32.totalorder %s24, %s25
    %p37 = scmp.eq.s32.totalorder %s20, 1
    %p38 = por %p36, %p37
    %p40 = scmp.ne.s32.totalorder %s25, %s39
    %p41 = scmp.eq.s32.totalorder %s20, 0
    %p42 = por %p40, %p41
    %s43 = ssub.s32 %s14, %s21
    %p44 = scmp.eq.s32.totalorder %s43, 0
    %s46 = sadd.s32 %s45, 1
    %s47 = scalar_select %p44, %s45, %s46
    %p50 = pneg %p44
    %p51 = scmp.eq.s32.totalorder %s14, 1
    %p52 = por %p50, %p51
    %p53 = scmp.ne.s32.totalorder %s45, %s48
    %p54 = scmp.eq.s32.totalorder %s14, 0
    %p55 = por %p53, %p54
    %p56 = scmp.ne.s32.totalorder %s45, %s48
    %p57 = scmp.eq.s32.totalorder %s19, 1
    %p58 = por %p56, %p57
    %p59 = scmp.ne.s32.totalorder %s48, %s49
    %p60 = scmp.eq.s32.totalorder %s19, 0
    %p61 = por %p59, %p60
    %p62 = scmp.ne.s32.totalorder %s48, %s49
    %p63 = scmp.eq.s32.totalorder %s20, 1
    %p64 = por %p62, %p63
    %p66 = scmp.ne.s32.totalorder %s49, %s65
    %p67 = scmp.eq.s32.totalorder %s20, 0
    %p68 = por %p66, %p67
    %s69 = ssub.s32 %s14, %s21
    %p70 = scmp.eq.s32.totalorder %s69, 0
    %s72 = sadd.s32 %s71, 1
    %s73 = scalar_select %p70, %s71, %s72
    %p76 = pneg %p70
    %p77 = scmp.eq.s32.totalorder %s14, 1
    %p78 = por %p76, %p77
    %p79 = scmp.ne.s32.totalorder %s71, %s74
    %p80 = scmp.eq.s32.totalorder %s14, 0
    %p81 = por %p79, %p80
    %p82 = scmp.ne.s32.totalorder %s71, %s74
    %p83 = scmp.eq.s32.totalorder %s19, 1
    %p84 = por %p82, %p83
    %p85 = scmp.ne.s32.totalorder %s74, %s75
    %p86 = scmp.eq.s32.totalorder %s19, 0
    %p87 = por %p85, %p86
    %p88 = scmp.ne.s32.totalorder %s74, %s75
    %p89 = scmp.eq.s32.totalorder %s20, 1
    %p90 = por %p88, %p89
    %p92 = scmp.ne.s32.totalorder %s75, %s91
    %p93 = scmp.eq.s32.totalorder %s20, 0
    %p94 = por %p92, %p93
    %s95 = ssub.s32 %s14, %s21
    %p96 = scmp.eq.s32.totalorder %s95, 0
    %s98 = sadd.s32 %s97, 1
    %s99 = scalar_select %p96, %s97, %s98
    %p102 = pneg %p96
    %p103 = scmp.eq.s32.totalorder %s14, 1
    %p104 = por %p102, %p103
    %p105 = scmp.ne.s32.totalorder %s97, %s100
    %p106 = scmp.eq.s32.totalorder %s14, 0
    %p107 = por %p105, %p106
    %p108 = scmp.ne.s32.totalorder %s97, %s100
    %p109 = scmp.eq.s32.totalorder %s19, 1
    %p110 = por %p108, %p109
    %p111 = scmp.ne.s32.totalorder %s100, %s101
    %p112 = scmp.eq.s32.totalorder %s19, 0
    %p113 = por %p111, %p112
    %p114 = scmp.ne.s32.totalorder %s100, %s101
    %p115 = scmp.eq.s32.totalorder %s20, 1
    %p116 = por %p114, %p115
    %p118 = scmp.ne.s32.totalorder %s101, %s117
    %p119 = scmp.eq.s32.totalorder %s20, 0
    %p120 = por %p118, %p119
    %s121 = ssub.s32 %s14, %s21
    %p122 = scmp.eq.s32.totalorder %s121, 0
    %s124 = sadd.s32 %s123, 1
    %s125 = scalar_select %p122, %s123, %s124
    %p128 = pneg %p122
    %p129 = scmp.eq.s32.totalorder %s14, 1
    %p130 = por %p128, %p129
    %p131 = scmp.ne.s32.totalorder %s123, %s126
    %p132 = scmp.eq.s32.totalorder %s14, 0
    %p133 = por %p131, %p132
    %p134 = scmp.ne.s32.totalorder %s123, %s126
    %p135 = scmp.eq.s32.totalorder %s19, 1
    %p136 = por %p134, %p135
    %p137 = scmp.ne.s32.totalorder %s126, %s127
    %p138 = scmp.eq.s32.totalorder %s19, 0
    %p139 = por %p137, %p138
    %p140 = scmp.ne.s32.totalorder %s126, %s127
    %p141 = scmp.eq.s32.totalorder %s20, 1
    %p142 = por %p140, %p141
    %p144 = scmp.ne.s32.totalorder %s127, %s143
    %p145 = scmp.eq.s32.totalorder %s20, 0
    %p146 = por %p144, %p145
    %s147 = ssub.s32 %s14, %s21
    %p148 = scmp.eq.s32.totalorder %s147, 0
    %s150 = sadd.s32 %s149, 1
    %s151 = scalar_select %p148, %s149, %s150
    %p154 = pneg %p148
    %p155 = scmp.eq.s32.totalorder %s14, 1
    %p156 = por %p154, %p155
    %p157 = scmp.ne.s32.totalorder %s149, %s152
    %p158 = scmp.eq.s32.totalorder %s14, 0
    %p159 = por %p157, %p158
    %p160 = scmp.ne.s32.totalorder %s149, %s152
    %p161 = scmp.eq.s32.totalorder %s19, 1
    %p162 = por %p160, %p161
    %p163 = scmp.ne.s32.totalorder %s152, %s153
    %p164 = scmp.eq.s32.totalorder %s19, 0
    %p165 = por %p163, %p164
    %p166 = scmp.ne.s32.totalorder %s152, %s153
    %p167 = scmp.eq.s32.totalorder %s20, 1
    %p168 = por %p166, %p167
    %p170 = scmp.ne.s32.totalorder %s153, %s169
    %p171 = scmp.eq.s32.totalorder %s20, 0
    %p172 = por %p170, %p171
    %s173 = ssub.s32 %s14, %s21
    %p174 = scmp.eq.s32.totalorder %s173, 0
    %s176 = sadd.s32 %s175, 1
    %s177 = scalar_select %p174, %s175, %s176
    %p180 = pneg %p174
    %p181 = scmp.eq.s32.totalorder %s14, 1
    %p182 = por %p180, %p181
    %p183 = scmp.ne.s32.totalorder %s175, %s178
    %p184 = scmp.eq.s32.totalorder %s14, 0
    %p185 = por %p183, %p184
    %p186 = scmp.ne.s32.totalorder %s175, %s178
    %p187 = scmp.eq.s32.totalorder %s19, 1
    %p188 = por %p186, %p187
    %p189 = scmp.ne.s32.totalorder %s178, %s179
    %p190 = scmp.eq.s32.totalorder %s19, 0
    %p191 = por %p189, %p190
    %p192 = scmp.ne.s32.totalorder %s178, %s179
    %p193 = scmp.eq.s32.totalorder %s20, 1
    %p194 = por %p192, %p193
    %p196 = scmp.ne.s32.totalorder %s179, %s195
    %p197 = scmp.eq.s32.totalorder %s20, 0
    %p198 = por %p196, %p197
    %s199 = ssub.s32 %s14, %s21
    %p200 = scmp.eq.s32.totalorder %s199, 0
    %s202 = sadd.s32 %s201, 1
    %s203 = scalar_select %p200, %s201, %s202
    %p206 = pneg %p200
    %p207 = scmp.eq.s32.totalorder %s14, 1
    %p208 = por %p206, %p207
    %p209 = scmp.ne.s32.totalorder %s201, %s204
    %p210 = scmp.eq.s32.totalorder %s14, 0
    %p211 = por %p209, %p210
    %p212 = scmp.ne.s32.totalorder %s201, %s204
    %p213 = scmp.eq.s32.totalorder %s19, 1
    %p214 = por %p212, %p213
    %p215 = scmp.ne.s32.totalorder %s204, %s205
    %p216 = scmp.eq.s32.totalorder %s19, 0
    %p217 = por %p215, %p216
    %p218 = scmp.ne.s32.totalorder %s204, %s205
    %p219 = scmp.eq.s32.totalorder %s20, 1
    %p220 = por %p218, %p219
    %p222 = scmp.ne.s32.totalorder %s205, %s221
    %p223 = scmp.eq.s32.totalorder %s20, 0
    %p224 = por %p222, %p223
    %s226 = sadd.s32 %s225, 1
    %p229 = scmp.eq.s32.totalorder %s14, 1
    %p230 = scmp.ne.s32.totalorder %s225, %s227
    %p231 = scmp.eq.s32.totalorder %s14, 0
    %p232 = por %p230, %p231
    %p233 = scmp.ne.s32.totalorder %s225, %s227
    %p234 = scmp.eq.s32.totalorder %s19, 1
    %p235 = por %p233, %p234
    %p236 = scmp.ne.s32.totalorder %s227, %s228
    %p237 = scmp.eq.s32.totalorder %s19, 0
    %p238 = por %p236, %p237
    %p239 = scmp.ne.s32.totalorder %s227, %s228
    %p240 = scmp.eq.s32.totalorder %s20, 1
    %p241 = por %p239, %p240
    %p243 = scmp.ne.s32.totalorder %s228, %s242
    %p244 = scmp.eq.s32.totalorder %s20, 0
    %p245 = por %p243, %p244
    %p246 = scmp.le.s32.totalorder 1, %s14
    %p247 = scmp.lt.s32.totalorder %s14, 3
    %p248 = pnand %p246, %p247
    %p249 = pneg %p248
    // Predicated region
    $region9: #{ast_with_head_forward.1} parent=5 // pred_check
      _
    $region10: #{ast_with_head_forward.1} parent=5 // pred_check_branch
      %251 = sbr.rel (%p248) target = $region12
    $region11: #{ast_with_head_forward.1} parent=5 // pred_region
      %s252 = ssub.s32 %s14, 1
      // Predicated region
      $region13: #{ast_with_head_forward.1} parent=11 // pred_check
        %p253 = pneg %p35
      $region14: #{ast_with_head_forward.1} parent=11 // pred_check_branch
        %255 = sbr.rel (%p253) target = $region16
      $region15: #{ast_with_head_forward.1} parent=11 // pred_region
        _
      $region16: #{ast_with_head_forward.1} parent=11 // pred_fallthru
        _
    $region12: #{ast_with_head_forward.1} parent=5 // pred_fallthru
      _
    %p256 = scmp.lt.s32.totalorder %s14, 2
    // Predicated region
    $region17: #{ast_with_head_forward.1} parent=5 // pred_check
      %p257 = pneg %p256
    $region18: #{ast_with_head_forward.1} parent=5 // pred_check_branch
      %259 = sbr.rel (%p257) target = $region20
    $region19: #{ast_with_head_forward.1} parent=5 // pred_region
      // Predicated region
      $region21: #{ast_with_head_forward.1} parent=19 // pred_check
        %p260 = pneg %p55
      $region22: #{ast_with_head_forward.1} parent=19 // pred_check_branch
        %262 = sbr.rel (%p260) target = $region24
      $region23: #{ast_with_head_forward.1} parent=19 // pred_region
        %p263 = scmp.lt.s32.totalorder %s14, 1
        %s264 = scalar_select %p263, %s14, 1
        %s265 = smul.addr %s264, 16
        %s266 = smul.addr %s265, 4
        %s267 = scalar_lea.vmem %s1, %s266
      $region24: #{ast_with_head_forward.1} parent=19 // pred_fallthru
        _
      // Predicated region
      $region25: #{ast_with_head_forward.1} parent=19 // pred_check
        %p268 = pneg %p81
      $region26: #{ast_with_head_forward.1} parent=19 // pred_check_branch
        %270 = sbr.rel (%p268) target = $region28
      $region27: #{ast_with_head_forward.1} parent=19 // pred_region
        %p271 = scmp.lt.s32.totalorder %s14, 1
        %s272 = scalar_select %p271, %s14, 1
        %s273 = smul.addr %s272, 16
        %s274 = smul.addr %s273, 4
        %s275 = scalar_lea.vmem %s2, %s274
      $region28: #{ast_with_head_forward.1} parent=19 // pred_fallthru
        _
      // Predicated region
      $region29: #{ast_with_head_forward.1} parent=19 // pred_check
        %p276 = pneg %p107
      $region30: #{ast_with_head_forward.1} parent=19 // pred_check_branch
        %278 = sbr.rel (%p276) target = $region32
      $region31: #{ast_with_head_forward.1} parent=19 // pred_region
        %p279 = scmp.lt.s32.totalorder %s14, 1
        %s280 = scalar_select %p279, %s14, 1
        %s281 = smul.addr %s280, 16
        %s282 = smul.addr %s281, 4
        %s283 = scalar_lea.vmem %s3, %s282
      $region32: #{ast_with_head_forward.1} parent=19 // pred_fallthru
        _
      // Predicated region
      $region33: #{ast_with_head_forward.1} parent=19 // pred_check
        %p284 = pneg %p133
      $region34: #{ast_with_head_forward.1} parent=19 // pred_check_branch
        %286 = sbr.rel (%p284) target = $region36
      $region35: #{ast_with_head_forward.1} parent=19 // pred_region
        %p287 = scmp.lt.s32.totalorder %s14, 1
        %s288 = scalar_select %p287, %s14, 1
        %s289 = smul.addr %s288, 4
        %s290 = smul.addr %s289, 4
        %s291 = scalar_lea.vmem %s4, %s290
      $region36: #{ast_with_head_forward.1} parent=19 // pred_fallthru
        _
      // Predicated region
      $region37: #{ast_with_head_forward.1} parent=19 // pred_check
        %p292 = pneg %p159
      $region38: #{ast_with_head_forward.1} parent=19 // pred_check_branch
        %294 = sbr.rel (%p292) target = $region40
      $region39: #{ast_with_head_forward.1} parent=19 // pred_region
        %p295 = scmp.lt.s32.totalorder %s14, 1
        %s296 = scalar_select %p295, %s14, 1
        %s297 = smul.addr %s296, 4
        %s298 = smul.addr %s297, 4
        %s299 = scalar_lea.vmem %s5, %s298
      $region40: #{ast_with_head_forward.1} parent=19 // pred_fallthru
        _
      // Predicated region
      $region41: #{ast_with_head_forward.1} parent=19 // pred_check
        %p300 = pneg %p185
      $region42: #{ast_with_head_forward.1} parent=19 // pred_check_branch
        %302 = sbr.rel (%p300) target = $region44
      $region43: #{ast_with_head_forward.1} parent=19 // pred_region
        %p303 = scmp.lt.s32.totalorder %s14, 1
        %s304 = scalar_select %p303, %s14, 1
        %s305 = smul.addr %s304, 4
        %s306 = smul.addr %s305, 4
        %s307 = scalar_lea.vmem %s6, %s306
      $region44: #{ast_with_head_forward.1} parent=19 // pred_fallthru
        _
      // Predicated region
      $region45: #{ast_with_head_forward.1} parent=19 // pred_check
        %p308 = pneg %p211
      $region46: #{ast_with_head_forward.1} parent=19 // pred_check_branch
        %310 = sbr.rel (%p308) target = $region48
      $region47: #{ast_with_head_forward.1} parent=19 // pred_region
        %p311 = scmp.lt.s32.totalorder %s14, 1
        %s312 = scalar_select %p311, %s14, 1
        %s313 = smul.addr %s312, 2
        %s314 = smul.addr %s313, 8
        %s315 = scalar_lea.vmem %s7, %s314
      $region48: #{ast_with_head_forward.1} parent=19 // pred_fallthru
        _
    $region20: #{ast_with_head_forward.1} parent=5 // pred_fallthru
      _
    %p316 = scmp.le.s32.totalorder 1, %s14
    %p317 = scmp.lt.s32.totalorder %s14, 3
    %p318 = pnand %p316, %p317
    %p319 = pneg %p318
    // Predicated region
    $region49: #{ast_with_head_forward.1} parent=5 // pred_check
      _
    $region50: #{ast_with_head_forward.1} parent=5 // pred_check_branch
      %321 = sbr.rel (%p318) target = $region52
    $region51: #{ast_with_head_forward.1} parent=5 // pred_region
      %s322 = ssub.s32 %s14, 1
      %p323 = pneg %p35
      %p324 = pneg %p32
      %p325 = scmp.lt.s32.totalorder %s19, 1
      %s326 = scalar_select %p325, %s19, 1
      %s327 = smul.addr %s326, 16
      %s328 = smul.addr %s327, 4
      %s329 = scalar_lea.vmem %s1, %s328
      %p330 = pneg %p61
      %p331 = pneg %p58
      %p332 = scmp.lt.s32.totalorder %s19, 1
      %s333 = scalar_select %p332, %s19, 1
      %s334 = smul.addr %s333, 16
      %s335 = smul.addr %s334, 4
      %s336 = scalar_lea.vmem %s2, %s335
      %p337 = pneg %p87
      %p338 = pneg %p84
      %p339 = scmp.lt.s32.totalorder %s19, 1
      %s340 = scalar_select %p339, %s19, 1
      %s341 = smul.addr %s340, 16
      %s342 = smul.addr %s341, 4
      %s343 = scalar_lea.vmem %s3, %s342
      %p344 = pneg %p113
      %p345 = pneg %p110
      %p346 = scmp.lt.s32.totalorder %s19, 1
      %s347 = scalar_select %p346, %s19, 1
      %s348 = smul.addr %s347, 4
      %s349 = smul.addr %s348, 4
      %s350 = scalar_lea.vmem %s4, %s349
      %p351 = pneg %p139
      %p352 = pneg %p136
      %p353 = scmp.lt.s32.totalorder %s19, 1
      %s354 = scalar_select %p353, %s19, 1
      %s355 = smul.addr %s354, 4
      %s356 = smul.addr %s355, 4
      %s357 = scalar_lea.vmem %s5, %s356
      %p358 = pneg %p165
      %p359 = pneg %p162
      %p360 = scmp.lt.s32.totalorder %s19, 1
      %s361 = scalar_select %p360, %s19, 1
      %s362 = smul.addr %s361, 4
      %s363 = smul.addr %s362, 4
      %s364 = scalar_lea.vmem %s6, %s363
      %p365 = pneg %p191
      %p366 = pneg %p188
      %p367 = scmp.lt.s32.totalorder %s19, 1
      %s368 = scalar_select %p367, %s19, 1
      %s369 = smul.addr %s368, 2
      %s370 = smul.addr %s369, 8
      %s371 = scalar_lea.vmem %s7, %s370
      %p372 = pneg %p217
      %p373 = pneg %p214
      %p374 = pneg %p238
      %p375 = pneg %p235
      %p376 = scmp.lt.s32.totalorder %s19, 1
      %s377 = scalar_select %p376, %s19, 1
      %s378 = smul.addr %s377, 16
      %s379 = smul.addr %s378, 4
      %s380 = scalar_lea.vmem %s1, %s379
      %p381 = scmp.lt.s32.totalorder %s19, 1
      %s382 = scalar_select %p381, %s19, 1
      %s383 = smul.addr %s382, 16
      %s384 = smul.addr %s383, 4
      %s385 = scalar_lea.vmem %s2, %s384
      %p386 = scmp.lt.s32.totalorder %s19, 1
      %s387 = scalar_select %p386, %s19, 1
      %s388 = smul.addr %s387, 16
      %s389 = smul.addr %s388, 4
      %s390 = scalar_lea.vmem %s3, %s389
      %p391 = scmp.lt.s32.totalorder %s19, 1
      %s392 = scalar_select %p391, %s19, 1
      %s393 = smul.addr %s392, 4
      %s394 = smul.addr %s393, 4
      %s395 = scalar_lea.vmem %s4, %s394
      %p396 = scmp.lt.s32.totalorder %s19, 1
      %s397 = scalar_select %p396, %s19, 1
      %s398 = smul.addr %s397, 4
      %s399 = smul.addr %s398, 4
      %s400 = scalar_lea.vmem %s5, %s399
      %p401 = scmp.lt.s32.totalorder %s19, 1
      %s402 = scalar_select %p401, %s19, 1
      %s403 = smul.addr %s402, 4
      %s404 = smul.addr %s403, 4
      %s405 = scalar_lea.vmem %s6, %s404
      %p406 = scmp.lt.s32.totalorder %s19, 1
      %s407 = scalar_select %p406, %s19, 1
      %s408 = smul.addr %s407, 2
      %s409 = smul.addr %s408, 8
      %s410 = scalar_lea.vmem %s7, %s409
      %p412 = scmp.eq.s32.totalorder %s19, 0
      // Predicated region
      $region53: #{ast_with_head_forward.1} parent=51 // pred_check
        %p413 = pneg %p412
      $region54: #{ast_with_head_forward.1} parent=51 // pred_check_branch
        %415 = sbr.rel (%p413) target = $region56
      $region55: #{ast_with_head_forward.1} parent=51 // pred_region
        %v416 = vld [vmem:[%s0] sm:$0xff]
        %v417 = vld [vmem:[%s0 + $0x8] sm:$0xff]
        %v418 = vld [vmem:[%s0 + $0x10] sm:$0xff]
        %v419 = vld [vmem:[%s0 + $0x18] sm:$0xff]
        %v420 = vld [vmem:[%s0 + $0x20] sm:$0xff]
        %v421 = vld [vmem:[%s0 + $0x28] sm:$0xff]
        %v422 = vld [vmem:[%s0 + $0x30] sm:$0xff]
        %v423 = vld [vmem:[%s0 + $0x38] sm:$0xff]
        %v424 = vld [vmem:[%s0 + $0x40] sm:$0xff]
        %v425 = vld [vmem:[%s0 + $0x48] sm:$0xff]
        %v426 = vld [vmem:[%s0 + $0x50] sm:$0xff]
        %v427 = vld [vmem:[%s0 + $0x58] sm:$0xff]
        %v428 = vld [vmem:[%s0 + $0x60] sm:$0xff]
        %v429 = vld [vmem:[%s0 + $0x68] sm:$0xff]
        %vm430 = vcmask 261120
        %431 = vst.msk [vmem:[#allocation2] sm:$0xff] %vm430, %v416
        %432 = vst.msk [vmem:[#allocation2 + $0x8] sm:$0xff] %vm430, %v417
        %433 = vst.msk [vmem:[#allocation2 + $0x10] sm:$0xff] %vm430, %v418
        %434 = vst.msk [vmem:[#allocation2 + $0x18] sm:$0xff] %vm430, %v419
        %435 = vst.msk [vmem:[#allocation2 + $0x20] sm:$0xff] %vm430, %v420
        %436 = vst.msk [vmem:[#allocation2 + $0x28] sm:$0xff] %vm430, %v421
        %437 = vst.msk [vmem:[#allocation2 + $0x30] sm:$0xff] %vm430, %v422
        %438 = vst.msk [vmem:[#allocation2 + $0x38] sm:$0xff] %vm430, %v423
        %439 = vst.msk [vmem:[#allocation2 + $0x40] sm:$0xff] %vm430, %v424
        %440 = vst.msk [vmem:[#allocation2 + $0x48] sm:$0xff] %vm430, %v425
        %441 = vst.msk [vmem:[#allocation2 + $0x50] sm:$0xff] %vm430, %v426
        %442 = vst.msk [vmem:[#allocation2 + $0x58] sm:$0xff] %vm430, %v427
        %443 = vst.msk [vmem:[#allocation2 + $0x60] sm:$0xff] %vm430, %v428
        %444 = vst.msk [vmem:[#allocation2 + $0x68] sm:$0xff] %vm430, %v429
      $region56: #{ast_with_head_forward.1} parent=51 // pred_fallthru
        _
      %v445 = vld [vmem:[#allocation2] sm:$0xff]
      %v446 = vld [vmem:[#allocation2 + $0x8] sm:$0xff]
      %v447 = vld [vmem:[#allocation2 + $0x10] sm:$0xff]
      %v448 = vld [vmem:[#allocation2 + $0x18] sm:$0xff]
      %v449 = vld [vmem:[#allocation2 + $0x20] sm:$0xff]
      %v450 = vld [vmem:[#allocation2 + $0x28] sm:$0xff]
      %v451 = vld [vmem:[#allocation2 + $0x30] sm:$0xff]
      %v452 = vld [vmem:[#allocation2 + $0x38] sm:$0xff]
      %v453 = vld [vmem:[#allocation2 + $0x40] sm:$0xff]
      %v454 = vld [vmem:[#allocation2 + $0x48] sm:$0xff]
      %v455 = vld [vmem:[#allocation2 + $0x50] sm:$0xff]
      %v456 = vld [vmem:[#allocation2 + $0x58] sm:$0xff]
      %v457 = vld [vmem:[#allocation2 + $0x60] sm:$0xff]
      %v458 = vld [vmem:[#allocation2 + $0x68] sm:$0xff]
      %v459 = vld [vmem:[%s410] sm:$0xff]
      %v460 = vld [vmem:[%s410 + $0x8] sm:$0xff]
      %vm461 = vcmask 261120
      %v462 = vsel %vm461, %v445, 0.0
      %463 = vadd.xlane.f32.xlu0 %v462
      %v464 = vpop.xlane.xlu0 %463
      %v465 = vsel %vm461, %v446, 0.0
      %466 = vadd.xlane.f32.xlu0 %v465
      %v467 = vpop.xlane.xlu0 %466
      %v468 = vsel %vm461, %v447, 0.0
      %469 = vadd.xlane.f32.xlu0 %v468
      %v470 = vpop.xlane.xlu0 %469
      %v471 = vsel %vm461, %v448, 0.0
      %472 = vadd.xlane.f32.xlu0 %v471
      %v473 = vpop.xlane.xlu0 %472
      %v474 = vsel %vm461, %v449, 0.0
      %475 = vadd.xlane.f32.xlu0 %v474
      %v476 = vpop.xlane.xlu0 %475
      %v477 = vsel %vm461, %v450, 0.0
      %478 = vadd.xlane.f32.xlu0 %v477
      %v479 = vpop.xlane.xlu0 %478
      %v480 = vsel %vm461, %v451, 0.0
      %481 = vadd.xlane.f32.xlu0 %v480
      %v482 = vpop.xlane.xlu0 %481
      %v483 = vsel %vm461, %v452, 0.0
      %484 = vadd.xlane.f32.xlu0 %v483
      %v485 = vpop.xlane.xlu0 %484
      %v486 = vsel %vm461, %v453, 0.0
      %487 = vadd.xlane.f32.xlu0 %v486
      %v488 = vpop.xlane.xlu0 %487
      %v489 = vsel %vm461, %v454, 0.0
      %490 = vadd.xlane.f32.xlu0 %v489
      %v491 = vpop.xlane.xlu0 %490
      %v492 = vsel %vm461, %v455, 0.0
      %493 = vadd.xlane.f32.xlu0 %v492
      %v494 = vpop.xlane.xlu0 %493
      %v495 = vsel %vm461, %v456, 0.0
      %496 = vadd.xlane.f32.xlu0 %v495
      %v497 = vpop.xlane.xlu0 %496
      %v498 = vsel %vm461, %v457, 0.0
      %499 = vadd.xlane.f32.xlu0 %v498
      %v500 = vpop.xlane.xlu0 %499
      %v501 = vsel %vm461, %v458, 0.0
      %502 = vadd.xlane.f32.xlu0 %v501
      %v503 = vpop.xlane.xlu0 %502
      %v504 = vrcp.pop 32.0
      %v505 = vmul.f32 %v464, %v504
      %v506 = vmul.f32 %v467, %v504
      %v507 = vmul.f32 %v470, %v504
      %v508 = vmul.f32 %v473, %v504
      %v509 = vmul.f32 %v476, %v504
      %v510 = vmul.f32 %v479, %v504
      %v511 = vmul.f32 %v482, %v504
      %v512 = vmul.f32 %v485, %v504
      %v513 = vmul.f32 %v488, %v504
      %v514 = vmul.f32 %v491, %v504
      %v515 = vmul.f32 %v494, %v504
      %v516 = vmul.f32 %v497, %v504
      %v517 = vmul.f32 %v500, %v504
      %v518 = vmul.f32 %v503, %v504
      %v519 = vsub.f32 %v445, %v505
      %v520 = vsub.f32 %v446, %v506
      %v521 = vsub.f32 %v447, %v507
      %v522 = vsub.f32 %v448, %v508
      %v523 = vsub.f32 %v449, %v509
      %v524 = vsub.f32 %v450, %v510
      %v525 = vsub.f32 %v451, %v511
      %v526 = vsub.f32 %v452, %v512
      %v527 = vsub.f32 %v453, %v513
      %v528 = vsub.f32 %v454, %v514
      %v529 = vsub.f32 %v455, %v515
      %v530 = vsub.f32 %v456, %v516
      %v531 = vsub.f32 %v457, %v517
      %v532 = vsub.f32 %v458, %v518
      %v533 = vmul.f32 %v519, %v519
      %v534 = vmul.f32 %v520, %v520
      %v535 = vmul.f32 %v521, %v521
      %v536 = vmul.f32 %v522, %v522
      %v537 = vmul.f32 %v523, %v523
      %v538 = vmul.f32 %v524, %v524
      %v539 = vmul.f32 %v525, %v525
      %v540 = vmul.f32 %v526, %v526
      %v541 = vmul.f32 %v527, %v527
      %v542 = vmul.f32 %v528, %v528
      %v543 = vmul.f32 %v529, %v529
      %v544 = vmul.f32 %v530, %v530
      %v545 = vmul.f32 %v531, %v531
      %v546 = vmul.f32 %v532, %v532
      %v547 = vsel %vm461, %v533, 0.0
      %548 = vadd.xlane.f32.xlu0 %v547
      %v549 = vpop.xlane.xlu0 %548
      %v550 = vsel %vm461, %v534, 0.0
      %551 = vadd.xlane.f32.xlu0 %v550
      %v552 = vpop.xlane.xlu0 %551
      %v553 = vsel %vm461, %v535, 0.0
      %554 = vadd.xlane.f32.xlu0 %v553
      %v555 = vpop.xlane.xlu0 %554
      %v556 = vsel %vm461, %v536, 0.0
      %557 = vadd.xlane.f32.xlu0 %v556
      %v558 = vpop.xlane.xlu0 %557
      %v559 = vsel %vm461, %v537, 0.0
      %560 = vadd.xlane.f32.xlu0 %v559
      %v561 = vpop.xlane.xlu0 %560
      %v562 = vsel %vm461, %v538, 0.0
      %563 = vadd.xlane.f32.xlu0 %v562
      %v564 = vpop.xlane.xlu0 %563
      %v565 = vsel %vm461, %v539, 0.0
      %566 = vadd.xlane.f32.xlu0 %v565
      %v567 = vpop.xlane.xlu0 %566
      %v568 = vsel %vm461, %v540, 0.0
      %569 = vadd.xlane.f32.xlu0 %v568
      %v570 = vpop.xlane.xlu0 %569
      %v571 = vsel %vm461, %v541, 0.0
      %572 = vadd.xlane.f32.xlu0 %v571
      %v573 = vpop.xlane.xlu0 %572
      %v574 = vsel %vm461, %v542, 0.0
      %575 = vadd.xlane.f32.xlu0 %v574
      %v576 = vpop.xlane.xlu0 %575
      %v577 = vsel %vm461, %v543, 0.0
      %578 = vadd.xlane.f32.xlu0 %v577
      %v579 = vpop.xlane.xlu0 %578
      %v580 = vsel %vm461, %v544, 0.0
      %581 = vadd.xlane.f32.xlu0 %v580
      %v582 = vpop.xlane.xlu0 %581
      %v583 = vsel %vm461, %v545, 0.0
      %584 = vadd.xlane.f32.xlu0 %v583
      %v585 = vpop.xlane.xlu0 %584
      %v586 = vsel %vm461, %v546, 0.0
      %587 = vadd.xlane.f32.xlu0 %v586
      %v588 = vpop.xlane.xlu0 %587
      %v589 = vmul.f32 %v549, %v504
      %v590 = vmul.f32 %v552, %v504
      %v591 = vmul.f32 %v555, %v504
      %v592 = vmul.f32 %v558, %v504
      %v593 = vmul.f32 %v561, %v504
      %v594 = vmul.f32 %v564, %v504
      %v595 = vmul.f32 %v567, %v504
      %v596 = vmul.f32 %v570, %v504
      %v597 = vmul.f32 %v573, %v504
      %v598 = vmul.f32 %v576, %v504
      %v599 = vmul.f32 %v579, %v504
      %v600 = vmul.f32 %v582, %v504
      %v601 = vmul.f32 %v585, %v504
      %v602 = vmul.f32 %v588, %v504
      %v603 = vadd.f32 %v589, 1e-05
      %v604 = vadd.f32 %v590, 1e-05
      %v605 = vadd.f32 %v591, 1e-05
      %v606 = vadd.f32 %v592, 1e-05
      %v607 = vadd.f32 %v593, 1e-05
      %v608 = vadd.f32 %v594, 1e-05
      %v609 = vadd.f32 %v595, 1e-05
      %v610 = vadd.f32 %v596, 1e-05
      %v611 = vadd.f32 %v597, 1e-05
      %v612 = vadd.f32 %v598, 1e-05
      %v613 = vadd.f32 %v599, 1e-05
      %v614 = vadd.f32 %v600, 1e-05
      %v615 = vadd.f32 %v601, 1e-05
      %v616 = vadd.f32 %v602, 1e-05
      %v617 = vrsqrt.pop %v603
      %v618 = vrsqrt.pop %v604
      %v619 = vrsqrt.pop %v605
      %v620 = vrsqrt.pop %v606
      %v621 = vrsqrt.pop %v607
      %v622 = vrsqrt.pop %v608
      %v623 = vrsqrt.pop %v609
      %v624 = vrsqrt.pop %v610
      %v625 = vrsqrt.pop %v611
      %v626 = vrsqrt.pop %v612
      %v627 = vrsqrt.pop %v613
      %v628 = vrsqrt.pop %v614
      %v629 = vrsqrt.pop %v615
      %v630 = vrsqrt.pop %v616
      %v631 = vmul.f32 %v519, %v617
      %v632 = vmul.f32 %v520, %v618
      %v633 = vmul.f32 %v521, %v619
      %v634 = vmul.f32 %v522, %v620
      %v635 = vmul.f32 %v523, %v621
      %v636 = vmul.f32 %v524, %v622
      %v637 = vmul.f32 %v525, %v623
      %v638 = vmul.f32 %v526, %v624
      %v639 = vmul.f32 %v527, %v625
      %v640 = vmul.f32 %v528, %v626
      %v641 = vmul.f32 %v529, %v627
      %v642 = vmul.f32 %v530, %v628
      %v643 = vmul.f32 %v531, %v629
      %v644 = vmul.f32 %v532, %v630
      %v645 = vlaneseq
      %v646 = vshrl.u32 %v645, 7
      %v647 = vsub.s32 0, %v646
      %v648 = vrot.slane %v459, %v647
      %v649 = vmul.f32 %v631, %v648
      %v650 = vmul.f32 %v632, %v648
      %v651 = vmul.f32 %v633, %v648
      %v652 = vmul.f32 %v634, %v648
      %v653 = vmul.f32 %v635, %v648
      %v654 = vmul.f32 %v636, %v648
      %v655 = vmul.f32 %v637, %v648
      %v656 = vmul.f32 %v638, %v648
      %v657 = vmul.f32 %v639, %v648
      %v658 = vmul.f32 %v640, %v648
      %v659 = vmul.f32 %v641, %v648
      %v660 = vmul.f32 %v642, %v648
      %v661 = vmul.f32 %v643, %v648
      %v662 = vmul.f32 %v644, %v648
      %v663 = vlaneseq
      %v664 = vshrl.u32 %v663, 7
      %v665 = vsub.s32 1, %v664
      %v666 = vrot.slane %v459, %v665
      %v667 = vadd.f32 %v649, %v666
      %v668 = vadd.f32 %v650, %v666
      %v669 = vadd.f32 %v651, %v666
      %v670 = vadd.f32 %v652, %v666
      %v671 = vadd.f32 %v653, %v666
      %v672 = vadd.f32 %v654, %v666
      %v673 = vadd.f32 %v655, %v666
      %v674 = vadd.f32 %v656, %v666
      %v675 = vadd.f32 %v657, %v666
      %v676 = vadd.f32 %v658, %v666
      %v677 = vadd.f32 %v659, %v666
      %v678 = vadd.f32 %v660, %v666
      %v679 = vadd.f32 %v661, %v666
      %v680 = vadd.f32 %v662, %v666
      %v681 = vpack.c.bf16 %v668, %v667
      %v682 = vpack.c.bf16 %v670, %v669
      %v683 = vpack.c.bf16 %v672, %v671
      %v684 = vpack.c.bf16 %v674, %v673
      %v685 = vpack.c.bf16 %v676, %v675
      %v686 = vpack.c.bf16 %v678, %v677
      %v687 = vpack.c.bf16 %v680, %v679
      %v688 = vld [vmem:[%s380] sm:$0xf]
      %v689 = vld [vmem:[%s380 + $0x4] sm:$0xf]
      %v690 = vld [vmem:[%s380 + $0x8] sm:$0xf]
      %v691 = vld [vmem:[%s380 + $0xc] sm:$0xf]
      %v692 = vlaneseq
      %v693 = vshrl.u32 %v692, 7
      %v694 = vsub.s32 2, %v693
      %v695 = vrot.slane %v459, %v694
      %v700 = vunpack.c.l.b16 %v688
      %v701 = vunpack.c.l.b16 %v689
      %v702 = vunpack.c.l.b16 %v690
      %v703 = vunpack.c.l.b16 %v691
      %v704 = vpack.c.b16 %v701, %v700
      %v705 = vpack.c.b16 %v703, %v702
      %v709 = vsel %vm461, %v681, 0
      %v712 = vsel %vm461, %v682, 0
      %v715 = vsel %vm461, %v683, 0
      %v718 = vsel %vm461, %v684, 0
      %v721 = vsel %vm461, %v685, 0
      %v724 = vsel %vm461, %v686, 0
      %v727 = vsel %vm461, %v687, 0
      %729 = vmatprep.subr.bf16.mxu0 0
      %730 = vmatpush1.bf16.msra.mxu0 0
      %731 = vmatprep.subr.bf16.mxu0 0
      %732 = vmatpush1.bf16.msra.mxu0 0
      %733 = vmatprep.subr.bf16.mxu0 0
      %734 = vmatpush1.bf16.msra.mxu0 0
      %735 = vmatprep.subr.bf16.mxu0 0
      %736 = vmatpush1.bf16.msra.mxu0 0
      %737 = vmatprep.subr.bf16.mxu0 0
      %738 = vmatpush1.bf16.msra.mxu0 0
      %739 = vmatprep.subr.bf16.mxu0 0
      %740 = vmatpush1.bf16.msra.mxu0 0
      %741 = vmatprep.subr.bf16.mxu0 0
      %742 = vmatpush1.bf16.msra.mxu0 %v705
      %743 = vmatprep.subr.bf16.mxu0 0
      %744 = vmatpush1.bf16.msra.mxu0 %v704
      %745 = vmatprep.subr.bf16.mxu0 0
      %746 = vmatpush2.bf16.msra.mxu0 0
      %747 = vmatprep.subr.bf16.mxu0 0
      %748 = vmatpush2.bf16.msra.mxu0 0
      %749 = vmatprep.subr.bf16.mxu0 0
      %750 = vmatpush2.bf16.msra.mxu0 0
      %751 = vmatprep.subr.bf16.mxu0 0
      %752 = vmatpush2.bf16.msra.mxu0 0
      %753 = vmatprep.subr.bf16.mxu0 0
      %754 = vmatpush2.bf16.msra.mxu0 0
      %755 = vmatprep.subr.bf16.mxu0 0
      %756 = vmatpush2.bf16.msra.mxu0 0
      %757 = vmatprep.subr.bf16.mxu0 0
      %758 = vmatpush2.bf16.msra.mxu0 0
      %759 = vmatprep.subr.bf16.mxu0 0
      %760 = vmatpush2.bf16.msra.mxu0 0
      %761 = vmatprep.mubr.bf16.mxu0 0
      %762 = vmatmul.mubr.bf16.gmra.mxu0 %v709
      %v763 = vpop.f32.mrf.mxu0
      %v764 = vadd.f32 %v695, %v763
      %v765 = vpop.f32.mrf.mxu0
      %v766 = vpop.f32.mrf.mxu0
      %v767 = vadd.f32 %v695, %v766
      %v768 = vpop.f32.mrf.mxu0
      %769 = vmatprep.mubr.bf16.mxu0 0
      %770 = vmatmul.mubr.bf16.gmra.mxu0 %v712
      %v771 = vpop.f32.mrf.mxu0
      %v772 = vadd.f32 %v695, %v771
      %v773 = vpop.f32.mrf.mxu0
      %v774 = vpop.f32.mrf.mxu0
      %v775 = vadd.f32 %v695, %v774
      %v776 = vpop.f32.mrf.mxu0
      %777 = vmatprep.mubr.bf16.mxu0 0
      %778 = vmatmul.mubr.bf16.gmra.mxu0 %v715
      %v779 = vpop.f32.mrf.mxu0
      %v780 = vadd.f32 %v695, %v779
      %v781 = vpop.f32.mrf.mxu0
      %v782 = vpop.f32.mrf.mxu0
      %v783 = vadd.f32 %v695, %v782
      %v784 = vpop.f32.mrf.mxu0
      %785 = vmatprep.mubr.bf16.mxu0 0
      %786 = vmatmul.mubr.bf16.gmra.mxu0 %v718
      %v787 = vpop.f32.mrf.mxu0
      %v788 = vadd.f32 %v695, %v787
      %v789 = vpop.f32.mrf.mxu0
      %v790 = vpop.f32.mrf.mxu0
      %v791 = vadd.f32 %v695, %v790
      %v792 = vpop.f32.mrf.mxu0
      %793 = vmatprep.mubr.bf16.mxu0 0
      %794 = vmatmul.mubr.bf16.gmra.mxu0 %v721
      %v795 = vpop.f32.mrf.mxu0
      %v796 = vadd.f32 %v695, %v795
      %v797 = vpop.f32.mrf.mxu0
      %v798 = vpop.f32.mrf.mxu0
      %v799 = vadd.f32 %v695, %v798
      %v800 = vpop.f32.mrf.mxu0
      %801 = vmatprep.mubr.bf16.mxu0 0
      %802 = vmatmul.mubr.bf16.gmra.mxu0 %v724
      %v803 = vpop.f32.mrf.mxu0
      %v804 = vadd.f32 %v695, %v803
      %v805 = vpop.f32.mrf.mxu0
      %v806 = vpop.f32.mrf.mxu0
      %v807 = vadd.f32 %v695, %v806
      %v808 = vpop.f32.mrf.mxu0
      %809 = vmatprep.mubr.bf16.mxu0 0
      %810 = vmatmul.mubr.bf16.gmra.mxu0 %v727
      %v811 = vpop.f32.mrf.mxu0
      %v812 = vadd.f32 %v695, %v811
      %v813 = vpop.f32.mrf.mxu0
      %v814 = vpop.f32.mrf.mxu0
      %v815 = vadd.f32 %v695, %v814
      %v816 = vpop.f32.mrf.mxu0
      %817 = vdwg.mxu0
      %v818 = vld [vmem:[%s385] sm:$0xf]
      %v819 = vld [vmem:[%s385 + $0x4] sm:$0xf]
      %v820 = vld [vmem:[%s385 + $0x8] sm:$0xf]
      %v821 = vld [vmem:[%s385 + $0xc] sm:$0xf]
      %v822 = vlaneseq
      %v823 = vshrl.u32 %v822, 7
      %v824 = vsub.s32 3, %v823
      %v825 = vrot.slane %v459, %v824
      %v830 = vunpack.c.l.b16 %v818
      %v831 = vunpack.c.l.b16 %v819
      %v832 = vunpack.c.l.b16 %v820
      %v833 = vunpack.c.l.b16 %v821
      %v834 = vpack.c.b16 %v831, %v830
      %v835 = vpack.c.b16 %v833, %v832
      %838 = vmatprep.subr.bf16.mxu0 0
      %839 = vmatpush1.bf16.msra.mxu0 0
      %840 = vmatprep.subr.bf16.mxu0 0
      %841 = vmatpush1.bf16.msra.mxu0 0
      %842 = vmatprep.subr.bf16.mxu0 0
      %843 = vmatpush1.bf16.msra.mxu0 0
      %844 = vmatprep.subr.bf16.mxu0 0
      %845 = vmatpush1.bf16.msra.mxu0 0
      %846 = vmatprep.subr.bf16.mxu0 0
      %847 = vmatpush1.bf16.msra.mxu0 0
      %848 = vmatprep.subr.bf16.mxu0 0
      %849 = vmatpush1.bf16.msra.mxu0 0
      %850 = vmatprep.subr.bf16.mxu0 0
      %851 = vmatpush1.bf16.msra.mxu0 %v835
      %852 = vmatprep.subr.bf16.mxu0 0
      %853 = vmatpush1.bf16.msra.mxu0 %v834
      %854 = vmatprep.subr.bf16.mxu0 0
      %855 = vmatpush2.bf16.msra.mxu0 0
      %856 = vmatprep.subr.bf16.mxu0 0
      %857 = vmatpush2.bf16.msra.mxu0 0
      %858 = vmatprep.subr.bf16.mxu0 0
      %859 = vmatpush2.bf16.msra.mxu0 0
      %860 = vmatprep.subr.bf16.mxu0 0
      %861 = vmatpush2.bf16.msra.mxu0 0
      %862 = vmatprep.subr.bf16.mxu0 0
      %863 = vmatpush2.bf16.msra.mxu0 0
      %864 = vmatprep.subr.bf16.mxu0 0
      %865 = vmatpush2.bf16.msra.mxu0 0
      %866 = vmatprep.subr.bf16.mxu0 0
      %867 = vmatpush2.bf16.msra.mxu0 0
      %868 = vmatprep.subr.bf16.mxu0 0
      %869 = vmatpush2.bf16.msra.mxu0 0
      %870 = vmatprep.mubr.bf16.mxu0 0
      %871 = vmatmul.mubr.bf16.gmra.mxu0 %v709
      %v872 = vpop.f32.mrf.mxu0
      %v873 = vadd.f32 %v825, %v872
      %v874 = vpop.f32.mrf.mxu0
      %v875 = vpop.f32.mrf.mxu0
      %v876 = vadd.f32 %v825, %v875
      %v877 = vpop.f32.mrf.mxu0
      %878 = vmatprep.mubr.bf16.mxu0 0
      %879 = vmatmul.mubr.bf16.gmra.mxu0 %v712
      %v880 = vpop.f32.mrf.mxu0
      %v881 = vadd.f32 %v825, %v880
      %v882 = vpop.f32.mrf.mxu0
      %v883 = vpop.f32.mrf.mxu0
      %v884 = vadd.f32 %v825, %v883
      %v885 = vpop.f32.mrf.mxu0
      %886 = vmatprep.mubr.bf16.mxu0 0
      %887 = vmatmul.mubr.bf16.gmra.mxu0 %v715
      %v888 = vpop.f32.mrf.mxu0
      %v889 = vadd.f32 %v825, %v888
      %v890 = vpop.f32.mrf.mxu0
      %v891 = vpop.f32.mrf.mxu0
      %v892 = vadd.f32 %v825, %v891
      %v893 = vpop.f32.mrf.mxu0
      %894 = vmatprep.mubr.bf16.mxu0 0
      %895 = vmatmul.mubr.bf16.gmra.mxu0 %v718
      %v896 = vpop.f32.mrf.mxu0
      %v897 = vadd.f32 %v825, %v896
      %v898 = vpop.f32.mrf.mxu0
      %v899 = vpop.f32.mrf.mxu0
      %v900 = vadd.f32 %v825, %v899
      %v901 = vpop.f32.mrf.mxu0
      %902 = vmatprep.mubr.bf16.mxu0 0
      %903 = vmatmul.mubr.bf16.gmra.mxu0 %v721
      %v904 = vpop.f32.mrf.mxu0
      %v905 = vadd.f32 %v825, %v904
      %v906 = vpop.f32.mrf.mxu0
      %v907 = vpop.f32.mrf.mxu0
      %v908 = vadd.f32 %v825, %v907
      %v909 = vpop.f32.mrf.mxu0
      %910 = vmatprep.mubr.bf16.mxu0 0
      %911 = vmatmul.mubr.bf16.gmra.mxu0 %v724
      %v912 = vpop.f32.mrf.mxu0
      %v913 = vadd.f32 %v825, %v912
      %v914 = vpop.f32.mrf.mxu0
      %v915 = vpop.f32.mrf.mxu0
      %v916 = vadd.f32 %v825, %v915
      %v917 = vpop.f32.mrf.mxu0
      %918 = vmatprep.mubr.bf16.mxu0 0
      %919 = vmatmul.mubr.bf16.gmra.mxu0 %v727
      %v920 = vpop.f32.mrf.mxu0
      %v921 = vadd.f32 %v825, %v920
      %v922 = vpop.f32.mrf.mxu0
      %v923 = vpop.f32.mrf.mxu0
      %v924 = vadd.f32 %v825, %v923
      %v925 = vpop.f32.mrf.mxu0
      %926 = vdwg.mxu0
      %v927 = vld [vmem:[%s390] sm:$0xf]
      %v928 = vld [vmem:[%s390 + $0x4] sm:$0xf]
      %v929 = vld [vmem:[%s390 + $0x8] sm:$0xf]
      %v930 = vld [vmem:[%s390 + $0xc] sm:$0xf]
      %v931 = vlaneseq
      %v932 = vshrl.u32 %v931, 7
      %v933 = vsub.s32 4, %v932
      %v934 = vrot.slane %v459, %v933
      %v939 = vunpack.c.l.b16 %v927
      %v940 = vunpack.c.l.b16 %v928
      %v941 = vunpack.c.l.b16 %v929
      %v942 = vunpack.c.l.b16 %v930
      %v943 = vpack.c.b16 %v940, %v939
      %v944 = vpack.c.b16 %v942, %v941
      %947 = vmatprep.subr.bf16.mxu0 0
      %948 = vmatpush1.bf16.msra.mxu0 0
      %949 = vmatprep.subr.bf16.mxu0 0
      %950 = vmatpush1.bf16.msra.mxu0 0
      %951 = vmatprep.subr.bf16.mxu0 0
      %952 = vmatpush1.bf16.msra.mxu0 0
      %953 = vmatprep.subr.bf16.mxu0 0
      %954 = vmatpush1.bf16.msra.mxu0 0
      %955 = vmatprep.subr.bf16.mxu0 0
      %956 = vmatpush1.bf16.msra.mxu0 0
      %957 = vmatprep.subr.bf16.mxu0 0
      %958 = vmatpush1.bf16.msra.mxu0 0
      %959 = vmatprep.subr.bf16.mxu0 0
      %960 = vmatpush1.bf16.msra.mxu0 %v944
      %961 = vmatprep.subr.bf16.mxu0 0
      %962 = vmatpush1.bf16.msra.mxu0 %v943
      %963 = vmatprep.subr.bf16.mxu0 0
      %964 = vmatpush2.bf16.msra.mxu0 0
      %965 = vmatprep.subr.bf16.mxu0 0
      %966 = vmatpush2.bf16.msra.mxu0 0
      %967 = vmatprep.subr.bf16.mxu0 0
      %968 = vmatpush2.bf16.msra.mxu0 0
      %969 = vmatprep.subr.bf16.mxu0 0
      %970 = vmatpush2.bf16.msra.mxu0 0
      %971 = vmatprep.subr.bf16.mxu0 0
      %972 = vmatpush2.bf16.msra.mxu0 0
      %973 = vmatprep.subr.bf16.mxu0 0
      %974 = vmatpush2.bf16.msra.mxu0 0
      %975 = vmatprep.subr.bf16.mxu0 0
      %976 = vmatpush2.bf16.msra.mxu0 0
      %977 = vmatprep.subr.bf16.mxu0 0
      %978 = vmatpush2.bf16.msra.mxu0 0
      %979 = vmatprep.mubr.bf16.mxu0 0
      %980 = vmatmul.mubr.bf16.gmra.mxu0 %v709
      %v981 = vpop.f32.mrf.mxu0
      %v982 = vadd.f32 %v934, %v981
      %v983 = vpop.f32.mrf.mxu0
      %v984 = vpop.f32.mrf.mxu0
      %v985 = vadd.f32 %v934, %v984
      %v986 = vpop.f32.mrf.mxu0
      %987 = vmatprep.mubr.bf16.mxu0 0
      %988 = vmatmul.mubr.bf16.gmra.mxu0 %v712
      %v989 = vpop.f32.mrf.mxu0
      %v990 = vadd.f32 %v934, %v989
      %v991 = vpop.f32.mrf.mxu0
      %v992 = vpop.f32.mrf.mxu0
      %v993 = vadd.f32 %v934, %v992
      %v994 = vpop.f32.mrf.mxu0
      %995 = vmatprep.mubr.bf16.mxu0 0
      %996 = vmatmul.mubr.bf16.gmra.mxu0 %v715
      %v997 = vpop.f32.mrf.mxu0
      %v998 = vadd.f32 %v934, %v997
      %v999 = vpop.f32.mrf.mxu0
      %v1000 = vpop.f32.mrf.mxu0
      %v1001 = vadd.f32 %v934, %v1000
      %v1002 = vpop.f32.mrf.mxu0
      %1003 = vmatprep.mubr.bf16.mxu0 0
      %1004 = vmatmul.mubr.bf16.gmra.mxu0 %v718
      %v1005 = vpop.f32.mrf.mxu0
      %v1006 = vadd.f32 %v934, %v1005
      %v1007 = vpop.f32.mrf.mxu0
      %v1008 = vpop.f32.mrf.mxu0
      %v1009 = vadd.f32 %v934, %v1008
      %v1010 = vpop.f32.mrf.mxu0
      %1011 = vmatprep.mubr.bf16.mxu0 0
      %1012 = vmatmul.mubr.bf16.gmra.mxu0 %v721
      %v1013 = vpop.f32.mrf.mxu0
      %v1014 = vadd.f32 %v934, %v1013
      %v1015 = vpop.f32.mrf.mxu0
      %v1016 = vpop.f32.mrf.mxu0
      %v1017 = vadd.f32 %v934, %v1016
      %v1018 = vpop.f32.mrf.mxu0
      %1019 = vmatprep.mubr.bf16.mxu0 0
      %1020 = vmatmul.mubr.bf16.gmra.mxu0 %v724
      %v1021 = vpop.f32.mrf.mxu0
      %v1022 = vadd.f32 %v934, %v1021
      %v1023 = vpop.f32.mrf.mxu0
      %v1024 = vpop.f32.mrf.mxu0
      %v1025 = vadd.f32 %v934, %v1024
      %v1026 = vpop.f32.mrf.mxu0
      %1027 = vmatprep.mubr.bf16.mxu0 0
      %1028 = vmatmul.mubr.bf16.gmra.mxu0 %v727
      %v1029 = vpop.f32.mrf.mxu0
      %v1030 = vadd.f32 %v934, %v1029
      %v1031 = vpop.f32.mrf.mxu0
      %v1032 = vpop.f32.mrf.mxu0
      %v1033 = vadd.f32 %v934, %v1032
      %v1034 = vpop.f32.mrf.mxu0
      %1035 = vdwg.mxu0
      %v1036 = vpack.c.bf16 %v767, %v764
      %v1037 = vpack.c.bf16 %v775, %v772
      %v1038 = vpack.c.bf16 %v783, %v780
      %v1039 = vpack.c.bf16 %v788, %v788
      %v1040 = vpack.c.bf16 %v796, %v791
      %v1041 = vpack.c.bf16 %v804, %v799
      %v1042 = vpack.c.bf16 %v812, %v807
      %v1043 = vpack.c.bf16 %v815, %v815
      %v1044 = vpack.c.bf16 %v876, %v873
      %v1045 = vpack.c.bf16 %v884, %v881
      %v1046 = vpack.c.bf16 %v892, %v889
      %v1047 = vpack.c.bf16 %v897, %v897
      %v1048 = vpack.c.bf16 %v905, %v900
      %v1049 = vpack.c.bf16 %v913, %v908
      %v1050 = vpack.c.bf16 %v921, %v916
      %v1051 = vpack.c.bf16 %v924, %v924
      %v1052 = vpack.c.bf16 %v985, %v982
      %v1053 = vpack.c.bf16 %v993, %v990
      %v1054 = vpack.c.bf16 %v1001, %v998
      %v1055 = vpack.c.bf16 %v1006, %v1006
      %v1056 = vpack.c.bf16 %v1014, %v1009
      %v1057 = vpack.c.bf16 %v1022, %v1017
      %v1058 = vpack.c.bf16 %v1030, %v1025
      %v1059 = vpack.c.bf16 %v1033, %v1033
      %vm1060 = vcmask 64512
      %v1062 = vsel %vm1060, %v1036, 0
      %v1065 = vsel %vm1060, %v1037, 0
      %v1068 = vsel %vm1060, %v1038, 0
      %v1071 = vsel %vm1060, %v1039, 0
      %v1074 = vsel %vm1060, %v1044, 0
      %v1077 = vsel %vm1060, %v1045, 0
      %v1080 = vsel %vm1060, %v1046, 0
      %v1083 = vsel %vm1060, %v1047, 0
      %1085 = vmatprep.subr.bf16.mxu0 0
      %1086 = vmatpush1.bf16.xpose.msra.mxu0 0
      %1087 = vmatprep.subr.bf16.mxu0 0
      %1088 = vmatpush1.bf16.xpose.msra.mxu0 0
      %1089 = vmatprep.subr.bf16.mxu0 0
      %1090 = vmatpush1.bf16.xpose.msra.mxu0 0
      %1091 = vmatprep.subr.bf16.mxu0 0
      %1092 = vmatpush1.bf16.xpose.msra.mxu0 0
      %1093 = vmatprep.subr.bf16.mxu0 0
      %1094 = vmatpush1.bf16.xpose.msra.mxu0 %v1083
      %1095 = vmatprep.subr.bf16.mxu0 0
      %1096 = vmatpush1.bf16.xpose.msra.mxu0 %v1080
      %1097 = vmatprep.subr.bf16.mxu0 0
      %1098 = vmatpush1.bf16.xpose.msra.mxu0 %v1077
      %1099 = vmatprep.subr.bf16.mxu0 0
      %1100 = vmatpush1.bf16.xpose.msra.mxu0 %v1074
      %1101 = vmatprep.subr.bf16.mxu0 0
      %1102 = vmatpush2.bf16.xpose.msra.mxu0 0
      %1103 = vmatprep.subr.bf16.mxu0 0
      %1104 = vmatpush2.bf16.xpose.msra.mxu0 0
      %1105 = vmatprep.subr.bf16.mxu0 0
      %1106 = vmatpush2.bf16.xpose.msra.mxu0 0
      %1107 = vmatprep.subr.bf16.mxu0 0
      %1108 = vmatpush2.bf16.xpose.msra.mxu0 0
      %1109 = vmatprep.subr.bf16.mxu0 0
      %1110 = vmatpush2.bf16.xpose.msra.mxu0 0
      %1111 = vmatprep.subr.bf16.mxu0 0
      %1112 = vmatpush2.bf16.xpose.msra.mxu0 0
      %1113 = vmatprep.subr.bf16.mxu0 0
      %1114 = vmatpush2.bf16.xpose.msra.mxu0 0
      %1115 = vmatprep.subr.bf16.mxu0 0
      %1116 = vmatpush2.bf16.xpose.msra.mxu0 0
      %1117 = vmatprep.mubr.bf16.mxu0 0
      %1118 = vmatmul.mubr.bf16.gmra.mxu0 %v1062
      %v1119 = vpop.f32.mrf.mxu0
      %v1120 = vadd.f32 0.0, %v1119
      %v1121 = vpop.f32.mrf.mxu0
      %v1122 = vpop.f32.mrf.mxu0
      %v1123 = vadd.f32 0.0, %v1122
      %v1124 = vpop.f32.mrf.mxu0
      %1125 = vmatprep.mubr.bf16.mxu0 0
      %1126 = vmatmul.mubr.bf16.gmra.mxu0 %v1065
      %v1127 = vpop.f32.mrf.mxu0
      %v1128 = vadd.f32 0.0, %v1127
      %v1129 = vpop.f32.mrf.mxu0
      %v1130 = vpop.f32.mrf.mxu0
      %v1131 = vadd.f32 0.0, %v1130
      %v1132 = vpop.f32.mrf.mxu0
      %1133 = vmatprep.mubr.bf16.mxu0 0
      %1134 = vmatmul.mubr.bf16.gmra.mxu0 %v1068
      %v1135 = vpop.f32.mrf.mxu0
      %v1136 = vadd.f32 0.0, %v1135
      %v1137 = vpop.f32.mrf.mxu0
      %v1138 = vpop.f32.mrf.mxu0
      %v1139 = vadd.f32 0.0, %v1138
      %v1140 = vpop.f32.mrf.mxu0
      %1141 = vmatprep.mubr.bf16.mxu0 0
      %1142 = vmatmul.mubr.bf16.gmra.mxu0 %v1071
      %v1143 = vpop.f32.mrf.mxu0
      %v1144 = vadd.f32 0.0, %v1143
      %v1145 = vpop.f32.mrf.mxu0
      %v1146 = vpop.f32.mrf.mxu0
      %v1147 = vpop.f32.mrf.mxu0
      %1148 = vdwg.mxu0
      %v1150 = vsel %vm1060, %v1040, 0
      %v1153 = vsel %vm1060, %v1041, 0
      %v1156 = vsel %vm1060, %v1042, 0
      %v1159 = vsel %vm1060, %v1043, 0
      %v1162 = vsel %vm1060, %v1048, 0
      %v1165 = vsel %vm1060, %v1049, 0
      %v1168 = vsel %vm1060, %v1050, 0
      %v1171 = vsel %vm1060, %v1051, 0
      %1173 = vmatprep.subr.bf16.mxu0 0
      %1174 = vmatpush1.bf16.xpose.msra.mxu0 0
      %1175 = vmatprep.subr.bf16.mxu0 0
      %1176 = vmatpush1.bf16.xpose.msra.mxu0 0
      %1177 = vmatprep.subr.bf16.mxu0 0
      %1178 = vmatpush1.bf16.xpose.msra.mxu0 0
      %1179 = vmatprep.subr.bf16.mxu0 0
      %1180 = vmatpush1.bf16.xpose.msra.mxu0 0
      %1181 = vmatprep.subr.bf16.mxu0 0
      %1182 = vmatpush1.bf16.xpose.msra.mxu0 %v1171
      %1183 = vmatprep.subr.bf16.mxu0 0
      %1184 = vmatpush1.bf16.xpose.msra.mxu0 %v1168
      %1185 = vmatprep.subr.bf16.mxu0 0
      %1186 = vmatpush1.bf16.xpose.msra.mxu0 %v1165
      %1187 = vmatprep.subr.bf16.mxu0 0
      %1188 = vmatpush1.bf16.xpose.msra.mxu0 %v1162
      %1189 = vmatprep.subr.bf16.mxu0 0
      %1190 = vmatpush2.bf16.xpose.msra.mxu0 0
      %1191 = vmatprep.subr.bf16.mxu0 0
      %1192 = vmatpush2.bf16.xpose.msra.mxu0 0
      %1193 = vmatprep.subr.bf16.mxu0 0
      %1194 = vmatpush2.bf16.xpose.msra.mxu0 0
      %1195 = vmatprep.subr.bf16.mxu0 0
      %1196 = vmatpush2.bf16.xpose.msra.mxu0 0
      %1197 = vmatprep.subr.bf16.mxu0 0
      %1198 = vmatpush2.bf16.xpose.msra.mxu0 0
      %1199 = vmatprep.subr.bf16.mxu0 0
      %1200 = vmatpush2.bf16.xpose.msra.mxu0 0
      %1201 = vmatprep.subr.bf16.mxu0 0
      %1202 = vmatpush2.bf16.xpose.msra.mxu0 0
      %1203 = vmatprep.subr.bf16.mxu0 0
      %1204 = vmatpush2.bf16.xpose.msra.mxu0 0
      %1205 = vmatprep.mubr.bf16.mxu0 0
      %1206 = vmatmul.mubr.bf16.gmra.mxu0 %v1150
      %v1207 = vpop.f32.mrf.mxu0
      %v1208 = vadd.f32 0.0, %v1207
      %v1209 = vpop.f32.mrf.mxu0
      %v1210 = vpop.f32.mrf.mxu0
      %v1211 = vadd.f32 0.0, %v1210
      %v1212 = vpop.f32.mrf.mxu0
      %1213 = vmatprep.mubr.bf16.mxu0 0
      %1214 = vmatmul.mubr.bf16.gmra.mxu0 %v1153
      %v1215 = vpop.f32.mrf.mxu0
      %v1216 = vadd.f32 0.0, %v1215
      %v1217 = vpop.f32.mrf.mxu0
      %v1218 = vpop.f32.mrf.mxu0
      %v1219 = vadd.f32 0.0, %v1218
      %v1220 = vpop.f32.mrf.mxu0
      %1221 = vmatprep.mubr.bf16.mxu0 0
      %1222 = vmatmul.mubr.bf16.gmra.mxu0 %v1156
      %v1223 = vpop.f32.mrf.mxu0
      %v1224 = vadd.f32 0.0, %v1223
      %v1225 = vpop.f32.mrf.mxu0
      %v1226 = vpop.f32.mrf.mxu0
      %v1227 = vadd.f32 0.0, %v1226
      %v1228 = vpop.f32.mrf.mxu0
      %1229 = vmatprep.mubr.bf16.mxu0 0
      %1230 = vmatmul.mubr.bf16.gmra.mxu0 %v1159
      %v1231 = vpop.f32.mrf.mxu0
      %v1232 = vadd.f32 0.0, %v1231
      %v1233 = vpop.f32.mrf.mxu0
      %v1234 = vpop.f32.mrf.mxu0
      %v1235 = vpop.f32.mrf.mxu0
      %1236 = vdwg.mxu0
      %v1237 = vmul.f32 %v1120, 0.35355338
      %v1238 = vmul.f32 %v1123, 0.35355338
      %v1239 = vmul.f32 %v1128, 0.35355338
      %v1240 = vmul.f32 %v1131, 0.35355338
      %v1241 = vmul.f32 %v1136, 0.35355338
      %v1242 = vmul.f32 %v1139, 0.35355338
      %v1243 = vmul.f32 %v1144, 0.35355338
      %v1244 = vmul.f32 %v1208, 0.35355338
      %v1245 = vmul.f32 %v1211, 0.35355338
      %v1246 = vmul.f32 %v1216, 0.35355338
      %v1247 = vmul.f32 %v1219, 0.35355338
      %v1248 = vmul.f32 %v1224, 0.35355338
      %v1249 = vmul.f32 %v1227, 0.35355338
      %v1250 = vmul.f32 %v1232, 0.35355338
      %v1251 = vlaneseq
      %v1252 = vshrl.u32 %v1251, 7
      %v1253 = vsub.s32 2, %v1252
      %v1254 = vrot.slane %v460, %v1253
      %v1255 = vadd.f32 %v1237, %v1254
      %v1256 = vadd.f32 %v1238, %v1254
      %v1257 = vadd.f32 %v1239, %v1254
      %v1258 = vadd.f32 %v1240, %v1254
      %v1259 = vadd.f32 %v1241, %v1254
      %v1260 = vadd.f32 %v1242, %v1254
      %v1261 = vadd.f32 %v1243, %v1254
      %v1262 = vadd.f32 %v1244, %v1254
      %v1263 = vadd.f32 %v1245, %v1254
      %v1264 = vadd.f32 %v1246, %v1254
      %v1265 = vadd.f32 %v1247, %v1254
      %v1266 = vadd.f32 %v1248, %v1254
      %v1267 = vadd.f32 %v1249, %v1254
      %v1268 = vadd.f32 %v1250, %v1254
      %vm1269 = vcmask 457728
      %v1270 = vsel %vm1269, %v1255, -inf
      %1271 = vmax.xlane.f32.xlu0 %v1270
      %v1272 = vpop.xlane.xlu0 %1271
      %v1273 = vsel %vm1269, %v1256, -inf
      %1274 = vmax.xlane.f32.xlu0 %v1273
      %v1275 = vpop.xlane.xlu0 %1274
      %v1276 = vsel %vm1269, %v1257, -inf
      %1277 = vmax.xlane.f32.xlu0 %v1276
      %v1278 = vpop.xlane.xlu0 %1277
      %v1279 = vsel %vm1269, %v1258, -inf
      %1280 = vmax.xlane.f32.xlu0 %v1279
      %v1281 = vpop.xlane.xlu0 %1280
      %v1282 = vsel %vm1269, %v1259, -inf
      %1283 = vmax.xlane.f32.xlu0 %v1282
      %v1284 = vpop.xlane.xlu0 %1283
      %v1285 = vsel %vm1269, %v1260, -inf
      %1286 = vmax.xlane.f32.xlu0 %v1285
      %v1287 = vpop.xlane.xlu0 %1286
      %v1288 = vsel %vm1269, %v1261, -inf
      %1289 = vmax.xlane.f32.xlu0 %v1288
      %v1290 = vpop.xlane.xlu0 %1289
      %v1291 = vsel %vm1269, %v1262, -inf
      %1292 = vmax.xlane.f32.xlu0 %v1291
      %v1293 = vpop.xlane.xlu0 %1292
      %v1294 = vsel %vm1269, %v1263, -inf
      %1295 = vmax.xlane.f32.xlu0 %v1294
      %v1296 = vpop.xlane.xlu0 %1295
      %v1297 = vsel %vm1269, %v1264, -inf
      %1298 = vmax.xlane.f32.xlu0 %v1297
      %v1299 = vpop.xlane.xlu0 %1298
      %v1300 = vsel %vm1269, %v1265, -inf
      %1301 = vmax.xlane.f32.xlu0 %v1300
      %v1302 = vpop.xlane.xlu0 %1301
      %v1303 = vsel %vm1269, %v1266, -inf
      %1304 = vmax.xlane.f32.xlu0 %v1303
      %v1305 = vpop.xlane.xlu0 %1304
      %v1306 = vsel %vm1269, %v1267, -inf
      %1307 = vmax.xlane.f32.xlu0 %v1306
      %v1308 = vpop.xlane.xlu0 %1307
      %v1309 = vsel %vm1269, %v1268, -inf
      %1310 = vmax.xlane.f32.xlu0 %v1309
      %v1311 = vpop.xlane.xlu0 %1310
      %v1312 = vsub.f32 %v1255, %v1272
      %v1313 = vsub.f32 %v1256, %v1275
      %v1314 = vsub.f32 %v1257, %v1278
      %v1315 = vsub.f32 %v1258, %v1281
      %v1316 = vsub.f32 %v1259, %v1284
      %v1317 = vsub.f32 %v1260, %v1287
      %v1318 = vsub.f32 %v1261, %v1290
      %v1319 = vsub.f32 %v1262, %v1293
      %v1320 = vsub.f32 %v1263, %v1296
      %v1321 = vsub.f32 %v1264, %v1299
      %v1322 = vsub.f32 %v1265, %v1302
      %v1323 = vsub.f32 %v1266, %v1305
      %v1324 = vsub.f32 %v1267, %v1308
      %v1325 = vsub.f32 %v1268, %v1311
      %v1326 = vmul.f32 %v1312, 1.442695
      %v1327 = vpow.pop %v1326
      %v1328 = vmul.f32 %v1313, 1.442695
      %v1329 = vpow.pop %v1328
      %v1330 = vmul.f32 %v1314, 1.442695
      %v1331 = vpow.pop %v1330
      %v1332 = vmul.f32 %v1315, 1.442695
      %v1333 = vpow.pop %v1332
      %v1334 = vmul.f32 %v1316, 1.442695
      %v1335 = vpow.pop %v1334
      %v1336 = vmul.f32 %v1317, 1.442695
      %v1337 = vpow.pop %v1336
      %v1338 = vmul.f32 %v1318, 1.442695
      %v1339 = vpow.pop %v1338
      %v1340 = vmul.f32 %v1319, 1.442695
      %v1341 = vpow.pop %v1340
      %v1342 = vmul.f32 %v1320, 1.442695
      %v1343 = vpow.pop %v1342
      %v1344 = vmul.f32 %v1321, 1.442695
      %v1345 = vpow.pop %v1344
      %v1346 = vmul.f32 %v1322, 1.442695
      %v1347 = vpow.pop %v1346
      %v1348 = vmul.f32 %v1323, 1.442695
      %v1349 = vpow.pop %v1348
      %v1350 = vmul.f32 %v1324, 1.442695
      %v1351 = vpow.pop %v1350
      %v1352 = vmul.f32 %v1325, 1.442695
      %v1353 = vpow.pop %v1352
      %v1354 = vsel %vm1269, %v1327, 0.0
      %1355 = vadd.xlane.f32.xlu0 %v1354
      %v1356 = vpop.xlane.xlu0 %1355
      %v1357 = vsel %vm1269, %v1329, 0.0
      %1358 = vadd.xlane.f32.xlu0 %v1357
      %v1359 = vpop.xlane.xlu0 %1358
      %v1360 = vsel %vm1269, %v1331, 0.0
      %1361 = vadd.xlane.f32.xlu0 %v1360
      %v1362 = vpop.xlane.xlu0 %1361
      %v1363 = vsel %vm1269, %v1333, 0.0
      %1364 = vadd.xlane.f32.xlu0 %v1363
      %v1365 = vpop.xlane.xlu0 %1364
      %v1366 = vsel %vm1269, %v1335, 0.0
      %1367 = vadd.xlane.f32.xlu0 %v1366
      %v1368 = vpop.xlane.xlu0 %1367
      %v1369 = vsel %vm1269, %v1337, 0.0
      %1370 = vadd.xlane.f32.xlu0 %v1369
      %v1371 = vpop.xlane.xlu0 %1370
      %v1372 = vsel %vm1269, %v1339, 0.0
      %1373 = vadd.xlane.f32.xlu0 %v1372
      %v1374 = vpop.xlane.xlu0 %1373
      %v1375 = vsel %vm1269, %v1341, 0.0
      %1376 = vadd.xlane.f32.xlu0 %v1375
      %v1377 = vpop.xlane.xlu0 %1376
      %v1378 = vsel %vm1269, %v1343, 0.0
      %1379 = vadd.xlane.f32.xlu0 %v1378
      %v1380 = vpop.xlane.xlu0 %1379
      %v1381 = vsel %vm1269, %v1345, 0.0
      %1382 = vadd.xlane.f32.xlu0 %v1381
      %v1383 = vpop.xlane.xlu0 %1382
      %v1384 = vsel %vm1269, %v1347, 0.0
      %1385 = vadd.xlane.f32.xlu0 %v1384
      %v1386 = vpop.xlane.xlu0 %1385
      %v1387 = vsel %vm1269, %v1349, 0.0
      %1388 = vadd.xlane.f32.xlu0 %v1387
      %v1389 = vpop.xlane.xlu0 %1388
      %v1390 = vsel %vm1269, %v1351, 0.0
      %1391 = vadd.xlane.f32.xlu0 %v1390
      %v1392 = vpop.xlane.xlu0 %1391
      %v1393 = vsel %vm1269, %v1353, 0.0
      %1394 = vadd.xlane.f32.xlu0 %v1393
      %v1395 = vpop.xlane.xlu0 %1394
      %v1396 = vrcp.pop %v1356
      %v1397 = vrcp.pop %v1359
      %v1398 = vrcp.pop %v1362
      %v1399 = vrcp.pop %v1365
      %v1400 = vrcp.pop %v1368
      %v1401 = vrcp.pop %v1371
      %v1402 = vrcp.pop %v1374
      %v1403 = vrcp.pop %v1377
      %v1404 = vrcp.pop %v1380
      %v1405 = vrcp.pop %v1383
      %v1406 = vrcp.pop %v1386
      %v1407 = vrcp.pop %v1389
      %v1408 = vrcp.pop %v1392
      %v1409 = vrcp.pop %v1395
      %v1410 = vmul.f32 %v1327, %v1396
      %v1411 = vmul.f32 %v1329, %v1397
      %v1412 = vmul.f32 %v1331, %v1398
      %v1413 = vmul.f32 %v1333, %v1399
      %v1414 = vmul.f32 %v1335, %v1400
      %v1415 = vmul.f32 %v1337, %v1401
      %v1416 = vmul.f32 %v1339, %v1402
      %v1417 = vmul.f32 %v1341, %v1403
      %v1418 = vmul.f32 %v1343, %v1404
      %v1419 = vmul.f32 %v1345, %v1405
      %v1420 = vmul.f32 %v1347, %v1406
      %v1421 = vmul.f32 %v1349, %v1407
      %v1422 = vmul.f32 %v1351, %v1408
      %v1423 = vmul.f32 %v1353, %v1409
      %v1424 = vpack.c.bf16 %v1411, %v1410
      %v1425 = vpack.c.bf16 %v1413, %v1412
      %v1426 = vpack.c.bf16 %v1415, %v1414
      %v1427 = vpack.c.bf16 %v1416, %v1416
      %v1428 = vpack.c.bf16 %v1418, %v1417
      %v1429 = vpack.c.bf16 %v1420, %v1419
      %v1430 = vpack.c.bf16 %v1422, %v1421
      %v1431 = vpack.c.bf16 %v1423, %v1423
      %v1433 = vsel %vm1269, %v1424, 0
      %v1436 = vsel %vm1269, %v1425, 0
      %v1439 = vsel %vm1269, %v1426, 0
      %v1442 = vsel %vm1269, %v1427, 0
      %vm1444 = vcmask 1043456
      %v1446 = vsel %vm1444, %v1055, 0
      %1448 = vmatprep.subr.bf16.mxu0 0
      %1449 = vmatpush1.bf16.msra.mxu0 0
      %1450 = vmatprep.subr.bf16.mxu0 0
      %1451 = vmatpush1.bf16.msra.mxu0 0
      %1452 = vmatprep.subr.bf16.mxu0 0
      %1453 = vmatpush1.bf16.msra.mxu0 0
      %1454 = vmatprep.subr.bf16.mxu0 0
      %1455 = vmatpush1.bf16.msra.mxu0 0
      %1456 = vmatprep.subr.bf16.mxu0 0
      %1457 = vmatpush1.bf16.msra.mxu0 %v1446
      %1458 = vmatprep.subr.bf16.mxu0 0
      %1459 = vmatpush1.bf16.msra.mxu0 %v1054
      %1460 = vmatprep.subr.bf16.mxu0 0
      %1461 = vmatpush1.bf16.msra.mxu0 %v1053
      %1462 = vmatprep.subr.bf16.mxu0 0
      %1463 = vmatpush1.bf16.msra.mxu0 %v1052
      %1464 = vmatprep.subr.bf16.mxu0 0
      %1465 = vmatpush2.bf16.msra.mxu0 0
      %1466 = vmatprep.subr.bf16.mxu0 0
      %1467 = vmatpush2.bf16.msra.mxu0 0
      %1468 = vmatprep.subr.bf16.mxu0 0
      %1469 = vmatpush2.bf16.msra.mxu0 0
      %1470 = vmatprep.subr.bf16.mxu0 0
      %1471 = vmatpush2.bf16.msra.mxu0 0
      %1472 = vmatprep.subr.bf16.mxu0 0
      %1473 = vmatpush2.bf16.msra.mxu0 0
      %1474 = vmatprep.subr.bf16.mxu0 0
      %1475 = vmatpush2.bf16.msra.mxu0 0
      %1476 = vmatprep.subr.bf16.mxu0 0
      %1477 = vmatpush2.bf16.msra.mxu0 0
      %1478 = vmatprep.subr.bf16.mxu0 0
      %1479 = vmatpush2.bf16.msra.mxu0 0
      %1480 = vmatprep.mubr.bf16.mxu0 0
      %1481 = vmatmul.mubr.bf16.gmra.mxu0 %v1433
      %v1482 = vpop.f32.mrf.mxu0
      %v1483 = vadd.f32 0.0, %v1482
      %v1484 = vpop.f32.mrf.mxu0
      %v1485 = vpop.f32.mrf.mxu0
      %v1486 = vadd.f32 0.0, %v1485
      %v1487 = vpop.f32.mrf.mxu0
      %1488 = vmatprep.mubr.bf16.mxu0 0
      %1489 = vmatmul.mubr.bf16.gmra.mxu0 %v1436
      %v1490 = vpop.f32.mrf.mxu0
      %v1491 = vadd.f32 0.0, %v1490
      %v1492 = vpop.f32.mrf.mxu0
      %v1493 = vpop.f32.mrf.mxu0
      %v1494 = vadd.f32 0.0, %v1493
      %v1495 = vpop.f32.mrf.mxu0
      %1496 = vmatprep.mubr.bf16.mxu0 0
      %1497 = vmatmul.mubr.bf16.gmra.mxu0 %v1439
      %v1498 = vpop.f32.mrf.mxu0
      %v1499 = vadd.f32 0.0, %v1498
      %v1500 = vpop.f32.mrf.mxu0
      %v1501 = vpop.f32.mrf.mxu0
      %v1502 = vadd.f32 0.0, %v1501
      %v1503 = vpop.f32.mrf.mxu0
      %1504 = vmatprep.mubr.bf16.mxu0 0
      %1505 = vmatmul.mubr.bf16.gmra.mxu0 %v1442
      %v1506 = vpop.f32.mrf.mxu0
      %v1507 = vadd.f32 0.0, %v1506
      %v1508 = vpop.f32.mrf.mxu0
      %v1509 = vpop.f32.mrf.mxu0
      %v1510 = vpop.f32.mrf.mxu0
      %1511 = vdwg.mxu0
      %v1513 = vsel %vm1269, %v1428, 0
      %v1516 = vsel %vm1269, %v1429, 0
      %v1519 = vsel %vm1269, %v1430, 0
      %v1522 = vsel %vm1269, %v1431, 0
      %v1525 = vsel %vm1444, %v1059, 0
      %1527 = vmatprep.subr.bf16.mxu0 0
      %1528 = vmatpush1.bf16.msra.mxu0 0
      %1529 = vmatprep.subr.bf16.mxu0 0
      %1530 = vmatpush1.bf16.msra.mxu0 0
      %1531 = vmatprep.subr.bf16.mxu0 0
      %1532 = vmatpush1.bf16.msra.mxu0 0
      %1533 = vmatprep.subr.bf16.mxu0 0
      %1534 = vmatpush1.bf16.msra.mxu0 0
      %1535 = vmatprep.subr.bf16.mxu0 0
      %1536 = vmatpush1.bf16.msra.mxu0 %v1525
      %1537 = vmatprep.subr.bf16.mxu0 0
      %1538 = vmatpush1.bf16.msra.mxu0 %v1058
      %1539 = vmatprep.subr.bf16.mxu0 0
      %1540 = vmatpush1.bf16.msra.mxu0 %v1057
      %1541 = vmatprep.subr.bf16.mxu0 0
      %1542 = vmatpush1.bf16.msra.mxu0 %v1056
      %1543 = vmatprep.subr.bf16.mxu0 0
      %1544 = vmatpush2.bf16.msra.mxu0 0
      %1545 = vmatprep.subr.bf16.mxu0 0
      %1546 = vmatpush2.bf16.msra.mxu0 0
      %1547 = vmatprep.subr.bf16.mxu0 0
      %1548 = vmatpush2.bf16.msra.mxu0 0
      %1549 = vmatprep.subr.bf16.mxu0 0
      %1550 = vmatpush2.bf16.msra.mxu0 0
      %1551 = vmatprep.subr.bf16.mxu0 0
      %1552 = vmatpush2.bf16.msra.mxu0 0
      %1553 = vmatprep.subr.bf16.mxu0 0
      %1554 = vmatpush2.bf16.msra.mxu0 0
      %1555 = vmatprep.subr.bf16.mxu0 0
      %1556 = vmatpush2.bf16.msra.mxu0 0
      %1557 = vmatprep.subr.bf16.mxu0 0
      %1558 = vmatpush2.bf16.msra.mxu0 0
      %1559 = vmatprep.mubr.bf16.mxu0 0
      %1560 = vmatmul.mubr.bf16.gmra.mxu0 %v1513
      %v1561 = vpop.f32.mrf.mxu0
      %v1562 = vadd.f32 0.0, %v1561
      %v1563 = vpop.f32.mrf.mxu0
      %v1564 = vpop.f32.mrf.mxu0
      %v1565 = vadd.f32 0.0, %v1564
      %v1566 = vpop.f32.mrf.mxu0
      %1567 = vmatprep.mubr.bf16.mxu0 0
      %1568 = vmatmul.mubr.bf16.gmra.mxu0 %v1516
      %v1569 = vpop.f32.mrf.mxu0
      %v1570 = vadd.f32 0.0, %v1569
      %v1571 = vpop.f32.mrf.mxu0
      %v1572 = vpop.f32.mrf.mxu0
      %v1573 = vadd.f32 0.0, %v1572
      %v1574 = vpop.f32.mrf.mxu0
      %1575 = vmatprep.mubr.bf16.mxu0 0
      %1576 = vmatmul.mubr.bf16.gmra.mxu0 %v1519
      %v1577 = vpop.f32.mrf.mxu0
      %v1578 = vadd.f32 0.0, %v1577
      %v1579 = vpop.f32.mrf.mxu0
      %v1580 = vpop.f32.mrf.mxu0
      %v1581 = vadd.f32 0.0, %v1580
      %v1582 = vpop.f32.mrf.mxu0
      %1583 = vmatprep.mubr.bf16.mxu0 0
      %1584 = vmatmul.mubr.bf16.gmra.mxu0 %v1522
      %v1585 = vpop.f32.mrf.mxu0
      %v1586 = vadd.f32 0.0, %v1585
      %v1587 = vpop.f32.mrf.mxu0
      %v1588 = vpop.f32.mrf.mxu0
      %v1589 = vpop.f32.mrf.mxu0
      %1590 = vdwg.mxu0
      %v1591 = vpack.c.bf16 %v1486, %v1483
      %v1592 = vpack.c.bf16 %v1494, %v1491
      %v1593 = vpack.c.bf16 %v1502, %v1499
      %v1594 = vpack.c.bf16 %v1562, %v1507
      %v1595 = vpack.c.bf16 %v1570, %v1565
      %v1596 = vpack.c.bf16 %v1578, %v1573
      %v1597 = vpack.c.bf16 %v1586, %v1581
      %v1598 = vld [vmem:[%s395] sm:$0xf]
      %s1599 = scalar_lea.vmem %s380, 16
      %v1600 = vld [vmem:[%s1599] sm:$0xf]
      %v1601 = vld [vmem:[%s1599 + $0x4] sm:$0xf]
      %v1602 = vld [vmem:[%s1599 + $0x8] sm:$0xf]
      %v1603 = vld [vmem:[%s1599 + $0xc] sm:$0xf]
      %v1608 = vunpack.c.l.b16 %v1600
      %v1609 = vunpack.c.l.b16 %v1601
      %v1610 = vunpack.c.l.b16 %v1602
      %v1611 = vunpack.c.l.b16 %v1603
      %v1612 = vpack.c.b16 %v1609, %v1608
      %v1613 = vpack.c.b16 %v1611, %v1610
      %1617 = vrot.lane.b32.xlu0 %v695, 120
      %v1618 = vpop.permute.xlu0 %1617
      %1620 = vmatprep.subr.bf16.mxu0 0
      %1621 = vmatpush1.bf16.msra.mxu0 0
      %1622 = vmatprep.subr.bf16.mxu0 0
      %1623 = vmatpush1.bf16.msra.mxu0 0
      %1624 = vmatprep.subr.bf16.mxu0 0
      %1625 = vmatpush1.bf16.msra.mxu0 0
      %1626 = vmatprep.subr.bf16.mxu0 0
      %1627 = vmatpush1.bf16.msra.mxu0 0
      %1628 = vmatprep.subr.bf16.mxu0 0
      %1629 = vmatpush1.bf16.msra.mxu0 0
      %1630 = vmatprep.subr.bf16.mxu0 0
      %1631 = vmatpush1.bf16.msra.mxu0 0
      %1632 = vmatprep.subr.bf16.mxu0 0
      %1633 = vmatpush1.bf16.msra.mxu0 %v1613
      %1634 = vmatprep.subr.bf16.mxu0 0
      %1635 = vmatpush1.bf16.msra.mxu0 %v1612
      %1636 = vmatprep.subr.bf16.mxu0 0
      %1637 = vmatpush2.bf16.msra.mxu0 0
      %1638 = vmatprep.subr.bf16.mxu0 0
      %1639 = vmatpush2.bf16.msra.mxu0 0
      %1640 = vmatprep.subr.bf16.mxu0 0
      %1641 = vmatpush2.bf16.msra.mxu0 0
      %1642 = vmatprep.subr.bf16.mxu0 0
      %1643 = vmatpush2.bf16.msra.mxu0 0
      %1644 = vmatprep.subr.bf16.mxu0 0
      %1645 = vmatpush2.bf16.msra.mxu0 0
      %1646 = vmatprep.subr.bf16.mxu0 0
      %1647 = vmatpush2.bf16.msra.mxu0 0
      %1648 = vmatprep.subr.bf16.mxu0 0
      %1649 = vmatpush2.bf16.msra.mxu0 0
      %1650 = vmatprep.subr.bf16.mxu0 0
      %1651 = vmatpush2.bf16.msra.mxu0 0
      %1652 = vmatprep.mubr.bf16.mxu0 0
      %1653 = vmatmul.mubr.bf16.gmra.mxu0 %v709
      %v1654 = vpop.f32.mrf.mxu0
      %v1655 = vadd.f32 %v1618, %v1654
      %v1656 = vpop.f32.mrf.mxu0
      %v1657 = vpop.f32.mrf.mxu0
      %v1658 = vadd.f32 %v1618, %v1657
      %v1659 = vpop.f32.mrf.mxu0
      %1660 = vmatprep.mubr.bf16.mxu0 0
      %1661 = vmatmul.mubr.bf16.gmra.mxu0 %v712
      %v1662 = vpop.f32.mrf.mxu0
      %v1663 = vadd.f32 %v1618, %v1662
      %v1664 = vpop.f32.mrf.mxu0
      %v1665 = vpop.f32.mrf.mxu0
      %v1666 = vadd.f32 %v1618, %v1665
      %v1667 = vpop.f32.mrf.mxu0
      %1668 = vmatprep.mubr.bf16.mxu0 0
      %1669 = vmatmul.mubr.bf16.gmra.mxu0 %v715
      %v1670 = vpop.f32.mrf.mxu0
      %v1671 = vadd.f32 %v1618, %v1670
      %v1672 = vpop.f32.mrf.mxu0
      %v1673 = vpop.f32.mrf.mxu0
      %v1674 = vadd.f32 %v1618, %v1673
      %v1675 = vpop.f32.mrf.mxu0
      %1676 = vmatprep.mubr.bf16.mxu0 0
      %1677 = vmatmul.mubr.bf16.gmra.mxu0 %v718
      %v1678 = vpop.f32.mrf.mxu0
      %v1679 = vadd.f32 %v1618, %v1678
      %v1680 = vpop.f32.mrf.mxu0
      %v1681 = vpop.f32.mrf.mxu0
      %v1682 = vadd.f32 %v1618, %v1681
      %v1683 = vpop.f32.mrf.mxu0
      %1684 = vmatprep.mubr.bf16.mxu0 0
      %1685 = vmatmul.mubr.bf16.gmra.mxu0 %v721
      %v1686 = vpop.f32.mrf.mxu0
      %v1687 = vadd.f32 %v1618, %v1686
      %v1688 = vpop.f32.mrf.mxu0
      %v1689 = vpop.f32.mrf.mxu0
      %v1690 = vadd.f32 %v1618, %v1689
      %v1691 = vpop.f32.mrf.mxu0
      %1692 = vmatprep.mubr.bf16.mxu0 0
      %1693 = vmatmul.mubr.bf16.gmra.mxu0 %v724
      %v1694 = vpop.f32.mrf.mxu0
      %v1695 = vadd.f32 %v1618, %v1694
      %v1696 = vpop.f32.mrf.mxu0
      %v1697 = vpop.f32.mrf.mxu0
      %v1698 = vadd.f32 %v1618, %v1697
      %v1699 = vpop.f32.mrf.mxu0
      %1700 = vmatprep.mubr.bf16.mxu0 0
      %1701 = vmatmul.mubr.bf16.gmra.mxu0 %v727
      %v1702 = vpop.f32.mrf.mxu0
      %v1703 = vadd.f32 %v1618, %v1702
      %v1704 = vpop.f32.mrf.mxu0
      %v1705 = vpop.f32.mrf.mxu0
      %v1706 = vadd.f32 %v1618, %v1705
      %v1707 = vpop.f32.mrf.mxu0
      %1708 = vdwg.mxu0
      %s1709 = scalar_lea.vmem %s385, 16
      %v1710 = vld [vmem:[%s1709] sm:$0xf]
      %v1711 = vld [vmem:[%s1709 + $0x4] sm:$0xf]
      %v1712 = vld [vmem:[%s1709 + $0x8] sm:$0xf]
      %v1713 = vld [vmem:[%s1709 + $0xc] sm:$0xf]
      %v1718 = vunpack.c.l.b16 %v1710
      %v1719 = vunpack.c.l.b16 %v1711
      %v1720 = vunpack.c.l.b16 %v1712
      %v1721 = vunpack.c.l.b16 %v1713
      %v1722 = vpack.c.b16 %v1719, %v1718
      %v1723 = vpack.c.b16 %v1721, %v1720
      %1727 = vrot.lane.b32.xlu0 %v825, 120
      %v1728 = vpop.permute.xlu0 %1727
      %1730 = vmatprep.subr.bf16.mxu0 0
      %1731 = vmatpush1.bf16.msra.mxu0 0
      %1732 = vmatprep.subr.bf16.mxu0 0
      %1733 = vmatpush1.bf16.msra.mxu0 0
      %1734 = vmatprep.subr.bf16.mxu0 0
      %1735 = vmatpush1.bf16.msra.mxu0 0
      %1736 = vmatprep.subr.bf16.mxu0 0
      %1737 = vmatpush1.bf16.msra.mxu0 0
      %1738 = vmatprep.subr.bf16.mxu0 0
      %1739 = vmatpush1.bf16.msra.mxu0 0
      %1740 = vmatprep.subr.bf16.mxu0 0
      %1741 = vmatpush1.bf16.msra.mxu0 0
      %1742 = vmatprep.subr.bf16.mxu0 0
      %1743 = vmatpush1.bf16.msra.mxu0 %v1723
      %1744 = vmatprep.subr.bf16.mxu0 0
      %1745 = vmatpush1.bf16.msra.mxu0 %v1722
      %1746 = vmatprep.subr.bf16.mxu0 0
      %1747 = vmatpush2.bf16.msra.mxu0 0
      %1748 = vmatprep.subr.bf16.mxu0 0
      %1749 = vmatpush2.bf16.msra.mxu0 0
      %1750 = vmatprep.subr.bf16.mxu0 0
      %1751 = vmatpush2.bf16.msra.mxu0 0
      %1752 = vmatprep.subr.bf16.mxu0 0
      %1753 = vmatpush2.bf16.msra.mxu0 0
      %1754 = vmatprep.subr.bf16.mxu0 0
      %1755 = vmatpush2.bf16.msra.mxu0 0
      %1756 = vmatprep.subr.bf16.mxu0 0
      %1757 = vmatpush2.bf16.msra.mxu0 0
      %1758 = vmatprep.subr.bf16.mxu0 0
      %1759 = vmatpush2.bf16.msra.mxu0 0
      %1760 = vmatprep.subr.bf16.mxu0 0
      %1761 = vmatpush2.bf16.msra.mxu0 0
      %1762 = vmatprep.mubr.bf16.mxu0 0
      %1763 = vmatmul.mubr.bf16.gmra.mxu0 %v709
      %v1764 = vpop.f32.mrf.mxu0
      %v1765 = vadd.f32 %v1728, %v1764
      %v1766 = vpop.f32.mrf.mxu0
      %v1767 = vpop.f32.mrf.mxu0
      %v1768 = vadd.f32 %v1728, %v1767
      %v1769 = vpop.f32.mrf.mxu0
      %1770 = vmatprep.mubr.bf16.mxu0 0
      %1771 = vmatmul.mubr.bf16.gmra.mxu0 %v712
      %v1772 = vpop.f32.mrf.mxu0
      %v1773 = vadd.f32 %v1728, %v1772
      %v1774 = vpop.f32.mrf.mxu0
      %v1775 = vpop.f32.mrf.mxu0
      %v1776 = vadd.f32 %v1728, %v1775
      %v1777 = vpop.f32.mrf.mxu0
      %1778 = vmatprep.mubr.bf16.mxu0 0
      %1779 = vmatmul.mubr.bf16.gmra.mxu0 %v715
      %v1780 = vpop.f32.mrf.mxu0
      %v1781 = vadd.f32 %v1728, %v1780
      %v1782 = vpop.f32.mrf.mxu0
      %v1783 = vpop.f32.mrf.mxu0
      %v1784 = vadd.f32 %v1728, %v1783
      %v1785 = vpop.f32.mrf.mxu0
      %1786 = vmatprep.mubr.bf16.mxu0 0
      %1787 = vmatmul.mubr.bf16.gmra.mxu0 %v718
      %v1788 = vpop.f32.mrf.mxu0
      %v1789 = vadd.f32 %v1728, %v1788
      %v1790 = vpop.f32.mrf.mxu0
      %v1791 = vpop.f32.mrf.mxu0
      %v1792 = vadd.f32 %v1728, %v1791
      %v1793 = vpop.f32.mrf.mxu0
      %1794 = vmatprep.mubr.bf16.mxu0 0
      %1795 = vmatmul.mubr.bf16.gmra.mxu0 %v721
      %v1796 = vpop.f32.mrf.mxu0
      %v1797 = vadd.f32 %v1728, %v1796
      %v1798 = vpop.f32.mrf.mxu0
      %v1799 = vpop.f32.mrf.mxu0
      %v1800 = vadd.f32 %v1728, %v1799
      %v1801 = vpop.f32.mrf.mxu0
      %1802 = vmatprep.mubr.bf16.mxu0 0
      %1803 = vmatmul.mubr.bf16.gmra.mxu0 %v724
      %v1804 = vpop.f32.mrf.mxu0
      %v1805 = vadd.f32 %v1728, %v1804
      %v1806 = vpop.f32.mrf.mxu0
      %v1807 = vpop.f32.mrf.mxu0
      %v1808 = vadd.f32 %v1728, %v1807
      %v1809 = vpop.f32.mrf.mxu0
      %1810 = vmatprep.mubr.bf16.mxu0 0
      %1811 = vmatmul.mubr.bf16.gmra.mxu0 %v727
      %v1812 = vpop.f32.mrf.mxu0
      %v1813 = vadd.f32 %v1728, %v1812
      %v1814 = vpop.f32.mrf.mxu0
      %v1815 = vpop.f32.mrf.mxu0
      %v1816 = vadd.f32 %v1728, %v1815
      %v1817 = vpop.f32.mrf.mxu0
      %1818 = vdwg.mxu0
      %s1819 = scalar_lea.vmem %s390, 16
      %v1820 = vld [vmem:[%s1819] sm:$0xf]
      %v1821 = vld [vmem:[%s1819 + $0x4] sm:$0xf]
      %v1822 = vld [vmem:[%s1819 + $0x8] sm:$0xf]
      %v1823 = vld [vmem:[%s1819 + $0xc] sm:$0xf]
      %v1828 = vunpack.c.l.b16 %v1820
      %v1829 = vunpack.c.l.b16 %v1821
      %v1830 = vunpack.c.l.b16 %v1822
      %v1831 = vunpack.c.l.b16 %v1823
      %v1832 = vpack.c.b16 %v1829, %v1828
      %v1833 = vpack.c.b16 %v1831, %v1830
      %1837 = vrot.lane.b32.xlu0 %v934, 120
      %v1838 = vpop.permute.xlu0 %1837
      %1840 = vmatprep.subr.bf16.mxu0 0
      %1841 = vmatpush1.bf16.msra.mxu0 0
      %1842 = vmatprep.subr.bf16.mxu0 0
      %1843 = vmatpush1.bf16.msra.mxu0 0
      %1844 = vmatprep.subr.bf16.mxu0 0
      %1845 = vmatpush1.bf16.msra.mxu0 0
      %1846 = vmatprep.subr.bf16.mxu0 0
      %1847 = vmatpush1.bf16.msra.mxu0 0
      %1848 = vmatprep.subr.bf16.mxu0 0
      %1849 = vmatpush1.bf16.msra.mxu0 0
      %1850 = vmatprep.subr.bf16.mxu0 0
      %1851 = vmatpush1.bf16.msra.mxu0 0
      %1852 = vmatprep.subr.bf16.mxu0 0
      %1853 = vmatpush1.bf16.msra.mxu0 %v1833
      %1854 = vmatprep.subr.bf16.mxu0 0
      %1855 = vmatpush1.bf16.msra.mxu0 %v1832
      %1856 = vmatprep.subr.bf16.mxu0 0
      %1857 = vmatpush2.bf16.msra.mxu0 0
      %1858 = vmatprep.subr.bf16.mxu0 0
      %1859 = vmatpush2.bf16.msra.mxu0 0
      %1860 = vmatprep.subr.bf16.mxu0 0
      %1861 = vmatpush2.bf16.msra.mxu0 0
      %1862 = vmatprep.subr.bf16.mxu0 0
      %1863 = vmatpush2.bf16.msra.mxu0 0
      %1864 = vmatprep.subr.bf16.mxu0 0
      %1865 = vmatpush2.bf16.msra.mxu0 0
      %1866 = vmatprep.subr.bf16.mxu0 0
      %1867 = vmatpush2.bf16.msra.mxu0 0
      %1868 = vmatprep.subr.bf16.mxu0 0
      %1869 = vmatpush2.bf16.msra.mxu0 0
      %1870 = vmatprep.subr.bf16.mxu0 0
      %1871 = vmatpush2.bf16.msra.mxu0 0
      %1872 = vmatprep.mubr.bf16.mxu0 0
      %1873 = vmatmul.mubr.bf16.gmra.mxu0 %v709
      %v1874 = vpop.f32.mrf.mxu0
      %v1875 = vadd.f32 %v1838, %v1874
      %v1876 = vpop.f32.mrf.mxu0
      %v1877 = vpop.f32.mrf.mxu0
      %v1878 = vadd.f32 %v1838, %v1877
      %v1879 = vpop.f32.mrf.mxu0
      %1880 = vmatprep.mubr.bf16.mxu0 0
      %1881 = vmatmul.mubr.bf16.gmra.mxu0 %v712
      %v1882 = vpop.f32.mrf.mxu0
      %v1883 = vadd.f32 %v1838, %v1882
      %v1884 = vpop.f32.mrf.mxu0
      %v1885 = vpop.f32.mrf.mxu0
      %v1886 = vadd.f32 %v1838, %v1885
      %v1887 = vpop.f32.mrf.mxu0
      %1888 = vmatprep.mubr.bf16.mxu0 0
      %1889 = vmatmul.mubr.bf16.gmra.mxu0 %v715
      %v1890 = vpop.f32.mrf.mxu0
      %v1891 = vadd.f32 %v1838, %v1890
      %v1892 = vpop.f32.mrf.mxu0
      %v1893 = vpop.f32.mrf.mxu0
      %v1894 = vadd.f32 %v1838, %v1893
      %v1895 = vpop.f32.mrf.mxu0
      %1896 = vmatprep.mubr.bf16.mxu0 0
      %1897 = vmatmul.mubr.bf16.gmra.mxu0 %v718
      %v1898 = vpop.f32.mrf.mxu0
      %v1899 = vadd.f32 %v1838, %v1898
      %v1900 = vpop.f32.mrf.mxu0
      %v1901 = vpop.f32.mrf.mxu0
      %v1902 = vadd.f32 %v1838, %v1901
      %v1903 = vpop.f32.mrf.mxu0
      %1904 = vmatprep.mubr.bf16.mxu0 0
      %1905 = vmatmul.mubr.bf16.gmra.mxu0 %v721
      %v1906 = vpop.f32.mrf.mxu0
      %v1907 = vadd.f32 %v1838, %v1906
      %v1908 = vpop.f32.mrf.mxu0
      %v1909 = vpop.f32.mrf.mxu0
      %v1910 = vadd.f32 %v1838, %v1909
      %v1911 = vpop.f32.mrf.mxu0
      %1912 = vmatprep.mubr.bf16.mxu0 0
      %1913 = vmatmul.mubr.bf16.gmra.mxu0 %v724
      %v1914 = vpop.f32.mrf.mxu0
      %v1915 = vadd.f32 %v1838, %v1914
      %v1916 = vpop.f32.mrf.mxu0
      %v1917 = vpop.f32.mrf.mxu0
      %v1918 = vadd.f32 %v1838, %v1917
      %v1919 = vpop.f32.mrf.mxu0
      %1920 = vmatprep.mubr.bf16.mxu0 0
      %1921 = vmatmul.mubr.bf16.gmra.mxu0 %v727
      %v1922 = vpop.f32.mrf.mxu0
      %v1923 = vadd.f32 %v1838, %v1922
      %v1924 = vpop.f32.mrf.mxu0
      %v1925 = vpop.f32.mrf.mxu0
      %v1926 = vadd.f32 %v1838, %v1925
      %v1927 = vpop.f32.mrf.mxu0
      %1928 = vdwg.mxu0
      %v1929 = vpack.c.bf16 %v1658, %v1655
      %v1930 = vpack.c.bf16 %v1666, %v1663
      %v1931 = vpack.c.bf16 %v1674, %v1671
      %v1932 = vpack.c.bf16 %v1679, %v1679
      %v1933 = vpack.c.bf16 %v1687, %v1682
      %v1934 = vpack.c.bf16 %v1695, %v1690
      %v1935 = vpack.c.bf16 %v1703, %v1698
      %v1936 = vpack.c.bf16 %v1706, %v1706
      %v1937 = vpack.c.bf16 %v1768, %v1765
      %v1938 = vpack.c.bf16 %v1776, %v1773
      %v1939 = vpack.c.bf16 %v1784, %v1781
      %v1940 = vpack.c.bf16 %v1789, %v1789
      %v1941 = vpack.c.bf16 %v1797, %v1792
      %v1942 = vpack.c.bf16 %v1805, %v1800
      %v1943 = vpack.c.bf16 %v1813, %v1808
      %v1944 = vpack.c.bf16 %v1816, %v1816
      %v1945 = vpack.c.bf16 %v1878, %v1875
      %v1946 = vpack.c.bf16 %v1886, %v1883
      %v1947 = vpack.c.bf16 %v1894, %v1891
      %v1948 = vpack.c.bf16 %v1899, %v1899
      %v1949 = vpack.c.bf16 %v1907, %v1902
      %v1950 = vpack.c.bf16 %v1915, %v1910
      %v1951 = vpack.c.bf16 %v1923, %v1918
      %v1952 = vpack.c.bf16 %v1926, %v1926
      %v1954 = vsel %vm1060, %v1929, 0
      %v1957 = vsel %vm1060, %v1930, 0
      %v1960 = vsel %vm1060, %v1931, 0
      %v1963 = vsel %vm1060, %v1932, 0
      %v1966 = vsel %vm1060, %v1937, 0
      %v1969 = vsel %vm1060, %v1938, 0
      %v1972 = vsel %vm1060, %v1939, 0
      %v1975 = vsel %vm1060, %v1940, 0
      %1977 = vmatprep.subr.bf16.mxu0 0
      %1978 = vmatpush1.bf16.xpose.msra.mxu0 0
      %1979 = vmatprep.subr.bf16.mxu0 0
      %1980 = vmatpush1.bf16.xpose.msra.mxu0 0
      %1981 = vmatprep.subr.bf16.mxu0 0
      %1982 = vmatpush1.bf16.xpose.msra.mxu0 0
      %1983 = vmatprep.subr.bf16.mxu0 0
      %1984 = vmatpush1.bf16.xpose.msra.mxu0 0
      %1985 = vmatprep.subr.bf16.mxu0 0
      %1986 = vmatpush1.bf16.xpose.msra.mxu0 %v1975
      %1987 = vmatprep.subr.bf16.mxu0 0
      %1988 = vmatpush1.bf16.xpose.msra.mxu0 %v1972
      %1989 = vmatprep.subr.bf16.mxu0 0
      %1990 = vmatpush1.bf16.xpose.msra.mxu0 %v1969
      %1991 = vmatprep.subr.bf16.mxu0 0
      %1992 = vmatpush1.bf16.xpose.msra.mxu0 %v1966
      %1993 = vmatprep.subr.bf16.mxu0 0
      %1994 = vmatpush2.bf16.xpose.msra.mxu0 0
      %1995 = vmatprep.subr.bf16.mxu0 0
      %1996 = vmatpush2.bf16.xpose.msra.mxu0 0
      %1997 = vmatprep.subr.bf16.mxu0 0
      %1998 = vmatpush2.bf16.xpose.msra.mxu0 0
      %1999 = vmatprep.subr.bf16.mxu0 0
      %2000 = vmatpush2.bf16.xpose.msra.mxu0 0
      %2001 = vmatprep.subr.bf16.mxu0 0
      %2002 = vmatpush2.bf16.xpose.msra.mxu0 0
      %2003 = vmatprep.subr.bf16.mxu0 0
      %2004 = vmatpush2.bf16.xpose.msra.mxu0 0
      %2005 = vmatprep.subr.bf16.mxu0 0
      %2006 = vmatpush2.bf16.xpose.msra.mxu0 0
      %2007 = vmatprep.subr.bf16.mxu0 0
      %2008 = vmatpush2.bf16.xpose.msra.mxu0 0
      %2009 = vmatprep.mubr.bf16.mxu0 0
      %2010 = vmatmul.mubr.bf16.gmra.mxu0 %v1954
      %v2011 = vpop.f32.mrf.mxu0
      %v2012 = vadd.f32 0.0, %v2011
      %v2013 = vpop.f32.mrf.mxu0
      %v2014 = vpop.f32.mrf.mxu0
      %v2015 = vadd.f32 0.0, %v2014
      %v2016 = vpop.f32.mrf.mxu0
      %2017 = vmatprep.mubr.bf16.mxu0 0
      %2018 = vmatmul.mubr.bf16.gmra.mxu0 %v1957
      %v2019 = vpop.f32.mrf.mxu0
      %v2020 = vadd.f32 0.0, %v2019
      %v2021 = vpop.f32.mrf.mxu0
      %v2022 = vpop.f32.mrf.mxu0
      %v2023 = vadd.f32 0.0, %v2022
      %v2024 = vpop.f32.mrf.mxu0
      %2025 = vmatprep.mubr.bf16.mxu0 0
      %2026 = vmatmul.mubr.bf16.gmra.mxu0 %v1960
      %v2027 = vpop.f32.mrf.mxu0
      %v2028 = vadd.f32 0.0, %v2027
      %v2029 = vpop.f32.mrf.mxu0
      %v2030 = vpop.f32.mrf.mxu0
      %v2031 = vadd.f32 0.0, %v2030
      %v2032 = vpop.f32.mrf.mxu0
      %2033 = vmatprep.mubr.bf16.mxu0 0
      %2034 = vmatmul.mubr.bf16.gmra.mxu0 %v1963
      %v2035 = vpop.f32.mrf.mxu0
      %v2036 = vadd.f32 0.0, %v2035
      %v2037 = vpop.f32.mrf.mxu0
      %v2038 = vpop.f32.mrf.mxu0
      %v2039 = vpop.f32.mrf.mxu0
      %2040 = vdwg.mxu0
      %v2042 = vsel %vm1060, %v1933, 0
      %v2045 = vsel %vm1060, %v1934, 0
      %v2048 = vsel %vm1060, %v1935, 0
      %v2051 = vsel %vm1060, %v1936, 0
      %v2054 = vsel %vm1060, %v1941, 0
      %v2057 = vsel %vm1060, %v1942, 0
      %v2060 = vsel %vm1060, %v1943, 0
      %v2063 = vsel %vm1060, %v1944, 0
      %2065 = vmatprep.subr.bf16.mxu0 0
      %2066 = vmatpush1.bf16.xpose.msra.mxu0 0
      %2067 = vmatprep.subr.bf16.mxu0 0
      %2068 = vmatpush1.bf16.xpose.msra.mxu0 0
      %2069 = vmatprep.subr.bf16.mxu0 0
      %2070 = vmatpush1.bf16.xpose.msra.mxu0 0
      %2071 = vmatprep.subr.bf16.mxu0 0
      %2072 = vmatpush1.bf16.xpose.msra.mxu0 0
      %2073 = vmatprep.subr.bf16.mxu0 0
      %2074 = vmatpush1.bf16.xpose.msra.mxu0 %v2063
      %2075 = vmatprep.subr.bf16.mxu0 0
      %2076 = vmatpush1.bf16.xpose.msra.mxu0 %v2060
      %2077 = vmatprep.subr.bf16.mxu0 0
      %2078 = vmatpush1.bf16.xpose.msra.mxu0 %v2057
      %2079 = vmatprep.subr.bf16.mxu0 0
      %2080 = vmatpush1.bf16.xpose.msra.mxu0 %v2054
      %2081 = vmatprep.subr.bf16.mxu0 0
      %2082 = vmatpush2.bf16.xpose.msra.mxu0 0
      %2083 = vmatprep.subr.bf16.mxu0 0
      %2084 = vmatpush2.bf16.xpose.msra.mxu0 0
      %2085 = vmatprep.subr.bf16.mxu0 0
      %2086 = vmatpush2.bf16.xpose.msra.mxu0 0
      %2087 = vmatprep.subr.bf16.mxu0 0
      %2088 = vmatpush2.bf16.xpose.msra.mxu0 0
      %2089 = vmatprep.subr.bf16.mxu0 0
      %2090 = vmatpush2.bf16.xpose.msra.mxu0 0
      %2091 = vmatprep.subr.bf16.mxu0 0
      %2092 = vmatpush2.bf16.xpose.msra.mxu0 0
      %2093 = vmatprep.subr.bf16.mxu0 0
      %2094 = vmatpush2.bf16.xpose.msra.mxu0 0
      %2095 = vmatprep.subr.bf16.mxu0 0
      %2096 = vmatpush2.bf16.xpose.msra.mxu0 0
      %2097 = vmatprep.mubr.bf16.mxu0 0
      %2098 = vmatmul.mubr.bf16.gmra.mxu0 %v2042
      %v2099 = vpop.f32.mrf.mxu0
      %v2100 = vadd.f32 0.0, %v2099
      %v2101 = vpop.f32.mrf.mxu0
      %v2102 = vpop.f32.mrf.mxu0
      %v2103 = vadd.f32 0.0, %v2102
      %v2104 = vpop.f32.mrf.mxu0
      %2105 = vmatprep.mubr.bf16.mxu0 0
      %2106 = vmatmul.mubr.bf16.gmra.mxu0 %v2045
      %v2107 = vpop.f32.mrf.mxu0
      %v2108 = vadd.f32 0.0, %v2107
      %v2109 = vpop.f32.mrf.mxu0
      %v2110 = vpop.f32.mrf.mxu0
      %v2111 = vadd.f32 0.0, %v2110
      %v2112 = vpop.f32.mrf.mxu0
      %2113 = vmatprep.mubr.bf16.mxu0 0
      %2114 = vmatmul.mubr.bf16.gmra.mxu0 %v2048
      %v2115 = vpop.f32.mrf.mxu0
      %v2116 = vadd.f32 0.0, %v2115
      %v2117 = vpop.f32.mrf.mxu0
      %v2118 = vpop.f32.mrf.mxu0
      %v2119 = vadd.f32 0.0, %v2118
      %v2120 = vpop.f32.mrf.mxu0
      %2121 = vmatprep.mubr.bf16.mxu0 0
      %2122 = vmatmul.mubr.bf16.gmra.mxu0 %v2051
      %v2123 = vpop.f32.mrf.mxu0
      %v2124 = vadd.f32 0.0, %v2123
      %v2125 = vpop.f32.mrf.mxu0
      %v2126 = vpop.f32.mrf.mxu0
      %v2127 = vpop.f32.mrf.mxu0
      %2128 = vdwg.mxu0
      %v2129 = vmul.f32 %v2012, 0.35355338
      %v2130 = vmul.f32 %v2015, 0.35355338
      %v2131 = vmul.f32 %v2020, 0.35355338
      %v2132 = vmul.f32 %v2023, 0.35355338
      %v2133 = vmul.f32 %v2028, 0.35355338
      %v2134 = vmul.f32 %v2031, 0.35355338
      %v2135 = vmul.f32 %v2036, 0.35355338
      %v2136 = vmul.f32 %v2100, 0.35355338
      %v2137 = vmul.f32 %v2103, 0.35355338
      %v2138 = vmul.f32 %v2108, 0.35355338
      %v2139 = vmul.f32 %v2111, 0.35355338
      %v2140 = vmul.f32 %v2116, 0.35355338
      %v2141 = vmul.f32 %v2119, 0.35355338
      %v2142 = vmul.f32 %v2124, 0.35355338
      %v2143 = vadd.f32 %v2129, %v1254
      %v2144 = vadd.f32 %v2130, %v1254
      %v2145 = vadd.f32 %v2131, %v1254
      %v2146 = vadd.f32 %v2132, %v1254
      %v2147 = vadd.f32 %v2133, %v1254
      %v2148 = vadd.f32 %v2134, %v1254
      %v2149 = vadd.f32 %v2135, %v1254
      %v2150 = vadd.f32 %v2136, %v1254
      %v2151 = vadd.f32 %v2137, %v1254
      %v2152 = vadd.f32 %v2138, %v1254
      %v2153 = vadd.f32 %v2139, %v1254
      %v2154 = vadd.f32 %v2140, %v1254
      %v2155 = vadd.f32 %v2141, %v1254
      %v2156 = vadd.f32 %v2142, %v1254
      %v2157 = vsel %vm1269, %v2143, -inf
      %2158 = vmax.xlane.f32.xlu0 %v2157
      %v2159 = vpop.xlane.xlu0 %2158
      %v2160 = vsel %vm1269, %v2144, -inf
      %2161 = vmax.xlane.f32.xlu0 %v2160
      %v2162 = vpop.xlane.xlu0 %2161
      %v2163 = vsel %vm1269, %v2145, -inf
      %2164 = vmax.xlane.f32.xlu0 %v2163
      %v2165 = vpop.xlane.xlu0 %2164
      %v2166 = vsel %vm1269, %v2146, -inf
      %2167 = vmax.xlane.f32.xlu0 %v2166
      %v2168 = vpop.xlane.xlu0 %2167
      %v2169 = vsel %vm1269, %v2147, -inf
      %2170 = vmax.xlane.f32.xlu0 %v2169
      %v2171 = vpop.xlane.xlu0 %2170
      %v2172 = vsel %vm1269, %v2148, -inf
      %2173 = vmax.xlane.f32.xlu0 %v2172
      %v2174 = vpop.xlane.xlu0 %2173
      %v2175 = vsel %vm1269, %v2149, -inf
      %2176 = vmax.xlane.f32.xlu0 %v2175
      %v2177 = vpop.xlane.xlu0 %2176
      %v2178 = vsel %vm1269, %v2150, -inf
      %2179 = vmax.xlane.f32.xlu0 %v2178
      %v2180 = vpop.xlane.xlu0 %2179
      %v2181 = vsel %vm1269, %v2151, -inf
      %2182 = vmax.xlane.f32.xlu0 %v2181
      %v2183 = vpop.xlane.xlu0 %2182
      %v2184 = vsel %vm1269, %v2152, -inf
      %2185 = vmax.xlane.f32.xlu0 %v2184
      %v2186 = vpop.xlane.xlu0 %2185
      %v2187 = vsel %vm1269, %v2153, -inf
      %2188 = vmax.xlane.f32.xlu0 %v2187
      %v2189 = vpop.xlane.xlu0 %2188
      %v2190 = vsel %vm1269, %v2154, -inf
      %2191 = vmax.xlane.f32.xlu0 %v2190
      %v2192 = vpop.xlane.xlu0 %2191
      %v2193 = vsel %vm1269, %v2155, -inf
      %2194 = vmax.xlane.f32.xlu0 %v2193
      %v2195 = vpop.xlane.xlu0 %2194
      %v2196 = vsel %vm1269, %v2156, -inf
      %2197 = vmax.xlane.f32.xlu0 %v2196
      %v2198 = vpop.xlane.xlu0 %2197
      %v2199 = vsub.f32 %v2143, %v2159
      %v2200 = vsub.f32 %v2144, %v2162
      %v2201 = vsub.f32 %v2145, %v2165
      %v2202 = vsub.f32 %v2146, %v2168
      %v2203 = vsub.f32 %v2147, %v2171
      %v2204 = vsub.f32 %v2148, %v2174
      %v2205 = vsub.f32 %v2149, %v2177
      %v2206 = vsub.f32 %v2150, %v2180
      %v2207 = vsub.f32 %v2151, %v2183
      %v2208 = vsub.f32 %v2152, %v2186
      %v2209 = vsub.f32 %v2153, %v2189
      %v2210 = vsub.f32 %v2154, %v2192
      %v2211 = vsub.f32 %v2155, %v2195
      %v2212 = vsub.f32 %v2156, %v2198
      %v2213 = vmul.f32 %v2199, 1.442695
      %v2214 = vpow.pop %v2213
      %v2215 = vmul.f32 %v2200, 1.442695
      %v2216 = vpow.pop %v2215
      %v2217 = vmul.f32 %v2201, 1.442695
      %v2218 = vpow.pop %v2217
      %v2219 = vmul.f32 %v2202, 1.442695
      %v2220 = vpow.pop %v2219
      %v2221 = vmul.f32 %v2203, 1.442695
      %v2222 = vpow.pop %v2221
      %v2223 = vmul.f32 %v2204, 1.442695
      %v2224 = vpow.pop %v2223
      %v2225 = vmul.f32 %v2205, 1.442695
      %v2226 = vpow.pop %v2225
      %v2227 = vmul.f32 %v2206, 1.442695
      %v2228 = vpow.pop %v2227
      %v2229 = vmul.f32 %v2207, 1.442695
      %v2230 = vpow.pop %v2229
      %v2231 = vmul.f32 %v2208, 1.442695
      %v2232 = vpow.pop %v2231
      %v2233 = vmul.f32 %v2209, 1.442695
      %v2234 = vpow.pop %v2233
      %v2235 = vmul.f32 %v2210, 1.442695
      %v2236 = vpow.pop %v2235
      %v2237 = vmul.f32 %v2211, 1.442695
      %v2238 = vpow.pop %v2237
      %v2239 = vmul.f32 %v2212, 1.442695
      %v2240 = vpow.pop %v2239
      %v2241 = vsel %vm1269, %v2214, 0.0
      %2242 = vadd.xlane.f32.xlu0 %v2241
      %v2243 = vpop.xlane.xlu0 %2242
      %v2244 = vsel %vm1269, %v2216, 0.0
      %2245 = vadd.xlane.f32.xlu0 %v2244
      %v2246 = vpop.xlane.xlu0 %2245
      %v2247 = vsel %vm1269, %v2218, 0.0
      %2248 = vadd.xlane.f32.xlu0 %v2247
      %v2249 = vpop.xlane.xlu0 %2248
      %v2250 = vsel %vm1269, %v2220, 0.0
      %2251 = vadd.xlane.f32.xlu0 %v2250
      %v2252 = vpop.xlane.xlu0 %2251
      %v2253 = vsel %vm1269, %v2222, 0.0
      %2254 = vadd.xlane.f32.xlu0 %v2253
      %v2255 = vpop.xlane.xlu0 %2254
      %v2256 = vsel %vm1269, %v2224, 0.0
      %2257 = vadd.xlane.f32.xlu0 %v2256
      %v2258 = vpop.xlane.xlu0 %2257
      %v2259 = vsel %vm1269, %v2226, 0.0
      %2260 = vadd.xlane.f32.xlu0 %v2259
      %v2261 = vpop.xlane.xlu0 %2260
      %v2262 = vsel %vm1269, %v2228, 0.0
      %2263 = vadd.xlane.f32.xlu0 %v2262
      %v2264 = vpop.xlane.xlu0 %2263
      %v2265 = vsel %vm1269, %v2230, 0.0
      %2266 = vadd.xlane.f32.xlu0 %v2265
      %v2267 = vpop.xlane.xlu0 %2266
      %v2268 = vsel %vm1269, %v2232, 0.0
      %2269 = vadd.xlane.f32.xlu0 %v2268
      %v2270 = vpop.xlane.xlu0 %2269
      %v2271 = vsel %vm1269, %v2234, 0.0
      %2272 = vadd.xlane.f32.xlu0 %v2271
      %v2273 = vpop.xlane.xlu0 %2272
      %v2274 = vsel %vm1269, %v2236, 0.0
      %2275 = vadd.xlane.f32.xlu0 %v2274
      %v2276 = vpop.xlane.xlu0 %2275
      %v2277 = vsel %vm1269, %v2238, 0.0
      %2278 = vadd.xlane.f32.xlu0 %v2277
      %v2279 = vpop.xlane.xlu0 %2278
      %v2280 = vsel %vm1269, %v2240, 0.0
      %2281 = vadd.xlane.f32.xlu0 %v2280
      %v2282 = vpop.xlane.xlu0 %2281
      %v2283 = vrcp.pop %v2243
      %v2284 = vrcp.pop %v2246
      %v2285 = vrcp.pop %v2249
      %v2286 = vrcp.pop %v2252
      %v2287 = vrcp.pop %v2255
      %v2288 = vrcp.pop %v2258
      %v2289 = vrcp.pop %v2261
      %v2290 = vrcp.pop %v2264
      %v2291 = vrcp.pop %v2267
      %v2292 = vrcp.pop %v2270
      %v2293 = vrcp.pop %v2273
      %v2294 = vrcp.pop %v2276
      %v2295 = vrcp.pop %v2279
      %v2296 = vrcp.pop %v2282
      %v2297 = vmul.f32 %v2214, %v2283
      %v2298 = vmul.f32 %v2216, %v2284
      %v2299 = vmul.f32 %v2218, %v2285
      %v2300 = vmul.f32 %v2220, %v2286
      %v2301 = vmul.f32 %v2222, %v2287
      %v2302 = vmul.f32 %v2224, %v2288
      %v2303 = vmul.f32 %v2226, %v2289
      %v2304 = vmul.f32 %v2228, %v2290
      %v2305 = vmul.f32 %v2230, %v2291
      %v2306 = vmul.f32 %v2232, %v2292
      %v2307 = vmul.f32 %v2234, %v2293
      %v2308 = vmul.f32 %v2236, %v2294
      %v2309 = vmul.f32 %v2238, %v2295
      %v2310 = vmul.f32 %v2240, %v2296
      %v2311 = vpack.c.bf16 %v2298, %v2297
      %v2312 = vpack.c.bf16 %v2300, %v2299
      %v2313 = vpack.c.bf16 %v2302, %v2301
      %v2314 = vpack.c.bf16 %v2303, %v2303
      %v2315 = vpack.c.bf16 %v2305, %v2304
      %v2316 = vpack.c.bf16 %v2307, %v2306
      %v2317 = vpack.c.bf16 %v2309, %v2308
      %v2318 = vpack.c.bf16 %v2310, %v2310
      %v2320 = vsel %vm1269, %v2311, 0
      %v2323 = vsel %vm1269, %v2312, 0
      %v2326 = vsel %vm1269, %v2313, 0
      %v2329 = vsel %vm1269, %v2314, 0
      %v2332 = vsel %vm1444, %v1948, 0
      %2334 = vmatprep.subr.bf16.mxu0 0
      %2335 = vmatpush1.bf16.msra.mxu0 0
      %2336 = vmatprep.subr.bf16.mxu0 0
      %2337 = vmatpush1.bf16.msra.mxu0 0
      %2338 = vmatprep.subr.bf16.mxu0 0
      %2339 = vmatpush1.bf16.msra.mxu0 0
      %2340 = vmatprep.subr.bf16.mxu0 0
      %2341 = vmatpush1.bf16.msra.mxu0 0
      %2342 = vmatprep.subr.bf16.mxu0 0
      %2343 = vmatpush1.bf16.msra.mxu0 %v2332
      %2344 = vmatprep.subr.bf16.mxu0 0
      %2345 = vmatpush1.bf16.msra.mxu0 %v1947
      %2346 = vmatprep.subr.bf16.mxu0 0
      %2347 = vmatpush1.bf16.msra.mxu0 %v1946
      %2348 = vmatprep.subr.bf16.mxu0 0
      %2349 = vmatpush1.bf16.msra.mxu0 %v1945
      %2350 = vmatprep.subr.bf16.mxu0 0
      %2351 = vmatpush2.bf16.msra.mxu0 0
      %2352 = vmatprep.subr.bf16.mxu0 0
      %2353 = vmatpush2.bf16.msra.mxu0 0
      %2354 = vmatprep.subr.bf16.mxu0 0
      %2355 = vmatpush2.bf16.msra.mxu0 0
      %2356 = vmatprep.subr.bf16.mxu0 0
      %2357 = vmatpush2.bf16.msra.mxu0 0
      %2358 = vmatprep.subr.bf16.mxu0 0
      %2359 = vmatpush2.bf16.msra.mxu0 0
      %2360 = vmatprep.subr.bf16.mxu0 0
      %2361 = vmatpush2.bf16.msra.mxu0 0
      %2362 = vmatprep.subr.bf16.mxu0 0
      %2363 = vmatpush2.bf16.msra.mxu0 0
      %2364 = vmatprep.subr.bf16.mxu0 0
      %2365 = vmatpush2.bf16.msra.mxu0 0
      %2366 = vmatprep.mubr.bf16.mxu0 0
      %2367 = vmatmul.mubr.bf16.gmra.mxu0 %v2320
      %v2368 = vpop.f32.mrf.mxu0
      %v2369 = vadd.f32 0.0, %v2368
      %v2370 = vpop.f32.mrf.mxu0
      %v2371 = vpop.f32.mrf.mxu0
      %v2372 = vadd.f32 0.0, %v2371
      %v2373 = vpop.f32.mrf.mxu0
      %2374 = vmatprep.mubr.bf16.mxu0 0
      %2375 = vmatmul.mubr.bf16.gmra.mxu0 %v2323
      %v2376 = vpop.f32.mrf.mxu0
      %v2377 = vadd.f32 0.0, %v2376
      %v2378 = vpop.f32.mrf.mxu0
      %v2379 = vpop.f32.mrf.mxu0
      %v2380 = vadd.f32 0.0, %v2379
      %v2381 = vpop.f32.mrf.mxu0
      %2382 = vmatprep.mubr.bf16.mxu0 0
      %2383 = vmatmul.mubr.bf16.gmra.mxu0 %v2326
      %v2384 = vpop.f32.mrf.mxu0
      %v2385 = vadd.f32 0.0, %v2384
      %v2386 = vpop.f32.mrf.mxu0
      %v2387 = vpop.f32.mrf.mxu0
      %v2388 = vadd.f32 0.0, %v2387
      %v2389 = vpop.f32.mrf.mxu0
      %2390 = vmatprep.mubr.bf16.mxu0 0
      %2391 = vmatmul.mubr.bf16.gmra.mxu0 %v2329
      %v2392 = vpop.f32.mrf.mxu0
      %v2393 = vadd.f32 0.0, %v2392
      %v2394 = vpop.f32.mrf.mxu0
      %v2395 = vpop.f32.mrf.mxu0
      %v2396 = vpop.f32.mrf.mxu0
      %2397 = vdwg.mxu0
      %v2399 = vsel %vm1269, %v2315, 0
      %v2402 = vsel %vm1269, %v2316, 0
      %v2405 = vsel %vm1269, %v2317, 0
      %v2408 = vsel %vm1269, %v2318, 0
      %v2411 = vsel %vm1444, %v1952, 0
      %2413 = vmatprep.subr.bf16.mxu0 0
      %2414 = vmatpush1.bf16.msra.mxu0 0
      %2415 = vmatprep.subr.bf16.mxu0 0
      %2416 = vmatpush1.bf16.msra.mxu0 0
      %2417 = vmatprep.subr.bf16.mxu0 0
      %2418 = vmatpush1.bf16.msra.mxu0 0
      %2419 = vmatprep.subr.bf16.mxu0 0
      %2420 = vmatpush1.bf16.msra.mxu0 0
      %2421 = vmatprep.subr.bf16.mxu0 0
      %2422 = vmatpush1.bf16.msra.mxu0 %v2411
      %2423 = vmatprep.subr.bf16.mxu0 0
      %2424 = vmatpush1.bf16.msra.mxu0 %v1951
      %2425 = vmatprep.subr.bf16.mxu0 0
      %2426 = vmatpush1.bf16.msra.mxu0 %v1950
      %2427 = vmatprep.subr.bf16.mxu0 0
      %2428 = vmatpush1.bf16.msra.mxu0 %v1949
      %2429 = vmatprep.subr.bf16.mxu0 0
      %2430 = vmatpush2.bf16.msra.mxu0 0
      %2431 = vmatprep.subr.bf16.mxu0 0
      %2432 = vmatpush2.bf16.msra.mxu0 0
      %2433 = vmatprep.subr.bf16.mxu0 0
      %2434 = vmatpush2.bf16.msra.mxu0 0
      %2435 = vmatprep.subr.bf16.mxu0 0
      %2436 = vmatpush2.bf16.msra.mxu0 0
      %2437 = vmatprep.subr.bf16.mxu0 0
      %2438 = vmatpush2.bf16.msra.mxu0 0
      %2439 = vmatprep.subr.bf16.mxu0 0
      %2440 = vmatpush2.bf16.msra.mxu0 0
      %2441 = vmatprep.subr.bf16.mxu0 0
      %2442 = vmatpush2.bf16.msra.mxu0 0
      %2443 = vmatprep.subr.bf16.mxu0 0
      %2444 = vmatpush2.bf16.msra.mxu0 0
      %2445 = vmatprep.mubr.bf16.mxu0 0
      %2446 = vmatmul.mubr.bf16.gmra.mxu0 %v2399
      %v2447 = vpop.f32.mrf.mxu0
      %v2448 = vadd.f32 0.0, %v2447
      %v2449 = vpop.f32.mrf.mxu0
      %v2450 = vpop.f32.mrf.mxu0
      %v2451 = vadd.f32 0.0, %v2450
      %v2452 = vpop.f32.mrf.mxu0
      %2453 = vmatprep.mubr.bf16.mxu0 0
      %2454 = vmatmul.mubr.bf16.gmra.mxu0 %v2402
      %v2455 = vpop.f32.mrf.mxu0
      %v2456 = vadd.f32 0.0, %v2455
      %v2457 = vpop.f32.mrf.mxu0
      %v2458 = vpop.f32.mrf.mxu0
      %v2459 = vadd.f32 0.0, %v2458
      %v2460 = vpop.f32.mrf.mxu0
      %2461 = vmatprep.mubr.bf16.mxu0 0
      %2462 = vmatmul.mubr.bf16.gmra.mxu0 %v2405
      %v2463 = vpop.f32.mrf.mxu0
      %v2464 = vadd.f32 0.0, %v2463
      %v2465 = vpop.f32.mrf.mxu0
      %v2466 = vpop.f32.mrf.mxu0
      %v2467 = vadd.f32 0.0, %v2466
      %v2468 = vpop.f32.mrf.mxu0
      %2469 = vmatprep.mubr.bf16.mxu0 0
      %2470 = vmatmul.mubr.bf16.gmra.mxu0 %v2408
      %v2471 = vpop.f32.mrf.mxu0
      %v2472 = vadd.f32 0.0, %v2471
      %v2473 = vpop.f32.mrf.mxu0
      %v2474 = vpop.f32.mrf.mxu0
      %v2475 = vpop.f32.mrf.mxu0
      %2476 = vdwg.mxu0
      %v2477 = vpack.c.bf16 %v2372, %v2369
      %v2478 = vpack.c.bf16 %v2380, %v2377
      %v2479 = vpack.c.bf16 %v2388, %v2385
      %v2480 = vpack.c.bf16 %v2448, %v2393
      %v2481 = vpack.c.bf16 %v2456, %v2451
      %v2482 = vpack.c.bf16 %v2464, %v2459
      %v2483 = vpack.c.bf16 %v2472, %v2467
      %s2484 = scalar_lea.vmem %s395, 4
      %v2485 = vld [vmem:[%s2484] sm:$0xf]
      %v2487 = vsel %vm1060, %v2477, 0
      %v2490 = vsel %vm1060, %v2478, 0
      %v2493 = vsel %vm1060, %v2479, 0
      %v2496 = vsel %vm1060, %v2480, 0
      %v2499 = vsel %vm1060, %v2481, 0
      %v2502 = vsel %vm1060, %v2482, 0
      %v2505 = vsel %vm1060, %v2483, 0
      %v2508 = vsel %vm1444, %v2485, 0
      %2510 = vmatprep.subr.bf16.mxu0 0
      %2511 = vmatpush1.bf16.msra.mxu0 0
      %2512 = vmatprep.subr.bf16.mxu0 0
      %2513 = vmatpush1.bf16.msra.mxu0 0
      %2514 = vmatprep.subr.bf16.mxu0 0
      %2515 = vmatpush1.bf16.msra.mxu0 0
      %2516 = vmatprep.subr.bf16.mxu0 0
      %2517 = vmatpush1.bf16.msra.mxu0 0
      %2518 = vmatprep.subr.bf16.mxu0 0
      %2519 = vmatpush1.bf16.msra.mxu0 0
      %2520 = vmatprep.subr.bf16.mxu0 0
      %2521 = vmatpush1.bf16.msra.mxu0 0
      %2522 = vmatprep.subr.bf16.mxu0 0
      %2523 = vmatpush1.bf16.msra.mxu0 0
      %2524 = vmatprep.subr.bf16.mxu0 0
      %2525 = vmatpush1.bf16.msra.mxu0 %v2508
      %2526 = vmatprep.subr.bf16.mxu0 0
      %2527 = vmatpush2.bf16.msra.mxu0 0
      %2528 = vmatprep.subr.bf16.mxu0 0
      %2529 = vmatpush2.bf16.msra.mxu0 0
      %2530 = vmatprep.subr.bf16.mxu0 0
      %2531 = vmatpush2.bf16.msra.mxu0 0
      %2532 = vmatprep.subr.bf16.mxu0 0
      %2533 = vmatpush2.bf16.msra.mxu0 0
      %2534 = vmatprep.subr.bf16.mxu0 0
      %2535 = vmatpush2.bf16.msra.mxu0 0
      %2536 = vmatprep.subr.bf16.mxu0 0
      %2537 = vmatpush2.bf16.msra.mxu0 0
      %2538 = vmatprep.subr.bf16.mxu0 0
      %2539 = vmatpush2.bf16.msra.mxu0 0
      %2540 = vmatprep.subr.bf16.mxu0 0
      %2541 = vmatpush2.bf16.msra.mxu0 0
      %2542 = vmatprep.mubr.bf16.mxu0 0
      %2543 = vmatmul.mubr.bf16.gmra.mxu0 %v2487
      %v2544 = vpop.f32.mrf.mxu0
      %v2545 = vadd.f32 0.0, %v2544
      %v2546 = vpop.f32.mrf.mxu0
      %v2547 = vpop.f32.mrf.mxu0
      %v2548 = vadd.f32 0.0, %v2547
      %v2549 = vpop.f32.mrf.mxu0
      %2550 = vmatprep.mubr.bf16.mxu0 0
      %2551 = vmatmul.mubr.bf16.gmra.mxu0 %v2490
      %v2552 = vpop.f32.mrf.mxu0
      %v2553 = vadd.f32 0.0, %v2552
      %v2554 = vpop.f32.mrf.mxu0
      %v2555 = vpop.f32.mrf.mxu0
      %v2556 = vadd.f32 0.0, %v2555
      %v2557 = vpop.f32.mrf.mxu0
      %2558 = vmatprep.mubr.bf16.mxu0 0
      %2559 = vmatmul.mubr.bf16.gmra.mxu0 %v2493
      %v2560 = vpop.f32.mrf.mxu0
      %v2561 = vadd.f32 0.0, %v2560
      %v2562 = vpop.f32.mrf.mxu0
      %v2563 = vpop.f32.mrf.mxu0
      %v2564 = vadd.f32 0.0, %v2563
      %v2565 = vpop.f32.mrf.mxu0
      %2566 = vmatprep.mubr.bf16.mxu0 0
      %2567 = vmatmul.mubr.bf16.gmra.mxu0 %v2496
      %v2568 = vpop.f32.mrf.mxu0
      %v2569 = vadd.f32 0.0, %v2568
      %v2570 = vpop.f32.mrf.mxu0
      %v2571 = vpop.f32.mrf.mxu0
      %v2572 = vadd.f32 0.0, %v2571
      %v2573 = vpop.f32.mrf.mxu0
      %2574 = vmatprep.mubr.bf16.mxu0 0
      %2575 = vmatmul.mubr.bf16.gmra.mxu0 %v2499
      %v2576 = vpop.f32.mrf.mxu0
      %v2577 = vadd.f32 0.0, %v2576
      %v2578 = vpop.f32.mrf.mxu0
      %v2579 = vpop.f32.mrf.mxu0
      %v2580 = vadd.f32 0.0, %v2579
      %v2581 = vpop.f32.mrf.mxu0
      %2582 = vmatprep.mubr.bf16.mxu0 0
      %2583 = vmatmul.mubr.bf16.gmra.mxu0 %v2502
      %v2584 = vpop.f32.mrf.mxu0
      %v2585 = vadd.f32 0.0, %v2584
      %v2586 = vpop.f32.mrf.mxu0
      %v2587 = vpop.f32.mrf.mxu0
      %v2588 = vadd.f32 0.0, %v2587
      %v2589 = vpop.f32.mrf.mxu0
      %2590 = vmatprep.mubr.bf16.mxu0 0
      %2591 = vmatmul.mubr.bf16.gmra.mxu0 %v2505
      %v2592 = vpop.f32.mrf.mxu0
      %v2593 = vadd.f32 0.0, %v2592
      %v2594 = vpop.f32.mrf.mxu0
      %v2595 = vpop.f32.mrf.mxu0
      %v2596 = vadd.f32 0.0, %v2595
      %v2597 = vpop.f32.mrf.mxu0
      %2598 = vdwg.mxu0
      %v2600 = vsel %vm1060, %v1591, 0
      %v2603 = vsel %vm1060, %v1592, 0
      %v2606 = vsel %vm1060, %v1593, 0
      %v2609 = vsel %vm1060, %v1594, 0
      %v2612 = vsel %vm1060, %v1595, 0
      %v2615 = vsel %vm1060, %v1596, 0
      %v2618 = vsel %vm1060, %v1597, 0
      %v2621 = vsel %vm1444, %v1598, 0
      %2623 = vmatprep.subr.bf16.mxu0 0
      %2624 = vmatpush1.bf16.msra.mxu0 0
      %2625 = vmatprep.subr.bf16.mxu0 0
      %2626 = vmatpush1.bf16.msra.mxu0 0
      %2627 = vmatprep.subr.bf16.mxu0 0
      %2628 = vmatpush1.bf16.msra.mxu0 0
      %2629 = vmatprep.subr.bf16.mxu0 0
      %2630 = vmatpush1.bf16.msra.mxu0 0
      %2631 = vmatprep.subr.bf16.mxu0 0
      %2632 = vmatpush1.bf16.msra.mxu0 0
      %2633 = vmatprep.subr.bf16.mxu0 0
      %2634 = vmatpush1.bf16.msra.mxu0 0
      %2635 = vmatprep.subr.bf16.mxu0 0
      %2636 = vmatpush1.bf16.msra.mxu0 0
      %2637 = vmatprep.subr.bf16.mxu0 0
      %2638 = vmatpush1.bf16.msra.mxu0 %v2621
      %2639 = vmatprep.subr.bf16.mxu0 0
      %2640 = vmatpush2.bf16.msra.mxu0 0
      %2641 = vmatprep.subr.bf16.mxu0 0
      %2642 = vmatpush2.bf16.msra.mxu0 0
      %2643 = vmatprep.subr.bf16.mxu0 0
      %2644 = vmatpush2.bf16.msra.mxu0 0
      %2645 = vmatprep.subr.bf16.mxu0 0
      %2646 = vmatpush2.bf16.msra.mxu0 0
      %2647 = vmatprep.subr.bf16.mxu0 0
      %2648 = vmatpush2.bf16.msra.mxu0 0
      %2649 = vmatprep.subr.bf16.mxu0 0
      %2650 = vmatpush2.bf16.msra.mxu0 0
      %2651 = vmatprep.subr.bf16.mxu0 0
      %2652 = vmatpush2.bf16.msra.mxu0 0
      %2653 = vmatprep.subr.bf16.mxu0 0
      %2654 = vmatpush2.bf16.msra.mxu0 0
      %2655 = vmatprep.mubr.bf16.mxu0 0
      %2656 = vmatmul.mubr.bf16.gmra.mxu0 %v2600
      %v2657 = vpop.f32.mrf.mxu0
      %v2658 = vadd.f32 %v2545, %v2657
      %v2659 = vpop.f32.mrf.mxu0
      %v2660 = vpop.f32.mrf.mxu0
      %v2661 = vadd.f32 %v2548, %v2660
      %v2662 = vpop.f32.mrf.mxu0
      %2663 = vmatprep.mubr.bf16.mxu0 0
      %2664 = vmatmul.mubr.bf16.gmra.mxu0 %v2603
      %v2665 = vpop.f32.mrf.mxu0
      %v2666 = vadd.f32 %v2553, %v2665
      %v2667 = vpop.f32.mrf.mxu0
      %v2668 = vpop.f32.mrf.mxu0
      %v2669 = vadd.f32 %v2556, %v2668
      %v2670 = vpop.f32.mrf.mxu0
      %2671 = vmatprep.mubr.bf16.mxu0 0
      %2672 = vmatmul.mubr.bf16.gmra.mxu0 %v2606
      %v2673 = vpop.f32.mrf.mxu0
      %v2674 = vadd.f32 %v2561, %v2673
      %v2675 = vpop.f32.mrf.mxu0
      %v2676 = vpop.f32.mrf.mxu0
      %v2677 = vadd.f32 %v2564, %v2676
      %v2678 = vpop.f32.mrf.mxu0
      %2679 = vmatprep.mubr.bf16.mxu0 0
      %2680 = vmatmul.mubr.bf16.gmra.mxu0 %v2609
      %v2681 = vpop.f32.mrf.mxu0
      %v2682 = vadd.f32 %v2569, %v2681
      %v2683 = vpop.f32.mrf.mxu0
      %v2684 = vpop.f32.mrf.mxu0
      %v2685 = vadd.f32 %v2572, %v2684
      %v2686 = vpop.f32.mrf.mxu0
      %2687 = vmatprep.mubr.bf16.mxu0 0
      %2688 = vmatmul.mubr.bf16.gmra.mxu0 %v2612
      %v2689 = vpop.f32.mrf.mxu0
      %v2690 = vadd.f32 %v2577, %v2689
      %v2691 = vpop.f32.mrf.mxu0
      %v2692 = vpop.f32.mrf.mxu0
      %v2693 = vadd.f32 %v2580, %v2692
      %v2694 = vpop.f32.mrf.mxu0
      %2695 = vmatprep.mubr.bf16.mxu0 0
      %2696 = vmatmul.mubr.bf16.gmra.mxu0 %v2615
      %v2697 = vpop.f32.mrf.mxu0
      %v2698 = vadd.f32 %v2585, %v2697
      %v2699 = vpop.f32.mrf.mxu0
      %v2700 = vpop.f32.mrf.mxu0
      %v2701 = vadd.f32 %v2588, %v2700
      %v2702 = vpop.f32.mrf.mxu0
      %2703 = vmatprep.mubr.bf16.mxu0 0
      %2704 = vmatmul.mubr.bf16.gmra.mxu0 %v2618
      %v2705 = vpop.f32.mrf.mxu0
      %v2706 = vadd.f32 %v2593, %v2705
      %v2707 = vpop.f32.mrf.mxu0
      %v2708 = vpop.f32.mrf.mxu0
      %v2709 = vadd.f32 %v2596, %v2708
      %v2710 = vpop.f32.mrf.mxu0
      %2711 = vdwg.mxu0
      %s2712 = scalar_lea.vmem %s380, 32
      %v2713 = vld [vmem:[%s2712] sm:$0xf]
      %v2714 = vld [vmem:[%s2712 + $0x4] sm:$0xf]
      %v2715 = vld [vmem:[%s2712 + $0x8] sm:$0xf]
      %v2716 = vld [vmem:[%s2712 + $0xc] sm:$0xf]
      %v2721 = vunpack.c.l.b16 %v2713
      %v2722 = vunpack.c.l.b16 %v2714
      %v2723 = vunpack.c.l.b16 %v2715
      %v2724 = vunpack.c.l.b16 %v2716
      %v2725 = vpack.c.b16 %v2722, %v2721
      %v2726 = vpack.c.b16 %v2724, %v2723
      %2729 = vrot.lane.b32.xlu0 %v695, 112
      %v2730 = vpop.permute.xlu0 %2729
      %2732 = vmatprep.subr.bf16.mxu0 0
      %2733 = vmatpush1.bf16.msra.mxu0 0
      %2734 = vmatprep.subr.bf16.mxu0 0
      %2735 = vmatpush1.bf16.msra.mxu0 0
      %2736 = vmatprep.subr.bf16.mxu0 0
      %2737 = vmatpush1.bf16.msra.mxu0 0
      %2738 = vmatprep.subr.bf16.mxu0 0
      %2739 = vmatpush1.bf16.msra.mxu0 0
      %2740 = vmatprep.subr.bf16.mxu0 0
      %2741 = vmatpush1.bf16.msra.mxu0 0
      %2742 = vmatprep.subr.bf16.mxu0 0
      %2743 = vmatpush1.bf16.msra.mxu0 0
      %2744 = vmatprep.subr.bf16.mxu0 0
      %2745 = vmatpush1.bf16.msra.mxu0 %v2726
      %2746 = vmatprep.subr.bf16.mxu0 0
      %2747 = vmatpush1.bf16.msra.mxu0 %v2725
      %2748 = vmatprep.subr.bf16.mxu0 0
      %2749 = vmatpush2.bf16.msra.mxu0 0
      %2750 = vmatprep.subr.bf16.mxu0 0
      %2751 = vmatpush2.bf16.msra.mxu0 0
      %2752 = vmatprep.subr.bf16.mxu0 0
      %2753 = vmatpush2.bf16.msra.mxu0 0
      %2754 = vmatprep.subr.bf16.mxu0 0
      %2755 = vmatpush2.bf16.msra.mxu0 0
      %2756 = vmatprep.subr.bf16.mxu0 0
      %2757 = vmatpush2.bf16.msra.mxu0 0
      %2758 = vmatprep.subr.bf16.mxu0 0
      %2759 = vmatpush2.bf16.msra.mxu0 0
      %2760 = vmatprep.subr.bf16.mxu0 0
      %2761 = vmatpush2.bf16.msra.mxu0 0
      %2762 = vmatprep.subr.bf16.mxu0 0
      %2763 = vmatpush2.bf16.msra.mxu0 0
      %2764 = vmatprep.mubr.bf16.mxu0 0
      %2765 = vmatmul.mubr.bf16.gmra.mxu0 %v709
      %v2766 = vpop.f32.mrf.mxu0
      %v2767 = vadd.f32 %v2730, %v2766
      %v2768 = vpop.f32.mrf.mxu0
      %v2769 = vpop.f32.mrf.mxu0
      %v2770 = vadd.f32 %v2730, %v2769
      %v2771 = vpop.f32.mrf.mxu0
      %2772 = vmatprep.mubr.bf16.mxu0 0
      %2773 = vmatmul.mubr.bf16.gmra.mxu0 %v712
      %v2774 = vpop.f32.mrf.mxu0
      %v2775 = vadd.f32 %v2730, %v2774
      %v2776 = vpop.f32.mrf.mxu0
      %v2777 = vpop.f32.mrf.mxu0
      %v2778 = vadd.f32 %v2730, %v2777
      %v2779 = vpop.f32.mrf.mxu0
      %2780 = vmatprep.mubr.bf16.mxu0 0
      %2781 = vmatmul.mubr.bf16.gmra.mxu0 %v715
      %v2782 = vpop.f32.mrf.mxu0
      %v2783 = vadd.f32 %v2730, %v2782
      %v2784 = vpop.f32.mrf.mxu0
      %v2785 = vpop.f32.mrf.mxu0
      %v2786 = vadd.f32 %v2730, %v2785
      %v2787 = vpop.f32.mrf.mxu0
      %2788 = vmatprep.mubr.bf16.mxu0 0
      %2789 = vmatmul.mubr.bf16.gmra.mxu0 %v718
      %v2790 = vpop.f32.mrf.mxu0
      %v2791 = vadd.f32 %v2730, %v2790
      %v2792 = vpop.f32.mrf.mxu0
      %v2793 = vpop.f32.mrf.mxu0
      %v2794 = vadd.f32 %v2730, %v2793
      %v2795 = vpop.f32.mrf.mxu0
      %2796 = vmatprep.mubr.bf16.mxu0 0
      %2797 = vmatmul.mubr.bf16.gmra.mxu0 %v721
      %v2798 = vpop.f32.mrf.mxu0
      %v2799 = vadd.f32 %v2730, %v2798
      %v2800 = vpop.f32.mrf.mxu0
      %v2801 = vpop.f32.mrf.mxu0
      %v2802 = vadd.f32 %v2730, %v2801
      %v2803 = vpop.f32.mrf.mxu0
      %2804 = vmatprep.mubr.bf16.mxu0 0
      %2805 = vmatmul.mubr.bf16.gmra.mxu0 %v724
      %v2806 = vpop.f32.mrf.mxu0
      %v2807 = vadd.f32 %v2730, %v2806
      %v2808 = vpop.f32.mrf.mxu0
      %v2809 = vpop.f32.mrf.mxu0
      %v2810 = vadd.f32 %v2730, %v2809
      %v2811 = vpop.f32.mrf.mxu0
      %2812 = vmatprep.mubr.bf16.mxu0 0
      %2813 = vmatmul.mubr.bf16.gmra.mxu0 %v727
      %v2814 = vpop.f32.mrf.mxu0
      %v2815 = vadd.f32 %v2730, %v2814
      %v2816 = vpop.f32.mrf.mxu0
      %v2817 = vpop.f32.mrf.mxu0
      %v2818 = vadd.f32 %v2730, %v2817
      %v2819 = vpop.f32.mrf.mxu0
      %2820 = vdwg.mxu0
      %s2821 = scalar_lea.vmem %s385, 32
      %v2822 = vld [vmem:[%s2821] sm:$0xf]
      %v2823 = vld [vmem:[%s2821 + $0x4] sm:$0xf]
      %v2824 = vld [vmem:[%s2821 + $0x8] sm:$0xf]
      %v2825 = vld [vmem:[%s2821 + $0xc] sm:$0xf]
      %v2830 = vunpack.c.l.b16 %v2822
      %v2831 = vunpack.c.l.b16 %v2823
      %v2832 = vunpack.c.l.b16 %v2824
      %v2833 = vunpack.c.l.b16 %v2825
      %v2834 = vpack.c.b16 %v2831, %v2830
      %v2835 = vpack.c.b16 %v2833, %v2832
      %2838 = vrot.lane.b32.xlu0 %v825, 112
      %v2839 = vpop.permute.xlu0 %2838
      %2841 = vmatprep.subr.bf16.mxu0 0
      %2842 = vmatpush1.bf16.msra.mxu0 0
      %2843 = vmatprep.subr.bf16.mxu0 0
      %2844 = vmatpush1.bf16.msra.mxu0 0
      %2845 = vmatprep.subr.bf16.mxu0 0
      %2846 = vmatpush1.bf16.msra.mxu0 0
      %2847 = vmatprep.subr.bf16.mxu0 0
      %2848 = vmatpush1.bf16.msra.mxu0 0
      %2849 = vmatprep.subr.bf16.mxu0 0
      %2850 = vmatpush1.bf16.msra.mxu0 0
      %2851 = vmatprep.subr.bf16.mxu0 0
      %2852 = vmatpush1.bf16.msra.mxu0 0
      %2853 = vmatprep.subr.bf16.mxu0 0
      %2854 = vmatpush1.bf16.msra.mxu0 %v2835
      %2855 = vmatprep.subr.bf16.mxu0 0
      %2856 = vmatpush1.bf16.msra.mxu0 %v2834
      %2857 = vmatprep.subr.bf16.mxu0 0
      %2858 = vmatpush2.bf16.msra.mxu0 0
      %2859 = vmatprep.subr.bf16.mxu0 0
      %2860 = vmatpush2.bf16.msra.mxu0 0
      %2861 = vmatprep.subr.bf16.mxu0 0
      %2862 = vmatpush2.bf16.msra.mxu0 0
      %2863 = vmatprep.subr.bf16.mxu0 0
      %2864 = vmatpush2.bf16.msra.mxu0 0
      %2865 = vmatprep.subr.bf16.mxu0 0
      %2866 = vmatpush2.bf16.msra.mxu0 0
      %2867 = vmatprep.subr.bf16.mxu0 0
      %2868 = vmatpush2.bf16.msra.mxu0 0
      %2869 = vmatprep.subr.bf16.mxu0 0
      %2870 = vmatpush2.bf16.msra.mxu0 0
      %2871 = vmatprep.subr.bf16.mxu0 0
      %2872 = vmatpush2.bf16.msra.mxu0 0
      %2873 = vmatprep.mubr.bf16.mxu0 0
      %2874 = vmatmul.mubr.bf16.gmra.mxu0 %v709
      %v2875 = vpop.f32.mrf.mxu0
      %v2876 = vadd.f32 %v2839, %v2875
      %v2877 = vpop.f32.mrf.mxu0
      %v2878 = vpop.f32.mrf.mxu0
      %v2879 = vadd.f32 %v2839, %v2878
      %v2880 = vpop.f32.mrf.mxu0
      %2881 = vmatprep.mubr.bf16.mxu0 0
      %2882 = vmatmul.mubr.bf16.gmra.mxu0 %v712
      %v2883 = vpop.f32.mrf.mxu0
      %v2884 = vadd.f32 %v2839, %v2883
      %v2885 = vpop.f32.mrf.mxu0
      %v2886 = vpop.f32.mrf.mxu0
      %v2887 = vadd.f32 %v2839, %v2886
      %v2888 = vpop.f32.mrf.mxu0
      %2889 = vmatprep.mubr.bf16.mxu0 0
      %2890 = vmatmul.mubr.bf16.gmra.mxu0 %v715
      %v2891 = vpop.f32.mrf.mxu0
      %v2892 = vadd.f32 %v2839, %v2891
      %v2893 = vpop.f32.mrf.mxu0
      %v2894 = vpop.f32.mrf.mxu0
      %v2895 = vadd.f32 %v2839, %v2894
      %v2896 = vpop.f32.mrf.mxu0
      %2897 = vmatprep.mubr.bf16.mxu0 0
      %2898 = vmatmul.mubr.bf16.gmra.mxu0 %v718
      %v2899 = vpop.f32.mrf.mxu0
      %v2900 = vadd.f32 %v2839, %v2899
      %v2901 = vpop.f32.mrf.mxu0
      %v2902 = vpop.f32.mrf.mxu0
      %v2903 = vadd.f32 %v2839, %v2902
      %v2904 = vpop.f32.mrf.mxu0
      %2905 = vmatprep.mubr.bf16.mxu0 0
      %2906 = vmatmul.mubr.bf16.gmra.mxu0 %v721
      %v2907 = vpop.f32.mrf.mxu0
      %v2908 = vadd.f32 %v2839, %v2907
      %v2909 = vpop.f32.mrf.mxu0
      %v2910 = vpop.f32.mrf.mxu0
      %v2911 = vadd.f32 %v2839, %v2910
      %v2912 = vpop.f32.mrf.mxu0
      %2913 = vmatprep.mubr.bf16.mxu0 0
      %2914 = vmatmul.mubr.bf16.gmra.mxu0 %v724
      %v2915 = vpop.f32.mrf.mxu0
      %v2916 = vadd.f32 %v2839, %v2915
      %v2917 = vpop.f32.mrf.mxu0
      %v2918 = vpop.f32.mrf.mxu0
      %v2919 = vadd.f32 %v2839, %v2918
      %v2920 = vpop.f32.mrf.mxu0
      %2921 = vmatprep.mubr.bf16.mxu0 0
      %2922 = vmatmul.mubr.bf16.gmra.mxu0 %v727
      %v2923 = vpop.f32.mrf.mxu0
      %v2924 = vadd.f32 %v2839, %v2923
      %v2925 = vpop.f32.mrf.mxu0
      %v2926 = vpop.f32.mrf.mxu0
      %v2927 = vadd.f32 %v2839, %v2926
      %v2928 = vpop.f32.mrf.mxu0
      %2929 = vdwg.mxu0
      %s2930 = scalar_lea.vmem %s390, 32
      %v2931 = vld [vmem:[%s2930] sm:$0xf]
      %v2932 = vld [vmem:[%s2930 + $0x4] sm:$0xf]
      %v2933 = vld [vmem:[%s2930 + $0x8] sm:$0xf]
      %v2934 = vld [vmem:[%s2930 + $0xc] sm:$0xf]
      %v2939 = vunpack.c.l.b16 %v2931
      %v2940 = vunpack.c.l.b16 %v2932
      %v2941 = vunpack.c.l.b16 %v2933
      %v2942 = vunpack.c.l.b16 %v2934
      %v2943 = vpack.c.b16 %v2940, %v2939
      %v2944 = vpack.c.b16 %v2942, %v2941
      %2947 = vrot.lane.b32.xlu0 %v934, 112
      %v2948 = vpop.permute.xlu0 %2947
      %2950 = vmatprep.subr.bf16.mxu0 0
      %2951 = vmatpush1.bf16.msra.mxu0 0
      %2952 = vmatprep.subr.bf16.mxu0 0
      %2953 = vmatpush1.bf16.msra.mxu0 0
      %2954 = vmatprep.subr.bf16.mxu0 0
      %2955 = vmatpush1.bf16.msra.mxu0 0
      %2956 = vmatprep.subr.bf16.mxu0 0
      %2957 = vmatpush1.bf16.msra.mxu0 0
      %2958 = vmatprep.subr.bf16.mxu0 0
      %2959 = vmatpush1.bf16.msra.mxu0 0
      %2960 = vmatprep.subr.bf16.mxu0 0
      %2961 = vmatpush1.bf16.msra.mxu0 0
      %2962 = vmatprep.subr.bf16.mxu0 0
      %2963 = vmatpush1.bf16.msra.mxu0 %v2944
      %2964 = vmatprep.subr.bf16.mxu0 0
      %2965 = vmatpush1.bf16.msra.mxu0 %v2943
      %2966 = vmatprep.subr.bf16.mxu0 0
      %2967 = vmatpush2.bf16.msra.mxu0 0
      %2968 = vmatprep.subr.bf16.mxu0 0
      %2969 = vmatpush2.bf16.msra.mxu0 0
      %2970 = vmatprep.subr.bf16.mxu0 0
      %2971 = vmatpush2.bf16.msra.mxu0 0
      %2972 = vmatprep.subr.bf16.mxu0 0
      %2973 = vmatpush2.bf16.msra.mxu0 0
      %2974 = vmatprep.subr.bf16.mxu0 0
      %2975 = vmatpush2.bf16.msra.mxu0 0
      %2976 = vmatprep.subr.bf16.mxu0 0
      %2977 = vmatpush2.bf16.msra.mxu0 0
      %2978 = vmatprep.subr.bf16.mxu0 0
      %2979 = vmatpush2.bf16.msra.mxu0 0
      %2980 = vmatprep.subr.bf16.mxu0 0
      %2981 = vmatpush2.bf16.msra.mxu0 0
      %2982 = vmatprep.mubr.bf16.mxu0 0
      %2983 = vmatmul.mubr.bf16.gmra.mxu0 %v709
      %v2984 = vpop.f32.mrf.mxu0
      %v2985 = vadd.f32 %v2948, %v2984
      %v2986 = vpop.f32.mrf.mxu0
      %v2987 = vpop.f32.mrf.mxu0
      %v2988 = vadd.f32 %v2948, %v2987
      %v2989 = vpop.f32.mrf.mxu0
      %2990 = vmatprep.mubr.bf16.mxu0 0
      %2991 = vmatmul.mubr.bf16.gmra.mxu0 %v712
      %v2992 = vpop.f32.mrf.mxu0
      %v2993 = vadd.f32 %v2948, %v2992
      %v2994 = vpop.f32.mrf.mxu0
      %v2995 = vpop.f32.mrf.mxu0
      %v2996 = vadd.f32 %v2948, %v2995
      %v2997 = vpop.f32.mrf.mxu0
      %2998 = vmatprep.mubr.bf16.mxu0 0
      %2999 = vmatmul.mubr.bf16.gmra.mxu0 %v715
      %v3000 = vpop.f32.mrf.mxu0
      %v3001 = vadd.f32 %v2948, %v3000
      %v3002 = vpop.f32.mrf.mxu0
      %v3003 = vpop.f32.mrf.mxu0
      %v3004 = vadd.f32 %v2948, %v3003
      %v3005 = vpop.f32.mrf.mxu0
      %3006 = vmatprep.mubr.bf16.mxu0 0
      %3007 = vmatmul.mubr.bf16.gmra.mxu0 %v718
      %v3008 = vpop.f32.mrf.mxu0
      %v3009 = vadd.f32 %v2948, %v3008
      %v3010 = vpop.f32.mrf.mxu0
      %v3011 = vpop.f32.mrf.mxu0
      %v3012 = vadd.f32 %v2948, %v3011
      %v3013 = vpop.f32.mrf.mxu0
      %3014 = vmatprep.mubr.bf16.mxu0 0
      %3015 = vmatmul.mubr.bf16.gmra.mxu0 %v721
      %v3016 = vpop.f32.mrf.mxu0
      %v3017 = vadd.f32 %v2948, %v3016
      %v3018 = vpop.f32.mrf.mxu0
      %v3019 = vpop.f32.mrf.mxu0
      %v3020 = vadd.f32 %v2948, %v3019
      %v3021 = vpop.f32.mrf.mxu0
      %3022 = vmatprep.mubr.bf16.mxu0 0
      %3023 = vmatmul.mubr.bf16.gmra.mxu0 %v724
      %v3024 = vpop.f32.mrf.mxu0
      %v3025 = vadd.f32 %v2948, %v3024
      %v3026 = vpop.f32.mrf.mxu0
      %v3027 = vpop.f32.mrf.mxu0
      %v3028 = vadd.f32 %v2948, %v3027
      %v3029 = vpop.f32.mrf.mxu0
      %3030 = vmatprep.mubr.bf16.mxu0 0
      %3031 = vmatmul.mubr.bf16.gmra.mxu0 %v727
      %v3032 = vpop.f32.mrf.mxu0
      %v3033 = vadd.f32 %v2948, %v3032
      %v3034 = vpop.f32.mrf.mxu0
      %v3035 = vpop.f32.mrf.mxu0
      %v3036 = vadd.f32 %v2948, %v3035
      %v3037 = vpop.f32.mrf.mxu0
      %3038 = vdwg.mxu0
      %v3039 = vpack.c.bf16 %v2770, %v2767
      %v3040 = vpack.c.bf16 %v2778, %v2775
      %v3041 = vpack.c.bf16 %v2786, %v2783
      %v3042 = vpack.c.bf16 %v2791, %v2791
      %v3043 = vpack.c.bf16 %v2799, %v2794
      %v3044 = vpack.c.bf16 %v2807, %v2802
      %v3045 = vpack.c.bf16 %v2815, %v2810
      %v3046 = vpack.c.bf16 %v2818, %v2818
      %v3047 = vpack.c.bf16 %v2879, %v2876
      %v3048 = vpack.c.bf16 %v2887, %v2884
      %v3049 = vpack.c.bf16 %v2895, %v2892
      %v3050 = vpack.c.bf16 %v2900, %v2900
      %v3051 = vpack.c.bf16 %v2908, %v2903
      %v3052 = vpack.c.bf16 %v2916, %v2911
      %v3053 = vpack.c.bf16 %v2924, %v2919
      %v3054 = vpack.c.bf16 %v2927, %v2927
      %v3055 = vpack.c.bf16 %v2988, %v2985
      %v3056 = vpack.c.bf16 %v2996, %v2993
      %v3057 = vpack.c.bf16 %v3004, %v3001
      %v3058 = vpack.c.bf16 %v3009, %v3009
      %v3059 = vpack.c.bf16 %v3017, %v3012
      %v3060 = vpack.c.bf16 %v3025, %v3020
      %v3061 = vpack.c.bf16 %v3033, %v3028
      %v3062 = vpack.c.bf16 %v3036, %v3036
      %v3064 = vsel %vm1060, %v3039, 0
      %v3067 = vsel %vm1060, %v3040, 0
      %v3070 = vsel %vm1060, %v3041, 0
      %v3073 = vsel %vm1060, %v3042, 0
      %v3076 = vsel %vm1060, %v3047, 0
      %v3079 = vsel %vm1060, %v3048, 0
      %v3082 = vsel %vm1060, %v3049, 0
      %v3085 = vsel %vm1060, %v3050, 0
      %3087 = vmatprep.subr.bf16.mxu0 0
      %3088 = vmatpush1.bf16.xpose.msra.mxu0 0
      %3089 = vmatprep.subr.bf16.mxu0 0
      %3090 = vmatpush1.bf16.xpose.msra.mxu0 0
      %3091 = vmatprep.subr.bf16.mxu0 0
      %3092 = vmatpush1.bf16.xpose.msra.mxu0 0
      %3093 = vmatprep.subr.bf16.mxu0 0
      %3094 = vmatpush1.bf16.xpose.msra.mxu0 0
      %3095 = vmatprep.subr.bf16.mxu0 0
      %3096 = vmatpush1.bf16.xpose.msra.mxu0 %v3085
      %3097 = vmatprep.subr.bf16.mxu0 0
      %3098 = vmatpush1.bf16.xpose.msra.mxu0 %v3082
      %3099 = vmatprep.subr.bf16.mxu0 0
      %3100 = vmatpush1.bf16.xpose.msra.mxu0 %v3079
      %3101 = vmatprep.subr.bf16.mxu0 0
      %3102 = vmatpush1.bf16.xpose.msra.mxu0 %v3076
      %3103 = vmatprep.subr.bf16.mxu0 0
      %3104 = vmatpush2.bf16.xpose.msra.mxu0 0
      %3105 = vmatprep.subr.bf16.mxu0 0
      %3106 = vmatpush2.bf16.xpose.msra.mxu0 0
      %3107 = vmatprep.subr.bf16.mxu0 0
      %3108 = vmatpush2.bf16.xpose.msra.mxu0 0
      %3109 = vmatprep.subr.bf16.mxu0 0
      %3110 = vmatpush2.bf16.xpose.msra.mxu0 0
      %3111 = vmatprep.subr.bf16.mxu0 0
      %3112 = vmatpush2.bf16.xpose.msra.mxu0 0
      %3113 = vmatprep.subr.bf16.mxu0 0
      %3114 = vmatpush2.bf16.xpose.msra.mxu0 0
      %3115 = vmatprep.subr.bf16.mxu0 0
      %3116 = vmatpush2.bf16.xpose.msra.mxu0 0
      %3117 = vmatprep.subr.bf16.mxu0 0
      %3118 = vmatpush2.bf16.xpose.msra.mxu0 0
      %3119 = vmatprep.mubr.bf16.mxu0 0
      %3120 = vmatmul.mubr.bf16.gmra.mxu0 %v3064
      %v3121 = vpop.f32.mrf.mxu0
      %v3122 = vadd.f32 0.0, %v3121
      %v3123 = vpop.f32.mrf.mxu0
      %v3124 = vpop.f32.mrf.mxu0
      %v3125 = vadd.f32 0.0, %v3124
      %v3126 = vpop.f32.mrf.mxu0
      %3127 = vmatprep.mubr.bf16.mxu0 0
      %3128 = vmatmul.mubr.bf16.gmra.mxu0 %v3067
      %v3129 = vpop.f32.mrf.mxu0
      %v3130 = vadd.f32 0.0, %v3129
      %v3131 = vpop.f32.mrf.mxu0
      %v3132 = vpop.f32.mrf.mxu0
      %v3133 = vadd.f32 0.0, %v3132
      %v3134 = vpop.f32.mrf.mxu0
      %3135 = vmatprep.mubr.bf16.mxu0 0
      %3136 = vmatmul.mubr.bf16.gmra.mxu0 %v3070
      %v3137 = vpop.f32.mrf.mxu0
      %v3138 = vadd.f32 0.0, %v3137
      %v3139 = vpop.f32.mrf.mxu0
      %v3140 = vpop.f32.mrf.mxu0
      %v3141 = vadd.f32 0.0, %v3140
      %v3142 = vpop.f32.mrf.mxu0
      %3143 = vmatprep.mubr.bf16.mxu0 0
      %3144 = vmatmul.mubr.bf16.gmra.mxu0 %v3073
      %v3145 = vpop.f32.mrf.mxu0
      %v3146 = vadd.f32 0.0, %v3145
      %v3147 = vpop.f32.mrf.mxu0
      %v3148 = vpop.f32.mrf.mxu0
      %v3149 = vpop.f32.mrf.mxu0
      %3150 = vdwg.mxu0
      %v3152 = vsel %vm1060, %v3043, 0
      %v3155 = vsel %vm1060, %v3044, 0
      %v3158 = vsel %vm1060, %v3045, 0
      %v3161 = vsel %vm1060, %v3046, 0
      %v3164 = vsel %vm1060, %v3051, 0
      %v3167 = vsel %vm1060, %v3052, 0
      %v3170 = vsel %vm1060, %v3053, 0
      %v3173 = vsel %vm1060, %v3054, 0
      %3175 = vmatprep.subr.bf16.mxu0 0
      %3176 = vmatpush1.bf16.xpose.msra.mxu0 0
      %3177 = vmatprep.subr.bf16.mxu0 0
      %3178 = vmatpush1.bf16.xpose.msra.mxu0 0
      %3179 = vmatprep.subr.bf16.mxu0 0
      %3180 = vmatpush1.bf16.xpose.msra.mxu0 0
      %3181 = vmatprep.subr.bf16.mxu0 0
      %3182 = vmatpush1.bf16.xpose.msra.mxu0 0
      %3183 = vmatprep.subr.bf16.mxu0 0
      %3184 = vmatpush1.bf16.xpose.msra.mxu0 %v3173
      %3185 = vmatprep.subr.bf16.mxu0 0
      %3186 = vmatpush1.bf16.xpose.msra.mxu0 %v3170
      %3187 = vmatprep.subr.bf16.mxu0 0
      %3188 = vmatpush1.bf16.xpose.msra.mxu0 %v3167
      %3189 = vmatprep.subr.bf16.mxu0 0
      %3190 = vmatpush1.bf16.xpose.msra.mxu0 %v3164
      %3191 = vmatprep.subr.bf16.mxu0 0
      %3192 = vmatpush2.bf16.xpose.msra.mxu0 0
      %3193 = vmatprep.subr.bf16.mxu0 0
      %3194 = vmatpush2.bf16.xpose.msra.mxu0 0
      %3195 = vmatprep.subr.bf16.mxu0 0
      %3196 = vmatpush2.bf16.xpose.msra.mxu0 0
      %3197 = vmatprep.subr.bf16.mxu0 0
      %3198 = vmatpush2.bf16.xpose.msra.mxu0 0
      %3199 = vmatprep.subr.bf16.mxu0 0
      %3200 = vmatpush2.bf16.xpose.msra.mxu0 0
      %3201 = vmatprep.subr.bf16.mxu0 0
      %3202 = vmatpush2.bf16.xpose.msra.mxu0 0
      %3203 = vmatprep.subr.bf16.mxu0 0
      %3204 = vmatpush2.bf16.xpose.msra.mxu0 0
      %3205 = vmatprep.subr.bf16.mxu0 0
      %3206 = vmatpush2.bf16.xpose.msra.mxu0 0
      %3207 = vmatprep.mubr.bf16.mxu0 0
      %3208 = vmatmul.mubr.bf16.gmra.mxu0 %v3152
      %v3209 = vpop.f32.mrf.mxu0
      %v3210 = vadd.f32 0.0, %v3209
      %v3211 = vpop.f32.mrf.mxu0
      %v3212 = vpop.f32.mrf.mxu0
      %v3213 = vadd.f32 0.0, %v3212
      %v3214 = vpop.f32.mrf.mxu0
      %3215 = vmatprep.mubr.bf16.mxu0 0
      %3216 = vmatmul.mubr.bf16.gmra.mxu0 %v3155
      %v3217 = vpop.f32.mrf.mxu0
      %v3218 = vadd.f32 0.0, %v3217
      %v3219 = vpop.f32.mrf.mxu0
      %v3220 = vpop.f32.mrf.mxu0
      %v3221 = vadd.f32 0.0, %v3220
      %v3222 = vpop.f32.mrf.mxu0
      %3223 = vmatprep.mubr.bf16.mxu0 0
      %3224 = vmatmul.mubr.bf16.gmra.mxu0 %v3158
      %v3225 = vpop.f32.mrf.mxu0
      %v3226 = vadd.f32 0.0, %v3225
      %v3227 = vpop.f32.mrf.mxu0
      %v3228 = vpop.f32.mrf.mxu0
      %v3229 = vadd.f32 0.0, %v3228
      %v3230 = vpop.f32.mrf.mxu0
      %3231 = vmatprep.mubr.bf16.mxu0 0
      %3232 = vmatmul.mubr.bf16.gmra.mxu0 %v3161
      %v3233 = vpop.f32.mrf.mxu0
      %v3234 = vadd.f32 0.0, %v3233
      %v3235 = vpop.f32.mrf.mxu0
      %v3236 = vpop.f32.mrf.mxu0
      %v3237 = vpop.f32.mrf.mxu0
      %3238 = vdwg.mxu0
      %v3239 = vmul.f32 %v3122, 0.35355338
      %v3240 = vmul.f32 %v3125, 0.35355338
      %v3241 = vmul.f32 %v3130, 0.35355338
      %v3242 = vmul.f32 %v3133, 0.35355338
      %v3243 = vmul.f32 %v3138, 0.35355338
      %v3244 = vmul.f32 %v3141, 0.35355338
      %v3245 = vmul.f32 %v3146, 0.35355338
      %v3246 = vmul.f32 %v3210, 0.35355338
      %v3247 = vmul.f32 %v3213, 0.35355338
      %v3248 = vmul.f32 %v3218, 0.35355338
      %v3249 = vmul.f32 %v3221, 0.35355338
      %v3250 = vmul.f32 %v3226, 0.35355338
      %v3251 = vmul.f32 %v3229, 0.35355338
      %v3252 = vmul.f32 %v3234, 0.35355338
      %v3253 = vadd.f32 %v3239, %v1254
      %v3254 = vadd.f32 %v3240, %v1254
      %v3255 = vadd.f32 %v3241, %v1254
      %v3256 = vadd.f32 %v3242, %v1254
      %v3257 = vadd.f32 %v3243, %v1254
      %v3258 = vadd.f32 %v3244, %v1254
      %v3259 = vadd.f32 %v3245, %v1254
      %v3260 = vadd.f32 %v3246, %v1254
      %v3261 = vadd.f32 %v3247, %v1254
      %v3262 = vadd.f32 %v3248, %v1254
      %v3263 = vadd.f32 %v3249, %v1254
      %v3264 = vadd.f32 %v3250, %v1254
      %v3265 = vadd.f32 %v3251, %v1254
      %v3266 = vadd.f32 %v3252, %v1254
      %v3267 = vsel %vm1269, %v3253, -inf
      %3268 = vmax.xlane.f32.xlu0 %v3267
      %v3269 = vpop.xlane.xlu0 %3268
      %v3270 = vsel %vm1269, %v3254, -inf
      %3271 = vmax.xlane.f32.xlu0 %v3270
      %v3272 = vpop.xlane.xlu0 %3271
      %v3273 = vsel %vm1269, %v3255, -inf
      %3274 = vmax.xlane.f32.xlu0 %v3273
      %v3275 = vpop.xlane.xlu0 %3274
      %v3276 = vsel %vm1269, %v3256, -inf
      %3277 = vmax.xlane.f32.xlu0 %v3276
      %v3278 = vpop.xlane.xlu0 %3277
      %v3279 = vsel %vm1269, %v3257, -inf
      %3280 = vmax.xlane.f32.xlu0 %v3279
      %v3281 = vpop.xlane.xlu0 %3280
      %v3282 = vsel %vm1269, %v3258, -inf
      %3283 = vmax.xlane.f32.xlu0 %v3282
      %v3284 = vpop.xlane.xlu0 %3283
      %v3285 = vsel %vm1269, %v3259, -inf
      %3286 = vmax.xlane.f32.xlu0 %v3285
      %v3287 = vpop.xlane.xlu0 %3286
      %v3288 = vsel %vm1269, %v3260, -inf
      %3289 = vmax.xlane.f32.xlu0 %v3288
      %v3290 = vpop.xlane.xlu0 %3289
      %v3291 = vsel %vm1269, %v3261, -inf
      %3292 = vmax.xlane.f32.xlu0 %v3291
      %v3293 = vpop.xlane.xlu0 %3292
      %v3294 = vsel %vm1269, %v3262, -inf
      %3295 = vmax.xlane.f32.xlu0 %v3294
      %v3296 = vpop.xlane.xlu0 %3295
      %v3297 = vsel %vm1269, %v3263, -inf
      %3298 = vmax.xlane.f32.xlu0 %v3297
      %v3299 = vpop.xlane.xlu0 %3298
      %v3300 = vsel %vm1269, %v3264, -inf
      %3301 = vmax.xlane.f32.xlu0 %v3300
      %v3302 = vpop.xlane.xlu0 %3301
      %v3303 = vsel %vm1269, %v3265, -inf
      %3304 = vmax.xlane.f32.xlu0 %v3303
      %v3305 = vpop.xlane.xlu0 %3304
      %v3306 = vsel %vm1269, %v3266, -inf
      %3307 = vmax.xlane.f32.xlu0 %v3306
      %v3308 = vpop.xlane.xlu0 %3307
      %v3309 = vsub.f32 %v3253, %v3269
      %v3310 = vsub.f32 %v3254, %v3272
      %v3311 = vsub.f32 %v3255, %v3275
      %v3312 = vsub.f32 %v3256, %v3278
      %v3313 = vsub.f32 %v3257, %v3281
      %v3314 = vsub.f32 %v3258, %v3284
      %v3315 = vsub.f32 %v3259, %v3287
      %v3316 = vsub.f32 %v3260, %v3290
      %v3317 = vsub.f32 %v3261, %v3293
      %v3318 = vsub.f32 %v3262, %v3296
      %v3319 = vsub.f32 %v3263, %v3299
      %v3320 = vsub.f32 %v3264, %v3302
      %v3321 = vsub.f32 %v3265, %v3305
      %v3322 = vsub.f32 %v3266, %v3308
      %v3323 = vmul.f32 %v3309, 1.442695
      %v3324 = vpow.pop %v3323
      %v3325 = vmul.f32 %v3310, 1.442695
      %v3326 = vpow.pop %v3325
      %v3327 = vmul.f32 %v3311, 1.442695
      %v3328 = vpow.pop %v3327
      %v3329 = vmul.f32 %v3312, 1.442695
      %v3330 = vpow.pop %v3329
      %v3331 = vmul.f32 %v3313, 1.442695
      %v3332 = vpow.pop %v3331
      %v3333 = vmul.f32 %v3314, 1.442695
      %v3334 = vpow.pop %v3333
      %v3335 = vmul.f32 %v3315, 1.442695
      %v3336 = vpow.pop %v3335
      %v3337 = vmul.f32 %v3316, 1.442695
      %v3338 = vpow.pop %v3337
      %v3339 = vmul.f32 %v3317, 1.442695
      %v3340 = vpow.pop %v3339
      %v3341 = vmul.f32 %v3318, 1.442695
      %v3342 = vpow.pop %v3341
      %v3343 = vmul.f32 %v3319, 1.442695
      %v3344 = vpow.pop %v3343
      %v3345 = vmul.f32 %v3320, 1.442695
      %v3346 = vpow.pop %v3345
      %v3347 = vmul.f32 %v3321, 1.442695
      %v3348 = vpow.pop %v3347
      %v3349 = vmul.f32 %v3322, 1.442695
      %v3350 = vpow.pop %v3349
      %v3351 = vsel %vm1269, %v3324, 0.0
      %3352 = vadd.xlane.f32.xlu0 %v3351
      %v3353 = vpop.xlane.xlu0 %3352
      %v3354 = vsel %vm1269, %v3326, 0.0
      %3355 = vadd.xlane.f32.xlu0 %v3354
      %v3356 = vpop.xlane.xlu0 %3355
      %v3357 = vsel %vm1269, %v3328, 0.0
      %3358 = vadd.xlane.f32.xlu0 %v3357
      %v3359 = vpop.xlane.xlu0 %3358
      %v3360 = vsel %vm1269, %v3330, 0.0
      %3361 = vadd.xlane.f32.xlu0 %v3360
      %v3362 = vpop.xlane.xlu0 %3361
      %v3363 = vsel %vm1269, %v3332, 0.0
      %3364 = vadd.xlane.f32.xlu0 %v3363
      %v3365 = vpop.xlane.xlu0 %3364
      %v3366 = vsel %vm1269, %v3334, 0.0
      %3367 = vadd.xlane.f32.xlu0 %v3366
      %v3368 = vpop.xlane.xlu0 %3367
      %v3369 = vsel %vm1269, %v3336, 0.0
      %3370 = vadd.xlane.f32.xlu0 %v3369
      %v3371 = vpop.xlane.xlu0 %3370
      %v3372 = vsel %vm1269, %v3338, 0.0
      %3373 = vadd.xlane.f32.xlu0 %v3372
      %v3374 = vpop.xlane.xlu0 %3373
      %v3375 = vsel %vm1269, %v3340, 0.0
      %3376 = vadd.xlane.f32.xlu0 %v3375
      %v3377 = vpop.xlane.xlu0 %3376
      %v3378 = vsel %vm1269, %v3342, 0.0
      %3379 = vadd.xlane.f32.xlu0 %v3378
      %v3380 = vpop.xlane.xlu0 %3379
      %v3381 = vsel %vm1269, %v3344, 0.0
      %3382 = vadd.xlane.f32.xlu0 %v3381
      %v3383 = vpop.xlane.xlu0 %3382
      %v3384 = vsel %vm1269, %v3346, 0.0
      %3385 = vadd.xlane.f32.xlu0 %v3384
      %v3386 = vpop.xlane.xlu0 %3385
      %v3387 = vsel %vm1269, %v3348, 0.0
      %3388 = vadd.xlane.f32.xlu0 %v3387
      %v3389 = vpop.xlane.xlu0 %3388
      %v3390 = vsel %vm1269, %v3350, 0.0
      %3391 = vadd.xlane.f32.xlu0 %v3390
      %v3392 = vpop.xlane.xlu0 %3391
      %v3393 = vrcp.pop %v3353
      %v3394 = vrcp.pop %v3356
      %v3395 = vrcp.pop %v3359
      %v3396 = vrcp.pop %v3362
      %v3397 = vrcp.pop %v3365
      %v3398 = vrcp.pop %v3368
      %v3399 = vrcp.pop %v3371
      %v3400 = vrcp.pop %v3374
      %v3401 = vrcp.pop %v3377
      %v3402 = vrcp.pop %v3380
      %v3403 = vrcp.pop %v3383
      %v3404 = vrcp.pop %v3386
      %v3405 = vrcp.pop %v3389
      %v3406 = vrcp.pop %v3392
      %v3407 = vmul.f32 %v3324, %v3393
      %v3408 = vmul.f32 %v3326, %v3394
      %v3409 = vmul.f32 %v3328, %v3395
      %v3410 = vmul.f32 %v3330, %v3396
      %v3411 = vmul.f32 %v3332, %v3397
      %v3412 = vmul.f32 %v3334, %v3398
      %v3413 = vmul.f32 %v3336, %v3399
      %v3414 = vmul.f32 %v3338, %v3400
      %v3415 = vmul.f32 %v3340, %v3401
      %v3416 = vmul.f32 %v3342, %v3402
      %v3417 = vmul.f32 %v3344, %v3403
      %v3418 = vmul.f32 %v3346, %v3404
      %v3419 = vmul.f32 %v3348, %v3405
      %v3420 = vmul.f32 %v3350, %v3406
      %v3421 = vpack.c.bf16 %v3408, %v3407
      %v3422 = vpack.c.bf16 %v3410, %v3409
      %v3423 = vpack.c.bf16 %v3412, %v3411
      %v3424 = vpack.c.bf16 %v3413, %v3413
      %v3425 = vpack.c.bf16 %v3415, %v3414
      %v3426 = vpack.c.bf16 %v3417, %v3416
      %v3427 = vpack.c.bf16 %v3419, %v3418
      %v3428 = vpack.c.bf16 %v3420, %v3420
      %v3430 = vsel %vm1269, %v3421, 0
      %v3433 = vsel %vm1269, %v3422, 0
      %v3436 = vsel %vm1269, %v3423, 0
      %v3439 = vsel %vm1269, %v3424, 0
      %v3442 = vsel %vm1444, %v3058, 0
      %3444 = vmatprep.subr.bf16.mxu0 0
      %3445 = vmatpush1.bf16.msra.mxu0 0
      %3446 = vmatprep.subr.bf16.mxu0 0
      %3447 = vmatpush1.bf16.msra.mxu0 0
      %3448 = vmatprep.subr.bf16.mxu0 0
      %3449 = vmatpush1.bf16.msra.mxu0 0
      %3450 = vmatprep.subr.bf16.mxu0 0
      %3451 = vmatpush1.bf16.msra.mxu0 0
      %3452 = vmatprep.subr.bf16.mxu0 0
      %3453 = vmatpush1.bf16.msra.mxu0 %v3442
      %3454 = vmatprep.subr.bf16.mxu0 0
      %3455 = vmatpush1.bf16.msra.mxu0 %v3057
      %3456 = vmatprep.subr.bf16.mxu0 0
      %3457 = vmatpush1.bf16.msra.mxu0 %v3056
      %3458 = vmatprep.subr.bf16.mxu0 0
      %3459 = vmatpush1.bf16.msra.mxu0 %v3055
      %3460 = vmatprep.subr.bf16.mxu0 0
      %3461 = vmatpush2.bf16.msra.mxu0 0
      %3462 = vmatprep.subr.bf16.mxu0 0
      %3463 = vmatpush2.bf16.msra.mxu0 0
      %3464 = vmatprep.subr.bf16.mxu0 0
      %3465 = vmatpush2.bf16.msra.mxu0 0
      %3466 = vmatprep.subr.bf16.mxu0 0
      %3467 = vmatpush2.bf16.msra.mxu0 0
      %3468 = vmatprep.subr.bf16.mxu0 0
      %3469 = vmatpush2.bf16.msra.mxu0 0
      %3470 = vmatprep.subr.bf16.mxu0 0
      %3471 = vmatpush2.bf16.msra.mxu0 0
      %3472 = vmatprep.subr.bf16.mxu0 0
      %3473 = vmatpush2.bf16.msra.mxu0 0
      %3474 = vmatprep.subr.bf16.mxu0 0
      %3475 = vmatpush2.bf16.msra.mxu0 0
      %3476 = vmatprep.mubr.bf16.mxu0 0
      %3477 = vmatmul.mubr.bf16.gmra.mxu0 %v3430
      %v3478 = vpop.f32.mrf.mxu0
      %v3479 = vadd.f32 0.0, %v3478
      %v3480 = vpop.f32.mrf.mxu0
      %v3481 = vpop.f32.mrf.mxu0
      %v3482 = vadd.f32 0.0, %v3481
      %v3483 = vpop.f32.mrf.mxu0
      %3484 = vmatprep.mubr.bf16.mxu0 0
      %3485 = vmatmul.mubr.bf16.gmra.mxu0 %v3433
      %v3486 = vpop.f32.mrf.mxu0
      %v3487 = vadd.f32 0.0, %v3486
      %v3488 = vpop.f32.mrf.mxu0
      %v3489 = vpop.f32.mrf.mxu0
      %v3490 = vadd.f32 0.0, %v3489
      %v3491 = vpop.f32.mrf.mxu0
      %3492 = vmatprep.mubr.bf16.mxu0 0
      %3493 = vmatmul.mubr.bf16.gmra.mxu0 %v3436
      %v3494 = vpop.f32.mrf.mxu0
      %v3495 = vadd.f32 0.0, %v3494
      %v3496 = vpop.f32.mrf.mxu0
      %v3497 = vpop.f32.mrf.mxu0
      %v3498 = vadd.f32 0.0, %v3497
      %v3499 = vpop.f32.mrf.mxu0
      %3500 = vmatprep.mubr.bf16.mxu0 0
      %3501 = vmatmul.mubr.bf16.gmra.mxu0 %v3439
      %v3502 = vpop.f32.mrf.mxu0
      %v3503 = vadd.f32 0.0, %v3502
      %v3504 = vpop.f32.mrf.mxu0
      %v3505 = vpop.f32.mrf.mxu0
      %v3506 = vpop.f32.mrf.mxu0
      %3507 = vdwg.mxu0
      %v3509 = vsel %vm1269, %v3425, 0
      %v3512 = vsel %vm1269, %v3426, 0
      %v3515 = vsel %vm1269, %v3427, 0
      %v3518 = vsel %vm1269, %v3428, 0
      %v3521 = vsel %vm1444, %v3062, 0
      %3523 = vmatprep.subr.bf16.mxu0 0
      %3524 = vmatpush1.bf16.msra.mxu0 0
      %3525 = vmatprep.subr.bf16.mxu0 0
      %3526 = vmatpush1.bf16.msra.mxu0 0
      %3527 = vmatprep.subr.bf16.mxu0 0
      %3528 = vmatpush1.bf16.msra.mxu0 0
      %3529 = vmatprep.subr.bf16.mxu0 0
      %3530 = vmatpush1.bf16.msra.mxu0 0
      %3531 = vmatprep.subr.bf16.mxu0 0
      %3532 = vmatpush1.bf16.msra.mxu0 %v3521
      %3533 = vmatprep.subr.bf16.mxu0 0
      %3534 = vmatpush1.bf16.msra.mxu0 %v3061
      %3535 = vmatprep.subr.bf16.mxu0 0
      %3536 = vmatpush1.bf16.msra.mxu0 %v3060
      %3537 = vmatprep.subr.bf16.mxu0 0
      %3538 = vmatpush1.bf16.msra.mxu0 %v3059
      %3539 = vmatprep.subr.bf16.mxu0 0
      %3540 = vmatpush2.bf16.msra.mxu0 0
      %3541 = vmatprep.subr.bf16.mxu0 0
      %3542 = vmatpush2.bf16.msra.mxu0 0
      %3543 = vmatprep.subr.bf16.mxu0 0
      %3544 = vmatpush2.bf16.msra.mxu0 0
      %3545 = vmatprep.subr.bf16.mxu0 0
      %3546 = vmatpush2.bf16.msra.mxu0 0
      %3547 = vmatprep.subr.bf16.mxu0 0
      %3548 = vmatpush2.bf16.msra.mxu0 0
      %3549 = vmatprep.subr.bf16.mxu0 0
      %3550 = vmatpush2.bf16.msra.mxu0 0
      %3551 = vmatprep.subr.bf16.mxu0 0
      %3552 = vmatpush2.bf16.msra.mxu0 0
      %3553 = vmatprep.subr.bf16.mxu0 0
      %3554 = vmatpush2.bf16.msra.mxu0 0
      %3555 = vmatprep.mubr.bf16.mxu0 0
      %3556 = vmatmul.mubr.bf16.gmra.mxu0 %v3509
      %v3557 = vpop.f32.mrf.mxu0
      %v3558 = vadd.f32 0.0, %v3557
      %v3559 = vpop.f32.mrf.mxu0
      %v3560 = vpop.f32.mrf.mxu0
      %v3561 = vadd.f32 0.0, %v3560
      %v3562 = vpop.f32.mrf.mxu0
      %3563 = vmatprep.mubr.bf16.mxu0 0
      %3564 = vmatmul.mubr.bf16.gmra.mxu0 %v3512
      %v3565 = vpop.f32.mrf.mxu0
      %v3566 = vadd.f32 0.0, %v3565
      %v3567 = vpop.f32.mrf.mxu0
      %v3568 = vpop.f32.mrf.mxu0
      %v3569 = vadd.f32 0.0, %v3568
      %v3570 = vpop.f32.mrf.mxu0
      %3571 = vmatprep.mubr.bf16.mxu0 0
      %3572 = vmatmul.mubr.bf16.gmra.mxu0 %v3515
      %v3573 = vpop.f32.mrf.mxu0
      %v3574 = vadd.f32 0.0, %v3573
      %v3575 = vpop.f32.mrf.mxu0
      %v3576 = vpop.f32.mrf.mxu0
      %v3577 = vadd.f32 0.0, %v3576
      %v3578 = vpop.f32.mrf.mxu0
      %3579 = vmatprep.mubr.bf16.mxu0 0
      %3580 = vmatmul.mubr.bf16.gmra.mxu0 %v3518
      %v3581 = vpop.f32.mrf.mxu0
      %v3582 = vadd.f32 0.0, %v3581
      %v3583 = vpop.f32.mrf.mxu0
      %v3584 = vpop.f32.mrf.mxu0
      %v3585 = vpop.f32.mrf.mxu0
      %3586 = vdwg.mxu0
      %v3587 = vpack.c.bf16 %v3482, %v3479
      %v3588 = vpack.c.bf16 %v3490, %v3487
      %v3589 = vpack.c.bf16 %v3498, %v3495
      %v3590 = vpack.c.bf16 %v3558, %v3503
      %v3591 = vpack.c.bf16 %v3566, %v3561
      %v3592 = vpack.c.bf16 %v3574, %v3569
      %v3593 = vpack.c.bf16 %v3582, %v3577
      %s3594 = scalar_lea.vmem %s395, 8
      %v3595 = vld [vmem:[%s3594] sm:$0xf]
      %v3597 = vsel %vm1060, %v3587, 0
      %v3600 = vsel %vm1060, %v3588, 0
      %v3603 = vsel %vm1060, %v3589, 0
      %v3606 = vsel %vm1060, %v3590, 0
      %v3609 = vsel %vm1060, %v3591, 0
      %v3612 = vsel %vm1060, %v3592, 0
      %v3615 = vsel %vm1060, %v3593, 0
      %v3618 = vsel %vm1444, %v3595, 0
      %3620 = vmatprep.subr.bf16.mxu0 0
      %3621 = vmatpush1.bf16.msra.mxu0 0
      %3622 = vmatprep.subr.bf16.mxu0 0
      %3623 = vmatpush1.bf16.msra.mxu0 0
      %3624 = vmatprep.subr.bf16.mxu0 0
      %3625 = vmatpush1.bf16.msra.mxu0 0
      %3626 = vmatprep.subr.bf16.mxu0 0
      %3627 = vmatpush1.bf16.msra.mxu0 0
      %3628 = vmatprep.subr.bf16.mxu0 0
      %3629 = vmatpush1.bf16.msra.mxu0 0
      %3630 = vmatprep.subr.bf16.mxu0 0
      %3631 = vmatpush1.bf16.msra.mxu0 0
      %3632 = vmatprep.subr.bf16.mxu0 0
      %3633 = vmatpush1.bf16.msra.mxu0 0
      %3634 = vmatprep.subr.bf16.mxu0 0
      %3635 = vmatpush1.bf16.msra.mxu0 %v3618
      %3636 = vmatprep.subr.bf16.mxu0 0
      %3637 = vmatpush2.bf16.msra.mxu0 0
      %3638 = vmatprep.subr.bf16.mxu0 0
      %3639 = vmatpush2.bf16.msra.mxu0 0
      %3640 = vmatprep.subr.bf16.mxu0 0
      %3641 = vmatpush2.bf16.msra.mxu0 0
      %3642 = vmatprep.subr.bf16.mxu0 0
      %3643 = vmatpush2.bf16.msra.mxu0 0
      %3644 = vmatprep.subr.bf16.mxu0 0
      %3645 = vmatpush2.bf16.msra.mxu0 0
      %3646 = vmatprep.subr.bf16.mxu0 0
      %3647 = vmatpush2.bf16.msra.mxu0 0
      %3648 = vmatprep.subr.bf16.mxu0 0
      %3649 = vmatpush2.bf16.msra.mxu0 0
      %3650 = vmatprep.subr.bf16.mxu0 0
      %3651 = vmatpush2.bf16.msra.mxu0 0
      %3652 = vmatprep.mubr.bf16.mxu0 0
      %3653 = vmatmul.mubr.bf16.gmra.mxu0 %v3597
      %v3654 = vpop.f32.mrf.mxu0
      %v3655 = vadd.f32 0.0, %v3654
      %v3656 = vpop.f32.mrf.mxu0
      %v3657 = vpop.f32.mrf.mxu0
      %v3658 = vadd.f32 0.0, %v3657
      %v3659 = vpop.f32.mrf.mxu0
      %3660 = vmatprep.mubr.bf16.mxu0 0
      %3661 = vmatmul.mubr.bf16.gmra.mxu0 %v3600
      %v3662 = vpop.f32.mrf.mxu0
      %v3663 = vadd.f32 0.0, %v3662
      %v3664 = vpop.f32.mrf.mxu0
      %v3665 = vpop.f32.mrf.mxu0
      %v3666 = vadd.f32 0.0, %v3665
      %v3667 = vpop.f32.mrf.mxu0
      %3668 = vmatprep.mubr.bf16.mxu0 0
      %3669 = vmatmul.mubr.bf16.gmra.mxu0 %v3603
      %v3670 = vpop.f32.mrf.mxu0
      %v3671 = vadd.f32 0.0, %v3670
      %v3672 = vpop.f32.mrf.mxu0
      %v3673 = vpop.f32.mrf.mxu0
      %v3674 = vadd.f32 0.0, %v3673
      %v3675 = vpop.f32.mrf.mxu0
      %3676 = vmatprep.mubr.bf16.mxu0 0
      %3677 = vmatmul.mubr.bf16.gmra.mxu0 %v3606
      %v3678 = vpop.f32.mrf.mxu0
      %v3679 = vadd.f32 0.0, %v3678
      %v3680 = vpop.f32.mrf.mxu0
      %v3681 = vpop.f32.mrf.mxu0
      %v3682 = vadd.f32 0.0, %v3681
      %v3683 = vpop.f32.mrf.mxu0
      %3684 = vmatprep.mubr.bf16.mxu0 0
      %3685 = vmatmul.mubr.bf16.gmra.mxu0 %v3609
      %v3686 = vpop.f32.mrf.mxu0
      %v3687 = vadd.f32 0.0, %v3686
      %v3688 = vpop.f32.mrf.mxu0
      %v3689 = vpop.f32.mrf.mxu0
      %v3690 = vadd.f32 0.0, %v3689
      %v3691 = vpop.f32.mrf.mxu0
      %3692 = vmatprep.mubr.bf16.mxu0 0
      %3693 = vmatmul.mubr.bf16.gmra.mxu0 %v3612
      %v3694 = vpop.f32.mrf.mxu0
      %v3695 = vadd.f32 0.0, %v3694
      %v3696 = vpop.f32.mrf.mxu0
      %v3697 = vpop.f32.mrf.mxu0
      %v3698 = vadd.f32 0.0, %v3697
      %v3699 = vpop.f32.mrf.mxu0
      %3700 = vmatprep.mubr.bf16.mxu0 0
      %3701 = vmatmul.mubr.bf16.gmra.mxu0 %v3615
      %v3702 = vpop.f32.mrf.mxu0
      %v3703 = vadd.f32 0.0, %v3702
      %v3704 = vpop.f32.mrf.mxu0
      %v3705 = vpop.f32.mrf.mxu0
      %v3706 = vadd.f32 0.0, %v3705
      %v3707 = vpop.f32.mrf.mxu0
      %3708 = vdwg.mxu0
      %v3709 = vadd.f32 %v2658, %v3655
      %v3710 = vadd.f32 %v2661, %v3658
      %v3711 = vadd.f32 %v2666, %v3663
      %v3712 = vadd.f32 %v2669, %v3666
      %v3713 = vadd.f32 %v2674, %v3671
      %v3714 = vadd.f32 %v2677, %v3674
      %v3715 = vadd.f32 %v2682, %v3679
      %v3716 = vadd.f32 %v2685, %v3682
      %v3717 = vadd.f32 %v2690, %v3687
      %v3718 = vadd.f32 %v2693, %v3690
      %v3719 = vadd.f32 %v2698, %v3695
      %v3720 = vadd.f32 %v2701, %v3698
      %v3721 = vadd.f32 %v2706, %v3703
      %v3722 = vadd.f32 %v2709, %v3706
      %s3723 = scalar_lea.vmem %s380, 48
      %v3724 = vld [vmem:[%s3723] sm:$0xf]
      %v3725 = vld [vmem:[%s3723 + $0x4] sm:$0xf]
      %v3726 = vld [vmem:[%s3723 + $0x8] sm:$0xf]
      %v3727 = vld [vmem:[%s3723 + $0xc] sm:$0xf]
      %v3732 = vunpack.c.l.b16 %v3724
      %v3733 = vunpack.c.l.b16 %v3725
      %v3734 = vunpack.c.l.b16 %v3726
      %v3735 = vunpack.c.l.b16 %v3727
      %v3736 = vpack.c.b16 %v3733, %v3732
      %v3737 = vpack.c.b16 %v3735, %v3734
      %3740 = vrot.lane.b32.xlu0 %v695, 104
      %v3741 = vpop.permute.xlu0 %3740
      %3743 = vmatprep.subr.bf16.mxu0 0
      %3744 = vmatpush1.bf16.msra.mxu0 0
      %3745 = vmatprep.subr.bf16.mxu0 0
      %3746 = vmatpush1.bf16.msra.mxu0 0
      %3747 = vmatprep.subr.bf16.mxu0 0
      %3748 = vmatpush1.bf16.msra.mxu0 0
      %3749 = vmatprep.subr.bf16.mxu0 0
      %3750 = vmatpush1.bf16.msra.mxu0 0
      %3751 = vmatprep.subr.bf16.mxu0 0
      %3752 = vmatpush1.bf16.msra.mxu0 0
      %3753 = vmatprep.subr.bf16.mxu0 0
      %3754 = vmatpush1.bf16.msra.mxu0 0
      %3755 = vmatprep.subr.bf16.mxu0 0
      %3756 = vmatpush1.bf16.msra.mxu0 %v3737
      %3757 = vmatprep.subr.bf16.mxu0 0
      %3758 = vmatpush1.bf16.msra.mxu0 %v3736
      %3759 = vmatprep.subr.bf16.mxu0 0
      %3760 = vmatpush2.bf16.msra.mxu0 0
      %3761 = vmatprep.subr.bf16.mxu0 0
      %3762 = vmatpush2.bf16.msra.mxu0 0
      %3763 = vmatprep.subr.bf16.mxu0 0
      %3764 = vmatpush2.bf16.msra.mxu0 0
      %3765 = vmatprep.subr.bf16.mxu0 0
      %3766 = vmatpush2.bf16.msra.mxu0 0
      %3767 = vmatprep.subr.bf16.mxu0 0
      %3768 = vmatpush2.bf16.msra.mxu0 0
      %3769 = vmatprep.subr.bf16.mxu0 0
      %3770 = vmatpush2.bf16.msra.mxu0 0
      %3771 = vmatprep.subr.bf16.mxu0 0
      %3772 = vmatpush2.bf16.msra.mxu0 0
      %3773 = vmatprep.subr.bf16.mxu0 0
      %3774 = vmatpush2.bf16.msra.mxu0 0
      %3775 = vmatprep.mubr.bf16.mxu0 0
      %3776 = vmatmul.mubr.bf16.gmra.mxu0 %v709
      %v3777 = vpop.f32.mrf.mxu0
      %v3778 = vadd.f32 %v3741, %v3777
      %v3779 = vpop.f32.mrf.mxu0
      %v3780 = vpop.f32.mrf.mxu0
      %v3781 = vadd.f32 %v3741, %v3780
      %v3782 = vpop.f32.mrf.mxu0
      %3783 = vmatprep.mubr.bf16.mxu0 0
      %3784 = vmatmul.mubr.bf16.gmra.mxu0 %v712
      %v3785 = vpop.f32.mrf.mxu0
      %v3786 = vadd.f32 %v3741, %v3785
      %v3787 = vpop.f32.mrf.mxu0
      %v3788 = vpop.f32.mrf.mxu0
      %v3789 = vadd.f32 %v3741, %v3788
      %v3790 = vpop.f32.mrf.mxu0
      %3791 = vmatprep.mubr.bf16.mxu0 0
      %3792 = vmatmul.mubr.bf16.gmra.mxu0 %v715
      %v3793 = vpop.f32.mrf.mxu0
      %v3794 = vadd.f32 %v3741, %v3793
      %v3795 = vpop.f32.mrf.mxu0
      %v3796 = vpop.f32.mrf.mxu0
      %v3797 = vadd.f32 %v3741, %v3796
      %v3798 = vpop.f32.mrf.mxu0
      %3799 = vmatprep.mubr.bf16.mxu0 0
      %3800 = vmatmul.mubr.bf16.gmra.mxu0 %v718
      %v3801 = vpop.f32.mrf.mxu0
      %v3802 = vadd.f32 %v3741, %v3801
      %v3803 = vpop.f32.mrf.mxu0
      %v3804 = vpop.f32.mrf.mxu0
      %v3805 = vadd.f32 %v3741, %v3804
      %v3806 = vpop.f32.mrf.mxu0
      %3807 = vmatprep.mubr.bf16.mxu0 0
      %3808 = vmatmul.mubr.bf16.gmra.mxu0 %v721
      %v3809 = vpop.f32.mrf.mxu0
      %v3810 = vadd.f32 %v3741, %v3809
      %v3811 = vpop.f32.mrf.mxu0
      %v3812 = vpop.f32.mrf.mxu0
      %v3813 = vadd.f32 %v3741, %v3812
      %v3814 = vpop.f32.mrf.mxu0
      %3815 = vmatprep.mubr.bf16.mxu0 0
      %3816 = vmatmul.mubr.bf16.gmra.mxu0 %v724
      %v3817 = vpop.f32.mrf.mxu0
      %v3818 = vadd.f32 %v3741, %v3817
      %v3819 = vpop.f32.mrf.mxu0
      %v3820 = vpop.f32.mrf.mxu0
      %v3821 = vadd.f32 %v3741, %v3820
      %v3822 = vpop.f32.mrf.mxu0
      %3823 = vmatprep.mubr.bf16.mxu0 0
      %3824 = vmatmul.mubr.bf16.gmra.mxu0 %v727
      %v3825 = vpop.f32.mrf.mxu0
      %v3826 = vadd.f32 %v3741, %v3825
      %v3827 = vpop.f32.mrf.mxu0
      %v3828 = vpop.f32.mrf.mxu0
      %v3829 = vadd.f32 %v3741, %v3828
      %v3830 = vpop.f32.mrf.mxu0
      %3831 = vdwg.mxu0
      %s3832 = scalar_lea.vmem %s385, 48
      %v3833 = vld [vmem:[%s3832] sm:$0xf]
      %v3834 = vld [vmem:[%s3832 + $0x4] sm:$0xf]
      %v3835 = vld [vmem:[%s3832 + $0x8] sm:$0xf]
      %v3836 = vld [vmem:[%s3832 + $0xc] sm:$0xf]
      %v3841 = vunpack.c.l.b16 %v3833
      %v3842 = vunpack.c.l.b16 %v3834
      %v3843 = vunpack.c.l.b16 %v3835
      %v3844 = vunpack.c.l.b16 %v3836
      %v3845 = vpack.c.b16 %v3842, %v3841
      %v3846 = vpack.c.b16 %v3844, %v3843
      %3849 = vrot.lane.b32.xlu0 %v825, 104
      %v3850 = vpop.permute.xlu0 %3849
      %3852 = vmatprep.subr.bf16.mxu0 0
      %3853 = vmatpush1.bf16.msra.mxu0 0
      %3854 = vmatprep.subr.bf16.mxu0 0
      %3855 = vmatpush1.bf16.msra.mxu0 0
      %3856 = vmatprep.subr.bf16.mxu0 0
      %3857 = vmatpush1.bf16.msra.mxu0 0
      %3858 = vmatprep.subr.bf16.mxu0 0
      %3859 = vmatpush1.bf16.msra.mxu0 0
      %3860 = vmatprep.subr.bf16.mxu0 0
      %3861 = vmatpush1.bf16.msra.mxu0 0
      %3862 = vmatprep.subr.bf16.mxu0 0
      %3863 = vmatpush1.bf16.msra.mxu0 0
      %3864 = vmatprep.subr.bf16.mxu0 0
      %3865 = vmatpush1.bf16.msra.mxu0 %v3846
      %3866 = vmatprep.subr.bf16.mxu0 0
      %3867 = vmatpush1.bf16.msra.mxu0 %v3845
      %3868 = vmatprep.subr.bf16.mxu0 0
      %3869 = vmatpush2.bf16.msra.mxu0 0
      %3870 = vmatprep.subr.bf16.mxu0 0
      %3871 = vmatpush2.bf16.msra.mxu0 0
      %3872 = vmatprep.subr.bf16.mxu0 0
      %3873 = vmatpush2.bf16.msra.mxu0 0
      %3874 = vmatprep.subr.bf16.mxu0 0
      %3875 = vmatpush2.bf16.msra.mxu0 0
      %3876 = vmatprep.subr.bf16.mxu0 0
      %3877 = vmatpush2.bf16.msra.mxu0 0
      %3878 = vmatprep.subr.bf16.mxu0 0
      %3879 = vmatpush2.bf16.msra.mxu0 0
      %3880 = vmatprep.subr.bf16.mxu0 0
      %3881 = vmatpush2.bf16.msra.mxu0 0
      %3882 = vmatprep.subr.bf16.mxu0 0
      %3883 = vmatpush2.bf16.msra.mxu0 0
      %3884 = vmatprep.mubr.bf16.mxu0 0
      %3885 = vmatmul.mubr.bf16.gmra.mxu0 %v709
      %v3886 = vpop.f32.mrf.mxu0
      %v3887 = vadd.f32 %v3850, %v3886
      %v3888 = vpop.f32.mrf.mxu0
      %v3889 = vpop.f32.mrf.mxu0
      %v3890 = vadd.f32 %v3850, %v3889
      %v3891 = vpop.f32.mrf.mxu0
      %3892 = vmatprep.mubr.bf16.mxu0 0
      %3893 = vmatmul.mubr.bf16.gmra.mxu0 %v712
      %v3894 = vpop.f32.mrf.mxu0
      %v3895 = vadd.f32 %v3850, %v3894
      %v3896 = vpop.f32.mrf.mxu0
      %v3897 = vpop.f32.mrf.mxu0
      %v3898 = vadd.f32 %v3850, %v3897
      %v3899 = vpop.f32.mrf.mxu0
      %3900 = vmatprep.mubr.bf16.mxu0 0
      %3901 = vmatmul.mubr.bf16.gmra.mxu0 %v715
      %v3902 = vpop.f32.mrf.mxu0
      %v3903 = vadd.f32 %v3850, %v3902
      %v3904 = vpop.f32.mrf.mxu0
      %v3905 = vpop.f32.mrf.mxu0
      %v3906 = vadd.f32 %v3850, %v3905
      %v3907 = vpop.f32.mrf.mxu0
      %3908 = vmatprep.mubr.bf16.mxu0 0
      %3909 = vmatmul.mubr.bf16.gmra.mxu0 %v718
      %v3910 = vpop.f32.mrf.mxu0
      %v3911 = vadd.f32 %v3850, %v3910
      %v3912 = vpop.f32.mrf.mxu0
      %v3913 = vpop.f32.mrf.mxu0
      %v3914 = vadd.f32 %v3850, %v3913
      %v3915 = vpop.f32.mrf.mxu0
      %3916 = vmatprep.mubr.bf16.mxu0 0
      %3917 = vmatmul.mubr.bf16.gmra.mxu0 %v721
      %v3918 = vpop.f32.mrf.mxu0
      %v3919 = vadd.f32 %v3850, %v3918
      %v3920 = vpop.f32.mrf.mxu0
      %v3921 = vpop.f32.mrf.mxu0
      %v3922 = vadd.f32 %v3850, %v3921
      %v3923 = vpop.f32.mrf.mxu0
      %3924 = vmatprep.mubr.bf16.mxu0 0
      %3925 = vmatmul.mubr.bf16.gmra.mxu0 %v724
      %v3926 = vpop.f32.mrf.mxu0
      %v3927 = vadd.f32 %v3850, %v3926
      %v3928 = vpop.f32.mrf.mxu0
      %v3929 = vpop.f32.mrf.mxu0
      %v3930 = vadd.f32 %v3850, %v3929
      %v3931 = vpop.f32.mrf.mxu0
      %3932 = vmatprep.mubr.bf16.mxu0 0
      %3933 = vmatmul.mubr.bf16.gmra.mxu0 %v727
      %v3934 = vpop.f32.mrf.mxu0
      %v3935 = vadd.f32 %v3850, %v3934
      %v3936 = vpop.f32.mrf.mxu0
      %v3937 = vpop.f32.mrf.mxu0
      %v3938 = vadd.f32 %v3850, %v3937
      %v3939 = vpop.f32.mrf.mxu0
      %3940 = vdwg.mxu0
      %s3941 = scalar_lea.vmem %s390, 48
      %v3942 = vld [vmem:[%s3941] sm:$0xf]
      %v3943 = vld [vmem:[%s3941 + $0x4] sm:$0xf]
      %v3944 = vld [vmem:[%s3941 + $0x8] sm:$0xf]
      %v3945 = vld [vmem:[%s3941 + $0xc] sm:$0xf]
      %v3950 = vunpack.c.l.b16 %v3942
      %v3951 = vunpack.c.l.b16 %v3943
      %v3952 = vunpack.c.l.b16 %v3944
      %v3953 = vunpack.c.l.b16 %v3945
      %v3954 = vpack.c.b16 %v3951, %v3950
      %v3955 = vpack.c.b16 %v3953, %v3952
      %3958 = vrot.lane.b32.xlu0 %v934, 104
      %v3959 = vpop.permute.xlu0 %3958
      %3961 = vmatprep.subr.bf16.mxu0 0
      %3962 = vmatpush1.bf16.msra.mxu0 0
      %3963 = vmatprep.subr.bf16.mxu0 0
      %3964 = vmatpush1.bf16.msra.mxu0 0
      %3965 = vmatprep.subr.bf16.mxu0 0
      %3966 = vmatpush1.bf16.msra.mxu0 0
      %3967 = vmatprep.subr.bf16.mxu0 0
      %3968 = vmatpush1.bf16.msra.mxu0 0
      %3969 = vmatprep.subr.bf16.mxu0 0
      %3970 = vmatpush1.bf16.msra.mxu0 0
      %3971 = vmatprep.subr.bf16.mxu0 0
      %3972 = vmatpush1.bf16.msra.mxu0 0
      %3973 = vmatprep.subr.bf16.mxu0 0
      %3974 = vmatpush1.bf16.msra.mxu0 %v3955
      %3975 = vmatprep.subr.bf16.mxu0 0
      %3976 = vmatpush1.bf16.msra.mxu0 %v3954
      %3977 = vmatprep.subr.bf16.mxu0 0
      %3978 = vmatpush2.bf16.msra.mxu0 0
      %3979 = vmatprep.subr.bf16.mxu0 0
      %3980 = vmatpush2.bf16.msra.mxu0 0
      %3981 = vmatprep.subr.bf16.mxu0 0
      %3982 = vmatpush2.bf16.msra.mxu0 0
      %3983 = vmatprep.subr.bf16.mxu0 0
      %3984 = vmatpush2.bf16.msra.mxu0 0
      %3985 = vmatprep.subr.bf16.mxu0 0
      %3986 = vmatpush2.bf16.msra.mxu0 0
      %3987 = vmatprep.subr.bf16.mxu0 0
      %3988 = vmatpush2.bf16.msra.mxu0 0
      %3989 = vmatprep.subr.bf16.mxu0 0
      %3990 = vmatpush2.bf16.msra.mxu0 0
      %3991 = vmatprep.subr.bf16.mxu0 0
      %3992 = vmatpush2.bf16.msra.mxu0 0
      %3993 = vmatprep.mubr.bf16.mxu0 0
      %3994 = vmatmul.mubr.bf16.gmra.mxu0 %v709
      %v3995 = vpop.f32.mrf.mxu0
      %v3996 = vadd.f32 %v3959, %v3995
      %v3997 = vpop.f32.mrf.mxu0
      %v3998 = vpop.f32.mrf.mxu0
      %v3999 = vadd.f32 %v3959, %v3998
      %v4000 = vpop.f32.mrf.mxu0
      %4001 = vmatprep.mubr.bf16.mxu0 0
      %4002 = vmatmul.mubr.bf16.gmra.mxu0 %v712
      %v4003 = vpop.f32.mrf.mxu0
      %v4004 = vadd.f32 %v3959, %v4003
      %v4005 = vpop.f32.mrf.mxu0
      %v4006 = vpop.f32.mrf.mxu0
      %v4007 = vadd.f32 %v3959, %v4006
      %v4008 = vpop.f32.mrf.mxu0
      %4009 = vmatprep.mubr.bf16.mxu0 0
      %4010 = vmatmul.mubr.bf16.gmra.mxu0 %v715
      %v4011 = vpop.f32.mrf.mxu0
      %v4012 = vadd.f32 %v3959, %v4011
      %v4013 = vpop.f32.mrf.mxu0
      %v4014 = vpop.f32.mrf.mxu0
      %v4015 = vadd.f32 %v3959, %v4014
      %v4016 = vpop.f32.mrf.mxu0
      %4017 = vmatprep.mubr.bf16.mxu0 0
      %4018 = vmatmul.mubr.bf16.gmra.mxu0 %v718
      %v4019 = vpop.f32.mrf.mxu0
      %v4020 = vadd.f32 %v3959, %v4019
      %v4021 = vpop.f32.mrf.mxu0
      %v4022 = vpop.f32.mrf.mxu0
      %v4023 = vadd.f32 %v3959, %v4022
      %v4024 = vpop.f32.mrf.mxu0
      %4025 = vmatprep.mubr.bf16.mxu0 0
      %4026 = vmatmul.mubr.bf16.gmra.mxu0 %v721
      %v4027 = vpop.f32.mrf.mxu0
      %v4028 = vadd.f32 %v3959, %v4027
      %v4029 = vpop.f32.mrf.mxu0
      %v4030 = vpop.f32.mrf.mxu0
      %v4031 = vadd.f32 %v3959, %v4030
      %v4032 = vpop.f32.mrf.mxu0
      %4033 = vmatprep.mubr.bf16.mxu0 0
      %4034 = vmatmul.mubr.bf16.gmra.mxu0 %v724
      %v4035 = vpop.f32.mrf.mxu0
      %v4036 = vadd.f32 %v3959, %v4035
      %v4037 = vpop.f32.mrf.mxu0
      %v4038 = vpop.f32.mrf.mxu0
      %v4039 = vadd.f32 %v3959, %v4038
      %v4040 = vpop.f32.mrf.mxu0
      %4041 = vmatprep.mubr.bf16.mxu0 0
      %4042 = vmatmul.mubr.bf16.gmra.mxu0 %v727
      %v4043 = vpop.f32.mrf.mxu0
      %v4044 = vadd.f32 %v3959, %v4043
      %v4045 = vpop.f32.mrf.mxu0
      %v4046 = vpop.f32.mrf.mxu0
      %v4047 = vadd.f32 %v3959, %v4046
      %v4048 = vpop.f32.mrf.mxu0
      %4049 = vdwg.mxu0
      %v4050 = vpack.c.bf16 %v3781, %v3778
      %v4051 = vpack.c.bf16 %v3789, %v3786
      %v4052 = vpack.c.bf16 %v3797, %v3794
      %v4053 = vpack.c.bf16 %v3802, %v3802
      %v4054 = vpack.c.bf16 %v3810, %v3805
      %v4055 = vpack.c.bf16 %v3818, %v3813
      %v4056 = vpack.c.bf16 %v3826, %v3821
      %v4057 = vpack.c.bf16 %v3829, %v3829
      %v4058 = vpack.c.bf16 %v3890, %v3887
      %v4059 = vpack.c.bf16 %v3898, %v3895
      %v4060 = vpack.c.bf16 %v3906, %v3903
      %v4061 = vpack.c.bf16 %v3911, %v3911
      %v4062 = vpack.c.bf16 %v3919, %v3914
      %v4063 = vpack.c.bf16 %v3927, %v3922
      %v4064 = vpack.c.bf16 %v3935, %v3930
      %v4065 = vpack.c.bf16 %v3938, %v3938
      %v4066 = vpack.c.bf16 %v3999, %v3996
      %v4067 = vpack.c.bf16 %v4007, %v4004
      %v4068 = vpack.c.bf16 %v4015, %v4012
      %v4069 = vpack.c.bf16 %v4020, %v4020
      %v4070 = vpack.c.bf16 %v4028, %v4023
      %v4071 = vpack.c.bf16 %v4036, %v4031
      %v4072 = vpack.c.bf16 %v4044, %v4039
      %v4073 = vpack.c.bf16 %v4047, %v4047
      %v4075 = vsel %vm1060, %v4050, 0
      %v4078 = vsel %vm1060, %v4051, 0
      %v4081 = vsel %vm1060, %v4052, 0
      %v4084 = vsel %vm1060, %v4053, 0
      %v4087 = vsel %vm1060, %v4058, 0
      %v4090 = vsel %vm1060, %v4059, 0
      %v4093 = vsel %vm1060, %v4060, 0
      %v4096 = vsel %vm1060, %v4061, 0
      %4098 = vmatprep.subr.bf16.mxu0 0
      %4099 = vmatpush1.bf16.xpose.msra.mxu0 0
      %4100 = vmatprep.subr.bf16.mxu0 0
      %4101 = vmatpush1.bf16.xpose.msra.mxu0 0
      %4102 = vmatprep.subr.bf16.mxu0 0
      %4103 = vmatpush1.bf16.xpose.msra.mxu0 0
      %4104 = vmatprep.subr.bf16.mxu0 0
      %4105 = vmatpush1.bf16.xpose.msra.mxu0 0
      %4106 = vmatprep.subr.bf16.mxu0 0
      %4107 = vmatpush1.bf16.xpose.msra.mxu0 %v4096
      %4108 = vmatprep.subr.bf16.mxu0 0
      %4109 = vmatpush1.bf16.xpose.msra.mxu0 %v4093
      %4110 = vmatprep.subr.bf16.mxu0 0
      %4111 = vmatpush1.bf16.xpose.msra.mxu0 %v4090
      %4112 = vmatprep.subr.bf16.mxu0 0
      %4113 = vmatpush1.bf16.xpose.msra.mxu0 %v4087
      %4114 = vmatprep.subr.bf16.mxu0 0
      %4115 = vmatpush2.bf16.xpose.msra.mxu0 0
      %4116 = vmatprep.subr.bf16.mxu0 0
      %4117 = vmatpush2.bf16.xpose.msra.mxu0 0
      %4118 = vmatprep.subr.bf16.mxu0 0
      %4119 = vmatpush2.bf16.xpose.msra.mxu0 0
      %4120 = vmatprep.subr.bf16.mxu0 0
      %4121 = vmatpush2.bf16.xpose.msra.mxu0 0
      %4122 = vmatprep.subr.bf16.mxu0 0
      %4123 = vmatpush2.bf16.xpose.msra.mxu0 0
      %4124 = vmatprep.subr.bf16.mxu0 0
      %4125 = vmatpush2.bf16.xpose.msra.mxu0 0
      %4126 = vmatprep.subr.bf16.mxu0 0
      %4127 = vmatpush2.bf16.xpose.msra.mxu0 0
      %4128 = vmatprep.subr.bf16.mxu0 0
      %4129 = vmatpush2.bf16.xpose.msra.mxu0 0
      %4130 = vmatprep.mubr.bf16.mxu0 0
      %4131 = vmatmul.mubr.bf16.gmra.mxu0 %v4075
      %v4132 = vpop.f32.mrf.mxu0
      %v4133 = vadd.f32 0.0, %v4132
      %v4134 = vpop.f32.mrf.mxu0
      %v4135 = vpop.f32.mrf.mxu0
      %v4136 = vadd.f32 0.0, %v4135
      %v4137 = vpop.f32.mrf.mxu0
      %4138 = vmatprep.mubr.bf16.mxu0 0
      %4139 = vmatmul.mubr.bf16.gmra.mxu0 %v4078
      %v4140 = vpop.f32.mrf.mxu0
      %v4141 = vadd.f32 0.0, %v4140
      %v4142 = vpop.f32.mrf.mxu0
      %v4143 = vpop.f32.mrf.mxu0
      %v4144 = vadd.f32 0.0, %v4143
      %v4145 = vpop.f32.mrf.mxu0
      %4146 = vmatprep.mubr.bf16.mxu0 0
      %4147 = vmatmul.mubr.bf16.gmra.mxu0 %v4081
      %v4148 = vpop.f32.mrf.mxu0
      %v4149 = vadd.f32 0.0, %v4148
      %v4150 = vpop.f32.mrf.mxu0
      %v4151 = vpop.f32.mrf.mxu0
      %v4152 = vadd.f32 0.0, %v4151
      %v4153 = vpop.f32.mrf.mxu0
      %4154 = vmatprep.mubr.bf16.mxu0 0
      %4155 = vmatmul.mubr.bf16.gmra.mxu0 %v4084
      %v4156 = vpop.f32.mrf.mxu0
      %v4157 = vadd.f32 0.0, %v4156
      %v4158 = vpop.f32.mrf.mxu0
      %v4159 = vpop.f32.mrf.mxu0
      %v4160 = vpop.f32.mrf.mxu0
      %4161 = vdwg.mxu0
      %v4163 = vsel %vm1060, %v4054, 0
      %v4166 = vsel %vm1060, %v4055, 0
      %v4169 = vsel %vm1060, %v4056, 0
      %v4172 = vsel %vm1060, %v4057, 0
      %v4175 = vsel %vm1060, %v4062, 0
      %v4178 = vsel %vm1060, %v4063, 0
      %v4181 = vsel %vm1060, %v4064, 0
      %v4184 = vsel %vm1060, %v4065, 0
      %4186 = vmatprep.subr.bf16.mxu0 0
      %4187 = vmatpush1.bf16.xpose.msra.mxu0 0
      %4188 = vmatprep.subr.bf16.mxu0 0
      %4189 = vmatpush1.bf16.xpose.msra.mxu0 0
      %4190 = vmatprep.subr.bf16.mxu0 0
      %4191 = vmatpush1.bf16.xpose.msra.mxu0 0
      %4192 = vmatprep.subr.bf16.mxu0 0
      %4193 = vmatpush1.bf16.xpose.msra.mxu0 0
      %4194 = vmatprep.subr.bf16.mxu0 0
      %4195 = vmatpush1.bf16.xpose.msra.mxu0 %v4184
      %4196 = vmatprep.subr.bf16.mxu0 0
      %4197 = vmatpush1.bf16.xpose.msra.mxu0 %v4181
      %4198 = vmatprep.subr.bf16.mxu0 0
      %4199 = vmatpush1.bf16.xpose.msra.mxu0 %v4178
      %4200 = vmatprep.subr.bf16.mxu0 0
      %4201 = vmatpush1.bf16.xpose.msra.mxu0 %v4175
      %4202 = vmatprep.subr.bf16.mxu0 0
      %4203 = vmatpush2.bf16.xpose.msra.mxu0 0
      %4204 = vmatprep.subr.bf16.mxu0 0
      %4205 = vmatpush2.bf16.xpose.msra.mxu0 0
      %4206 = vmatprep.subr.bf16.mxu0 0
      %4207 = vmatpush2.bf16.xpose.msra.mxu0 0
      %4208 = vmatprep.subr.bf16.mxu0 0
      %4209 = vmatpush2.bf16.xpose.msra.mxu0 0
      %4210 = vmatprep.subr.bf16.mxu0 0
      %4211 = vmatpush2.bf16.xpose.msra.mxu0 0
      %4212 = vmatprep.subr.bf16.mxu0 0
      %4213 = vmatpush2.bf16.xpose.msra.mxu0 0
      %4214 = vmatprep.subr.bf16.mxu0 0
      %4215 = vmatpush2.bf16.xpose.msra.mxu0 0
      %4216 = vmatprep.subr.bf16.mxu0 0
      %4217 = vmatpush2.bf16.xpose.msra.mxu0 0
      %4218 = vmatprep.mubr.bf16.mxu0 0
      %4219 = vmatmul.mubr.bf16.gmra.mxu0 %v4163
      %v4220 = vpop.f32.mrf.mxu0
      %v4221 = vadd.f32 0.0, %v4220
      %v4222 = vpop.f32.mrf.mxu0
      %v4223 = vpop.f32.mrf.mxu0
      %v4224 = vadd.f32 0.0, %v4223
      %v4225 = vpop.f32.mrf.mxu0
      %4226 = vmatprep.mubr.bf16.mxu0 0
      %4227 = vmatmul.mubr.bf16.gmra.mxu0 %v4166
      %v4228 = vpop.f32.mrf.mxu0
      %v4229 = vadd.f32 0.0, %v4228
      %v4230 = vpop.f32.mrf.mxu0
      %v4231 = vpop.f32.mrf.mxu0
      %v4232 = vadd.f32 0.0, %v4231
      %v4233 = vpop.f32.mrf.mxu0
      %4234 = vmatprep.mubr.bf16.mxu0 0
      %4235 = vmatmul.mubr.bf16.gmra.mxu0 %v4169
      %v4236 = vpop.f32.mrf.mxu0
      %v4237 = vadd.f32 0.0, %v4236
      %v4238 = vpop.f32.mrf.mxu0
      %v4239 = vpop.f32.mrf.mxu0
      %v4240 = vadd.f32 0.0, %v4239
      %v4241 = vpop.f32.mrf.mxu0
      %4242 = vmatprep.mubr.bf16.mxu0 0
      %4243 = vmatmul.mubr.bf16.gmra.mxu0 %v4172
      %v4244 = vpop.f32.mrf.mxu0
      %v4245 = vadd.f32 0.0, %v4244
      %v4246 = vpop.f32.mrf.mxu0
      %v4247 = vpop.f32.mrf.mxu0
      %v4248 = vpop.f32.mrf.mxu0
      %4249 = vdwg.mxu0
      %v4250 = vmul.f32 %v4133, 0.35355338
      %v4251 = vmul.f32 %v4136, 0.35355338
      %v4252 = vmul.f32 %v4141, 0.35355338
      %v4253 = vmul.f32 %v4144, 0.35355338
      %v4254 = vmul.f32 %v4149, 0.35355338
      %v4255 = vmul.f32 %v4152, 0.35355338
      %v4256 = vmul.f32 %v4157, 0.35355338
      %v4257 = vmul.f32 %v4221, 0.35355338
      %v4258 = vmul.f32 %v4224, 0.35355338
      %v4259 = vmul.f32 %v4229, 0.35355338
      %v4260 = vmul.f32 %v4232, 0.35355338
      %v4261 = vmul.f32 %v4237, 0.35355338
      %v4262 = vmul.f32 %v4240, 0.35355338
      %v4263 = vmul.f32 %v4245, 0.35355338
      %v4264 = vadd.f32 %v4250, %v1254
      %v4265 = vadd.f32 %v4251, %v1254
      %v4266 = vadd.f32 %v4252, %v1254
      %v4267 = vadd.f32 %v4253, %v1254
      %v4268 = vadd.f32 %v4254, %v1254
      %v4269 = vadd.f32 %v4255, %v1254
      %v4270 = vadd.f32 %v4256, %v1254
      %v4271 = vadd.f32 %v4257, %v1254
      %v4272 = vadd.f32 %v4258, %v1254
      %v4273 = vadd.f32 %v4259, %v1254
      %v4274 = vadd.f32 %v4260, %v1254
      %v4275 = vadd.f32 %v4261, %v1254
      %v4276 = vadd.f32 %v4262, %v1254
      %v4277 = vadd.f32 %v4263, %v1254
      %v4278 = vsel %vm1269, %v4264, -inf
      %4279 = vmax.xlane.f32.xlu0 %v4278
      %v4280 = vpop.xlane.xlu0 %4279
      %v4281 = vsel %vm1269, %v4265, -inf
      %4282 = vmax.xlane.f32.xlu0 %v4281
      %v4283 = vpop.xlane.xlu0 %4282
      %v4284 = vsel %vm1269, %v4266, -inf
      %4285 = vmax.xlane.f32.xlu0 %v4284
      %v4286 = vpop.xlane.xlu0 %4285
      %v4287 = vsel %vm1269, %v4267, -inf
      %4288 = vmax.xlane.f32.xlu0 %v4287
      %v4289 = vpop.xlane.xlu0 %4288
      %v4290 = vsel %vm1269, %v4268, -inf
      %4291 = vmax.xlane.f32.xlu0 %v4290
      %v4292 = vpop.xlane.xlu0 %4291
      %v4293 = vsel %vm1269, %v4269, -inf
      %4294 = vmax.xlane.f32.xlu0 %v4293
      %v4295 = vpop.xlane.xlu0 %4294
      %v4296 = vsel %vm1269, %v4270, -inf
      %4297 = vmax.xlane.f32.xlu0 %v4296
      %v4298 = vpop.xlane.xlu0 %4297
      %v4299 = vsel %vm1269, %v4271, -inf
      %4300 = vmax.xlane.f32.xlu0 %v4299
      %v4301 = vpop.xlane.xlu0 %4300
      %v4302 = vsel %vm1269, %v4272, -inf
      %4303 = vmax.xlane.f32.xlu0 %v4302
      %v4304 = vpop.xlane.xlu0 %4303
      %v4305 = vsel %vm1269, %v4273, -inf
      %4306 = vmax.xlane.f32.xlu0 %v4305
      %v4307 = vpop.xlane.xlu0 %4306
      %v4308 = vsel %vm1269, %v4274, -inf
      %4309 = vmax.xlane.f32.xlu0 %v4308
      %v4310 = vpop.xlane.xlu0 %4309
      %v4311 = vsel %vm1269, %v4275, -inf
      %4312 = vmax.xlane.f32.xlu0 %v4311
      %v4313 = vpop.xlane.xlu0 %4312
      %v4314 = vsel %vm1269, %v4276, -inf
      %4315 = vmax.xlane.f32.xlu0 %v4314
      %v4316 = vpop.xlane.xlu0 %4315
      %v4317 = vsel %vm1269, %v4277, -inf
      %4318 = vmax.xlane.f32.xlu0 %v4317
      %v4319 = vpop.xlane.xlu0 %4318
      %v4320 = vsub.f32 %v4264, %v4280
      %v4321 = vsub.f32 %v4265, %v4283
      %v4322 = vsub.f32 %v4266, %v4286
      %v4323 = vsub.f32 %v4267, %v4289
      %v4324 = vsub.f32 %v4268, %v4292
      %v4325 = vsub.f32 %v4269, %v4295
      %v4326 = vsub.f32 %v4270, %v4298
      %v4327 = vsub.f32 %v4271, %v4301
      %v4328 = vsub.f32 %v4272, %v4304
      %v4329 = vsub.f32 %v4273, %v4307
      %v4330 = vsub.f32 %v4274, %v4310
      %v4331 = vsub.f32 %v4275, %v4313
      %v4332 = vsub.f32 %v4276, %v4316
      %v4333 = vsub.f32 %v4277, %v4319
      %v4334 = vmul.f32 %v4320, 1.442695
      %v4335 = vpow.pop %v4334
      %v4336 = vmul.f32 %v4321, 1.442695
      %v4337 = vpow.pop %v4336
      %v4338 = vmul.f32 %v4322, 1.442695
      %v4339 = vpow.pop %v4338
      %v4340 = vmul.f32 %v4323, 1.442695
      %v4341 = vpow.pop %v4340
      %v4342 = vmul.f32 %v4324, 1.442695
      %v4343 = vpow.pop %v4342
      %v4344 = vmul.f32 %v4325, 1.442695
      %v4345 = vpow.pop %v4344
      %v4346 = vmul.f32 %v4326, 1.442695
      %v4347 = vpow.pop %v4346
      %v4348 = vmul.f32 %v4327, 1.442695
      %v4349 = vpow.pop %v4348
      %v4350 = vmul.f32 %v4328, 1.442695
      %v4351 = vpow.pop %v4350
      %v4352 = vmul.f32 %v4329, 1.442695
      %v4353 = vpow.pop %v4352
      %v4354 = vmul.f32 %v4330, 1.442695
      %v4355 = vpow.pop %v4354
      %v4356 = vmul.f32 %v4331, 1.442695
      %v4357 = vpow.pop %v4356
      %v4358 = vmul.f32 %v4332, 1.442695
      %v4359 = vpow.pop %v4358
      %v4360 = vmul.f32 %v4333, 1.442695
      %v4361 = vpow.pop %v4360
      %v4362 = vsel %vm1269, %v4335, 0.0
      %4363 = vadd.xlane.f32.xlu0 %v4362
      %v4364 = vpop.xlane.xlu0 %4363
      %v4365 = vsel %vm1269, %v4337, 0.0
      %4366 = vadd.xlane.f32.xlu0 %v4365
      %v4367 = vpop.xlane.xlu0 %4366
      %v4368 = vsel %vm1269, %v4339, 0.0
      %4369 = vadd.xlane.f32.xlu0 %v4368
      %v4370 = vpop.xlane.xlu0 %4369
      %v4371 = vsel %vm1269, %v4341, 0.0
      %4372 = vadd.xlane.f32.xlu0 %v4371
      %v4373 = vpop.xlane.xlu0 %4372
      %v4374 = vsel %vm1269, %v4343, 0.0
      %4375 = vadd.xlane.f32.xlu0 %v4374
      %v4376 = vpop.xlane.xlu0 %4375
      %v4377 = vsel %vm1269, %v4345, 0.0
      %4378 = vadd.xlane.f32.xlu0 %v4377
      %v4379 = vpop.xlane.xlu0 %4378
      %v4380 = vsel %vm1269, %v4347, 0.0
      %4381 = vadd.xlane.f32.xlu0 %v4380
      %v4382 = vpop.xlane.xlu0 %4381
      %v4383 = vsel %vm1269, %v4349, 0.0
      %4384 = vadd.xlane.f32.xlu0 %v4383
      %v4385 = vpop.xlane.xlu0 %4384
      %v4386 = vsel %vm1269, %v4351, 0.0
      %4387 = vadd.xlane.f32.xlu0 %v4386
      %v4388 = vpop.xlane.xlu0 %4387
      %v4389 = vsel %vm1269, %v4353, 0.0
      %4390 = vadd.xlane.f32.xlu0 %v4389
      %v4391 = vpop.xlane.xlu0 %4390
      %v4392 = vsel %vm1269, %v4355, 0.0
      %4393 = vadd.xlane.f32.xlu0 %v4392
      %v4394 = vpop.xlane.xlu0 %4393
      %v4395 = vsel %vm1269, %v4357, 0.0
      %4396 = vadd.xlane.f32.xlu0 %v4395
      %v4397 = vpop.xlane.xlu0 %4396
      %v4398 = vsel %vm1269, %v4359, 0.0
      %4399 = vadd.xlane.f32.xlu0 %v4398
      %v4400 = vpop.xlane.xlu0 %4399
      %v4401 = vsel %vm1269, %v4361, 0.0
      %4402 = vadd.xlane.f32.xlu0 %v4401
      %v4403 = vpop.xlane.xlu0 %4402
      %v4404 = vrcp.pop %v4364
      %v4405 = vrcp.pop %v4367
      %v4406 = vrcp.pop %v4370
      %v4407 = vrcp.pop %v4373
      %v4408 = vrcp.pop %v4376
      %v4409 = vrcp.pop %v4379
      %v4410 = vrcp.pop %v4382
      %v4411 = vrcp.pop %v4385
      %v4412 = vrcp.pop %v4388
      %v4413 = vrcp.pop %v4391
      %v4414 = vrcp.pop %v4394
      %v4415 = vrcp.pop %v4397
      %v4416 = vrcp.pop %v4400
      %v4417 = vrcp.pop %v4403
      %v4418 = vmul.f32 %v4335, %v4404
      %v4419 = vmul.f32 %v4337, %v4405
      %v4420 = vmul.f32 %v4339, %v4406
      %v4421 = vmul.f32 %v4341, %v4407
      %v4422 = vmul.f32 %v4343, %v4408
      %v4423 = vmul.f32 %v4345, %v4409
      %v4424 = vmul.f32 %v4347, %v4410
      %v4425 = vmul.f32 %v4349, %v4411
      %v4426 = vmul.f32 %v4351, %v4412
      %v4427 = vmul.f32 %v4353, %v4413
      %v4428 = vmul.f32 %v4355, %v4414
      %v4429 = vmul.f32 %v4357, %v4415
      %v4430 = vmul.f32 %v4359, %v4416
      %v4431 = vmul.f32 %v4361, %v4417
      %v4432 = vpack.c.bf16 %v4419, %v4418
      %v4433 = vpack.c.bf16 %v4421, %v4420
      %v4434 = vpack.c.bf16 %v4423, %v4422
      %v4435 = vpack.c.bf16 %v4424, %v4424
      %v4436 = vpack.c.bf16 %v4426, %v4425
      %v4437 = vpack.c.bf16 %v4428, %v4427
      %v4438 = vpack.c.bf16 %v4430, %v4429
      %v4439 = vpack.c.bf16 %v4431, %v4431
      %v4441 = vsel %vm1269, %v4432, 0
      %v4444 = vsel %vm1269, %v4433, 0
      %v4447 = vsel %vm1269, %v4434, 0
      %v4450 = vsel %vm1269, %v4435, 0
      %v4453 = vsel %vm1444, %v4069, 0
      %4455 = vmatprep.subr.bf16.mxu0 0
      %4456 = vmatpush1.bf16.msra.mxu0 0
      %4457 = vmatprep.subr.bf16.mxu0 0
      %4458 = vmatpush1.bf16.msra.mxu0 0
      %4459 = vmatprep.subr.bf16.mxu0 0
      %4460 = vmatpush1.bf16.msra.mxu0 0
      %4461 = vmatprep.subr.bf16.mxu0 0
      %4462 = vmatpush1.bf16.msra.mxu0 0
      %4463 = vmatprep.subr.bf16.mxu0 0
      %4464 = vmatpush1.bf16.msra.mxu0 %v4453
      %4465 = vmatprep.subr.bf16.mxu0 0
      %4466 = vmatpush1.bf16.msra.mxu0 %v4068
      %4467 = vmatprep.subr.bf16.mxu0 0
      %4468 = vmatpush1.bf16.msra.mxu0 %v4067
      %4469 = vmatprep.subr.bf16.mxu0 0
      %4470 = vmatpush1.bf16.msra.mxu0 %v4066
      %4471 = vmatprep.subr.bf16.mxu0 0
      %4472 = vmatpush2.bf16.msra.mxu0 0
      %4473 = vmatprep.subr.bf16.mxu0 0
      %4474 = vmatpush2.bf16.msra.mxu0 0
      %4475 = vmatprep.subr.bf16.mxu0 0
      %4476 = vmatpush2.bf16.msra.mxu0 0
      %4477 = vmatprep.subr.bf16.mxu0 0
      %4478 = vmatpush2.bf16.msra.mxu0 0
      %4479 = vmatprep.subr.bf16.mxu0 0
      %4480 = vmatpush2.bf16.msra.mxu0 0
      %4481 = vmatprep.subr.bf16.mxu0 0
      %4482 = vmatpush2.bf16.msra.mxu0 0
      %4483 = vmatprep.subr.bf16.mxu0 0
      %4484 = vmatpush2.bf16.msra.mxu0 0
      %4485 = vmatprep.subr.bf16.mxu0 0
      %4486 = vmatpush2.bf16.msra.mxu0 0
      %4487 = vmatprep.mubr.bf16.mxu0 0
      %4488 = vmatmul.mubr.bf16.gmra.mxu0 %v4441
      %v4489 = vpop.f32.mrf.mxu0
      %v4490 = vadd.f32 0.0, %v4489
      %v4491 = vpop.f32.mrf.mxu0
      %v4492 = vpop.f32.mrf.mxu0
      %v4493 = vadd.f32 0.0, %v4492
      %v4494 = vpop.f32.mrf.mxu0
      %4495 = vmatprep.mubr.bf16.mxu0 0
      %4496 = vmatmul.mubr.bf16.gmra.mxu0 %v4444
      %v4497 = vpop.f32.mrf.mxu0
      %v4498 = vadd.f32 0.0, %v4497
      %v4499 = vpop.f32.mrf.mxu0
      %v4500 = vpop.f32.mrf.mxu0
      %v4501 = vadd.f32 0.0, %v4500
      %v4502 = vpop.f32.mrf.mxu0
      %4503 = vmatprep.mubr.bf16.mxu0 0
      %4504 = vmatmul.mubr.bf16.gmra.mxu0 %v4447
      %v4505 = vpop.f32.mrf.mxu0
      %v4506 = vadd.f32 0.0, %v4505
      %v4507 = vpop.f32.mrf.mxu0
      %v4508 = vpop.f32.mrf.mxu0
      %v4509 = vadd.f32 0.0, %v4508
      %v4510 = vpop.f32.mrf.mxu0
      %4511 = vmatprep.mubr.bf16.mxu0 0
      %4512 = vmatmul.mubr.bf16.gmra.mxu0 %v4450
      %v4513 = vpop.f32.mrf.mxu0
      %v4514 = vadd.f32 0.0, %v4513
      %v4515 = vpop.f32.mrf.mxu0
      %v4516 = vpop.f32.mrf.mxu0
      %v4517 = vpop.f32.mrf.mxu0
      %4518 = vdwg.mxu0
      %v4520 = vsel %vm1269, %v4436, 0
      %v4523 = vsel %vm1269, %v4437, 0
      %v4526 = vsel %vm1269, %v4438, 0
      %v4529 = vsel %vm1269, %v4439, 0
      %v4532 = vsel %vm1444, %v4073, 0
      %4534 = vmatprep.subr.bf16.mxu0 0
      %4535 = vmatpush1.bf16.msra.mxu0 0
      %4536 = vmatprep.subr.bf16.mxu0 0
      %4537 = vmatpush1.bf16.msra.mxu0 0
      %4538 = vmatprep.subr.bf16.mxu0 0
      %4539 = vmatpush1.bf16.msra.mxu0 0
      %4540 = vmatprep.subr.bf16.mxu0 0
      %4541 = vmatpush1.bf16.msra.mxu0 0
      %4542 = vmatprep.subr.bf16.mxu0 0
      %4543 = vmatpush1.bf16.msra.mxu0 %v4532
      %4544 = vmatprep.subr.bf16.mxu0 0
      %4545 = vmatpush1.bf16.msra.mxu0 %v4072
      %4546 = vmatprep.subr.bf16.mxu0 0
      %4547 = vmatpush1.bf16.msra.mxu0 %v4071
      %4548 = vmatprep.subr.bf16.mxu0 0
      %4549 = vmatpush1.bf16.msra.mxu0 %v4070
      %4550 = vmatprep.subr.bf16.mxu0 0
      %4551 = vmatpush2.bf16.msra.mxu0 0
      %4552 = vmatprep.subr.bf16.mxu0 0
      %4553 = vmatpush2.bf16.msra.mxu0 0
      %4554 = vmatprep.subr.bf16.mxu0 0
      %4555 = vmatpush2.bf16.msra.mxu0 0
      %4556 = vmatprep.subr.bf16.mxu0 0
      %4557 = vmatpush2.bf16.msra.mxu0 0
      %4558 = vmatprep.subr.bf16.mxu0 0
      %4559 = vmatpush2.bf16.msra.mxu0 0
      %4560 = vmatprep.subr.bf16.mxu0 0
      %4561 = vmatpush2.bf16.msra.mxu0 0
      %4562 = vmatprep.subr.bf16.mxu0 0
      %4563 = vmatpush2.bf16.msra.mxu0 0
      %4564 = vmatprep.subr.bf16.mxu0 0
      %4565 = vmatpush2.bf16.msra.mxu0 0
      %4566 = vmatprep.mubr.bf16.mxu0 0
      %4567 = vmatmul.mubr.bf16.gmra.mxu0 %v4520
      %v4568 = vpop.f32.mrf.mxu0
      %v4569 = vadd.f32 0.0, %v4568
      %v4570 = vpop.f32.mrf.mxu0
      %v4571 = vpop.f32.mrf.mxu0
      %v4572 = vadd.f32 0.0, %v4571
      %v4573 = vpop.f32.mrf.mxu0
      %4574 = vmatprep.mubr.bf16.mxu0 0
      %4575 = vmatmul.mubr.bf16.gmra.mxu0 %v4523
      %v4576 = vpop.f32.mrf.mxu0
      %v4577 = vadd.f32 0.0, %v4576
      %v4578 = vpop.f32.mrf.mxu0
      %v4579 = vpop.f32.mrf.mxu0
      %v4580 = vadd.f32 0.0, %v4579
      %v4581 = vpop.f32.mrf.mxu0
      %4582 = vmatprep.mubr.bf16.mxu0 0
      %4583 = vmatmul.mubr.bf16.gmra.mxu0 %v4526
      %v4584 = vpop.f32.mrf.mxu0
      %v4585 = vadd.f32 0.0, %v4584
      %v4586 = vpop.f32.mrf.mxu0
      %v4587 = vpop.f32.mrf.mxu0
      %v4588 = vadd.f32 0.0, %v4587
      %v4589 = vpop.f32.mrf.mxu0
      %4590 = vmatprep.mubr.bf16.mxu0 0
      %4591 = vmatmul.mubr.bf16.gmra.mxu0 %v4529
      %v4592 = vpop.f32.mrf.mxu0
      %v4593 = vadd.f32 0.0, %v4592
      %v4594 = vpop.f32.mrf.mxu0
      %v4595 = vpop.f32.mrf.mxu0
      %v4596 = vpop.f32.mrf.mxu0
      %4597 = vdwg.mxu0
      %v4598 = vpack.c.bf16 %v4493, %v4490
      %v4599 = vpack.c.bf16 %v4501, %v4498
      %v4600 = vpack.c.bf16 %v4509, %v4506
      %v4601 = vpack.c.bf16 %v4569, %v4514
      %v4602 = vpack.c.bf16 %v4577, %v4572
      %v4603 = vpack.c.bf16 %v4585, %v4580
      %v4604 = vpack.c.bf16 %v4593, %v4588
      %s4605 = scalar_lea.vmem %s395, 12
      %v4606 = vld [vmem:[%s4605] sm:$0xf]
      %v4608 = vsel %vm1060, %v4598, 0
      %v4611 = vsel %vm1060, %v4599, 0
      %v4614 = vsel %vm1060, %v4600, 0
      %v4617 = vsel %vm1060, %v4601, 0
      %v4620 = vsel %vm1060, %v4602, 0
      %v4623 = vsel %vm1060, %v4603, 0
      %v4626 = vsel %vm1060, %v4604, 0
      %v4629 = vsel %vm1444, %v4606, 0
      %4631 = vmatprep.subr.bf16.mxu0 0
      %4632 = vmatpush1.bf16.msra.mxu0 0
      %4633 = vmatprep.subr.bf16.mxu0 0
      %4634 = vmatpush1.bf16.msra.mxu0 0
      %4635 = vmatprep.subr.bf16.mxu0 0
      %4636 = vmatpush1.bf16.msra.mxu0 0
      %4637 = vmatprep.subr.bf16.mxu0 0
      %4638 = vmatpush1.bf16.msra.mxu0 0
      %4639 = vmatprep.subr.bf16.mxu0 0
      %4640 = vmatpush1.bf16.msra.mxu0 0
      %4641 = vmatprep.subr.bf16.mxu0 0
      %4642 = vmatpush1.bf16.msra.mxu0 0
      %4643 = vmatprep.subr.bf16.mxu0 0
      %4644 = vmatpush1.bf16.msra.mxu0 0
      %4645 = vmatprep.subr.bf16.mxu0 0
      %4646 = vmatpush1.bf16.msra.mxu0 %v4629
      %4647 = vmatprep.subr.bf16.mxu0 0
      %4648 = vmatpush2.bf16.msra.mxu0 0
      %4649 = vmatprep.subr.bf16.mxu0 0
      %4650 = vmatpush2.bf16.msra.mxu0 0
      %4651 = vmatprep.subr.bf16.mxu0 0
      %4652 = vmatpush2.bf16.msra.mxu0 0
      %4653 = vmatprep.subr.bf16.mxu0 0
      %4654 = vmatpush2.bf16.msra.mxu0 0
      %4655 = vmatprep.subr.bf16.mxu0 0
      %4656 = vmatpush2.bf16.msra.mxu0 0
      %4657 = vmatprep.subr.bf16.mxu0 0
      %4658 = vmatpush2.bf16.msra.mxu0 0
      %4659 = vmatprep.subr.bf16.mxu0 0
      %4660 = vmatpush2.bf16.msra.mxu0 0
      %4661 = vmatprep.subr.bf16.mxu0 0
      %4662 = vmatpush2.bf16.msra.mxu0 0
      %4663 = vmatprep.mubr.bf16.mxu0 0
      %4664 = vmatmul.mubr.bf16.gmra.mxu0 %v4608
      %v4665 = vpop.f32.mrf.mxu0
      %v4666 = vadd.f32 0.0, %v4665
      %v4667 = vpop.f32.mrf.mxu0
      %v4668 = vpop.f32.mrf.mxu0
      %v4669 = vadd.f32 0.0, %v4668
      %v4670 = vpop.f32.mrf.mxu0
      %4671 = vmatprep.mubr.bf16.mxu0 0
      %4672 = vmatmul.mubr.bf16.gmra.mxu0 %v4611
      %v4673 = vpop.f32.mrf.mxu0
      %v4674 = vadd.f32 0.0, %v4673
      %v4675 = vpop.f32.mrf.mxu0
      %v4676 = vpop.f32.mrf.mxu0
      %v4677 = vadd.f32 0.0, %v4676
      %v4678 = vpop.f32.mrf.mxu0
      %4679 = vmatprep.mubr.bf16.mxu0 0
      %4680 = vmatmul.mubr.bf16.gmra.mxu0 %v4614
      %v4681 = vpop.f32.mrf.mxu0
      %v4682 = vadd.f32 0.0, %v4681
      %v4683 = vpop.f32.mrf.mxu0
      %v4684 = vpop.f32.mrf.mxu0
      %v4685 = vadd.f32 0.0, %v4684
      %v4686 = vpop.f32.mrf.mxu0
      %4687 = vmatprep.mubr.bf16.mxu0 0
      %4688 = vmatmul.mubr.bf16.gmra.mxu0 %v4617
      %v4689 = vpop.f32.mrf.mxu0
      %v4690 = vadd.f32 0.0, %v4689
      %v4691 = vpop.f32.mrf.mxu0
      %v4692 = vpop.f32.mrf.mxu0
      %v4693 = vadd.f32 0.0, %v4692
      %v4694 = vpop.f32.mrf.mxu0
      %4695 = vmatprep.mubr.bf16.mxu0 0
      %4696 = vmatmul.mubr.bf16.gmra.mxu0 %v4620
      %v4697 = vpop.f32.mrf.mxu0
      %v4698 = vadd.f32 0.0, %v4697
      %v4699 = vpop.f32.mrf.mxu0
      %v4700 = vpop.f32.mrf.mxu0
      %v4701 = vadd.f32 0.0, %v4700
      %v4702 = vpop.f32.mrf.mxu0
      %4703 = vmatprep.mubr.bf16.mxu0 0
      %4704 = vmatmul.mubr.bf16.gmra.mxu0 %v4623
      %v4705 = vpop.f32.mrf.mxu0
      %v4706 = vadd.f32 0.0, %v4705
      %v4707 = vpop.f32.mrf.mxu0
      %v4708 = vpop.f32.mrf.mxu0
      %v4709 = vadd.f32 0.0, %v4708
      %v4710 = vpop.f32.mrf.mxu0
      %4711 = vmatprep.mubr.bf16.mxu0 0
      %4712 = vmatmul.mubr.bf16.gmra.mxu0 %v4626
      %v4713 = vpop.f32.mrf.mxu0
      %v4714 = vadd.f32 0.0, %v4713
      %v4715 = vpop.f32.mrf.mxu0
      %v4716 = vpop.f32.mrf.mxu0
      %v4717 = vadd.f32 0.0, %v4716
      %v4718 = vpop.f32.mrf.mxu0
      %4719 = vdwg.mxu0
      %v4720 = vadd.f32 %v3709, %v4666
      %v4721 = vadd.f32 %v3710, %v4669
      %v4722 = vadd.f32 %v3711, %v4674
      %v4723 = vadd.f32 %v3712, %v4677
      %v4724 = vadd.f32 %v3713, %v4682
      %v4725 = vadd.f32 %v3714, %v4685
      %v4726 = vadd.f32 %v3715, %v4690
      %v4727 = vadd.f32 %v3716, %v4693
      %v4728 = vadd.f32 %v3717, %v4698
      %v4729 = vadd.f32 %v3718, %v4701
      %v4730 = vadd.f32 %v3719, %v4706
      %v4731 = vadd.f32 %v3720, %v4709
      %v4732 = vadd.f32 %v3721, %v4714
      %v4733 = vadd.f32 %v3722, %v4717
      %v4734 = vadd.f32 %v445, %v4720
      %v4735 = vadd.f32 %v446, %v4721
      %v4736 = vadd.f32 %v447, %v4722
      %v4737 = vadd.f32 %v448, %v4723
      %v4738 = vadd.f32 %v449, %v4724
      %v4739 = vadd.f32 %v450, %v4725
      %v4740 = vadd.f32 %v451, %v4726
      %v4741 = vadd.f32 %v452, %v4727
      %v4742 = vadd.f32 %v453, %v4728
      %v4743 = vadd.f32 %v454, %v4729
      %v4744 = vadd.f32 %v455, %v4730
      %v4745 = vadd.f32 %v456, %v4731
      %v4746 = vadd.f32 %v457, %v4732
      %v4747 = vadd.f32 %v458, %v4733
      %v4748 = vlaneseq
      %v4749 = vshrl.u32 %v4748, 7
      %v4750 = vsub.s32 5, %v4749
      %v4751 = vrot.slane %v459, %v4750
      %v4752 = vadd.f32 %v4734, %v4751
      %v4753 = vadd.f32 %v4735, %v4751
      %v4754 = vadd.f32 %v4736, %v4751
      %v4755 = vadd.f32 %v4737, %v4751
      %v4756 = vadd.f32 %v4738, %v4751
      %v4757 = vadd.f32 %v4739, %v4751
      %v4758 = vadd.f32 %v4740, %v4751
      %v4759 = vadd.f32 %v4741, %v4751
      %v4760 = vadd.f32 %v4742, %v4751
      %v4761 = vadd.f32 %v4743, %v4751
      %v4762 = vadd.f32 %v4744, %v4751
      %v4763 = vadd.f32 %v4745, %v4751
      %v4764 = vadd.f32 %v4746, %v4751
      %v4765 = vadd.f32 %v4747, %v4751
      %v4766 = vsel %vm461, %v4752, 0.0
      %4767 = vadd.xlane.f32.xlu0 %v4766
      %v4768 = vpop.xlane.xlu0 %4767
      %v4769 = vsel %vm461, %v4753, 0.0
      %4770 = vadd.xlane.f32.xlu0 %v4769
      %v4771 = vpop.xlane.xlu0 %4770
      %v4772 = vsel %vm461, %v4754, 0.0
      %4773 = vadd.xlane.f32.xlu0 %v4772
      %v4774 = vpop.xlane.xlu0 %4773
      %v4775 = vsel %vm461, %v4755, 0.0
      %4776 = vadd.xlane.f32.xlu0 %v4775
      %v4777 = vpop.xlane.xlu0 %4776
      %v4778 = vsel %vm461, %v4756, 0.0
      %4779 = vadd.xlane.f32.xlu0 %v4778
      %v4780 = vpop.xlane.xlu0 %4779
      %v4781 = vsel %vm461, %v4757, 0.0
      %4782 = vadd.xlane.f32.xlu0 %v4781
      %v4783 = vpop.xlane.xlu0 %4782
      %v4784 = vsel %vm461, %v4758, 0.0
      %4785 = vadd.xlane.f32.xlu0 %v4784
      %v4786 = vpop.xlane.xlu0 %4785
      %v4787 = vsel %vm461, %v4759, 0.0
      %4788 = vadd.xlane.f32.xlu0 %v4787
      %v4789 = vpop.xlane.xlu0 %4788
      %v4790 = vsel %vm461, %v4760, 0.0
      %4791 = vadd.xlane.f32.xlu0 %v4790
      %v4792 = vpop.xlane.xlu0 %4791
      %v4793 = vsel %vm461, %v4761, 0.0
      %4794 = vadd.xlane.f32.xlu0 %v4793
      %v4795 = vpop.xlane.xlu0 %4794
      %v4796 = vsel %vm461, %v4762, 0.0
      %4797 = vadd.xlane.f32.xlu0 %v4796
      %v4798 = vpop.xlane.xlu0 %4797
      %v4799 = vsel %vm461, %v4763, 0.0
      %4800 = vadd.xlane.f32.xlu0 %v4799
      %v4801 = vpop.xlane.xlu0 %4800
      %v4802 = vsel %vm461, %v4764, 0.0
      %4803 = vadd.xlane.f32.xlu0 %v4802
      %v4804 = vpop.xlane.xlu0 %4803
      %v4805 = vsel %vm461, %v4765, 0.0
      %4806 = vadd.xlane.f32.xlu0 %v4805
      %v4807 = vpop.xlane.xlu0 %4806
      %v4808 = vmul.f32 %v4768, %v504
      %v4809 = vmul.f32 %v4771, %v504
      %v4810 = vmul.f32 %v4774, %v504
      %v4811 = vmul.f32 %v4777, %v504
      %v4812 = vmul.f32 %v4780, %v504
      %v4813 = vmul.f32 %v4783, %v504
      %v4814 = vmul.f32 %v4786, %v504
      %v4815 = vmul.f32 %v4789, %v504
      %v4816 = vmul.f32 %v4792, %v504
      %v4817 = vmul.f32 %v4795, %v504
      %v4818 = vmul.f32 %v4798, %v504
      %v4819 = vmul.f32 %v4801, %v504
      %v4820 = vmul.f32 %v4804, %v504
      %v4821 = vmul.f32 %v4807, %v504
      %v4822 = vsub.f32 %v4752, %v4808
      %v4823 = vsub.f32 %v4753, %v4809
      %v4824 = vsub.f32 %v4754, %v4810
      %v4825 = vsub.f32 %v4755, %v4811
      %v4826 = vsub.f32 %v4756, %v4812
      %v4827 = vsub.f32 %v4757, %v4813
      %v4828 = vsub.f32 %v4758, %v4814
      %v4829 = vsub.f32 %v4759, %v4815
      %v4830 = vsub.f32 %v4760, %v4816
      %v4831 = vsub.f32 %v4761, %v4817
      %v4832 = vsub.f32 %v4762, %v4818
      %v4833 = vsub.f32 %v4763, %v4819
      %v4834 = vsub.f32 %v4764, %v4820
      %v4835 = vsub.f32 %v4765, %v4821
      %v4836 = vmul.f32 %v4822, %v4822
      %v4837 = vmul.f32 %v4823, %v4823
      %v4838 = vmul.f32 %v4824, %v4824
      %v4839 = vmul.f32 %v4825, %v4825
      %v4840 = vmul.f32 %v4826, %v4826
      %v4841 = vmul.f32 %v4827, %v4827
      %v4842 = vmul.f32 %v4828, %v4828
      %v4843 = vmul.f32 %v4829, %v4829
      %v4844 = vmul.f32 %v4830, %v4830
      %v4845 = vmul.f32 %v4831, %v4831
      %v4846 = vmul.f32 %v4832, %v4832
      %v4847 = vmul.f32 %v4833, %v4833
      %v4848 = vmul.f32 %v4834, %v4834
      %v4849 = vmul.f32 %v4835, %v4835
      %v4850 = vsel %vm461, %v4836, 0.0
      %4851 = vadd.xlane.f32.xlu0 %v4850
      %v4852 = vpop.xlane.xlu0 %4851
      %v4853 = vsel %vm461, %v4837, 0.0
      %4854 = vadd.xlane.f32.xlu0 %v4853
      %v4855 = vpop.xlane.xlu0 %4854
      %v4856 = vsel %vm461, %v4838, 0.0
      %4857 = vadd.xlane.f32.xlu0 %v4856
      %v4858 = vpop.xlane.xlu0 %4857
      %v4859 = vsel %vm461, %v4839, 0.0
      %4860 = vadd.xlane.f32.xlu0 %v4859
      %v4861 = vpop.xlane.xlu0 %4860
      %v4862 = vsel %vm461, %v4840, 0.0
      %4863 = vadd.xlane.f32.xlu0 %v4862
      %v4864 = vpop.xlane.xlu0 %4863
      %v4865 = vsel %vm461, %v4841, 0.0
      %4866 = vadd.xlane.f32.xlu0 %v4865
      %v4867 = vpop.xlane.xlu0 %4866
      %v4868 = vsel %vm461, %v4842, 0.0
      %4869 = vadd.xlane.f32.xlu0 %v4868
      %v4870 = vpop.xlane.xlu0 %4869
      %v4871 = vsel %vm461, %v4843, 0.0
      %4872 = vadd.xlane.f32.xlu0 %v4871
      %v4873 = vpop.xlane.xlu0 %4872
      %v4874 = vsel %vm461, %v4844, 0.0
      %4875 = vadd.xlane.f32.xlu0 %v4874
      %v4876 = vpop.xlane.xlu0 %4875
      %v4877 = vsel %vm461, %v4845, 0.0
      %4878 = vadd.xlane.f32.xlu0 %v4877
      %v4879 = vpop.xlane.xlu0 %4878
      %v4880 = vsel %vm461, %v4846, 0.0
      %4881 = vadd.xlane.f32.xlu0 %v4880
      %v4882 = vpop.xlane.xlu0 %4881
      %v4883 = vsel %vm461, %v4847, 0.0
      %4884 = vadd.xlane.f32.xlu0 %v4883
      %v4885 = vpop.xlane.xlu0 %4884
      %v4886 = vsel %vm461, %v4848, 0.0
      %4887 = vadd.xlane.f32.xlu0 %v4886
      %v4888 = vpop.xlane.xlu0 %4887
      %v4889 = vsel %vm461, %v4849, 0.0
      %4890 = vadd.xlane.f32.xlu0 %v4889
      %v4891 = vpop.xlane.xlu0 %4890
      %v4892 = vmul.f32 %v4852, %v504
      %v4893 = vmul.f32 %v4855, %v504
      %v4894 = vmul.f32 %v4858, %v504
      %v4895 = vmul.f32 %v4861, %v504
      %v4896 = vmul.f32 %v4864, %v504
      %v4897 = vmul.f32 %v4867, %v504
      %v4898 = vmul.f32 %v4870, %v504
      %v4899 = vmul.f32 %v4873, %v504
      %v4900 = vmul.f32 %v4876, %v504
      %v4901 = vmul.f32 %v4879, %v504
      %v4902 = vmul.f32 %v4882, %v504
      %v4903 = vmul.f32 %v4885, %v504
      %v4904 = vmul.f32 %v4888, %v504
      %v4905 = vmul.f32 %v4891, %v504
      %v4906 = vadd.f32 %v4892, 1e-05
      %v4907 = vadd.f32 %v4893, 1e-05
      %v4908 = vadd.f32 %v4894, 1e-05
      %v4909 = vadd.f32 %v4895, 1e-05
      %v4910 = vadd.f32 %v4896, 1e-05
      %v4911 = vadd.f32 %v4897, 1e-05
      %v4912 = vadd.f32 %v4898, 1e-05
      %v4913 = vadd.f32 %v4899, 1e-05
      %v4914 = vadd.f32 %v4900, 1e-05
      %v4915 = vadd.f32 %v4901, 1e-05
      %v4916 = vadd.f32 %v4902, 1e-05
      %v4917 = vadd.f32 %v4903, 1e-05
      %v4918 = vadd.f32 %v4904, 1e-05
      %v4919 = vadd.f32 %v4905, 1e-05
      %v4920 = vrsqrt.pop %v4906
      %v4921 = vrsqrt.pop %v4907
      %v4922 = vrsqrt.pop %v4908
      %v4923 = vrsqrt.pop %v4909
      %v4924 = vrsqrt.pop %v4910
      %v4925 = vrsqrt.pop %v4911
      %v4926 = vrsqrt.pop %v4912
      %v4927 = vrsqrt.pop %v4913
      %v4928 = vrsqrt.pop %v4914
      %v4929 = vrsqrt.pop %v4915
      %v4930 = vrsqrt.pop %v4916
      %v4931 = vrsqrt.pop %v4917
      %v4932 = vrsqrt.pop %v4918
      %v4933 = vrsqrt.pop %v4919
      %v4934 = vmul.f32 %v4822, %v4920
      %v4935 = vmul.f32 %v4823, %v4921
      %v4936 = vmul.f32 %v4824, %v4922
      %v4937 = vmul.f32 %v4825, %v4923
      %v4938 = vmul.f32 %v4826, %v4924
      %v4939 = vmul.f32 %v4827, %v4925
      %v4940 = vmul.f32 %v4828, %v4926
      %v4941 = vmul.f32 %v4829, %v4927
      %v4942 = vmul.f32 %v4830, %v4928
      %v4943 = vmul.f32 %v4831, %v4929
      %v4944 = vmul.f32 %v4832, %v4930
      %v4945 = vmul.f32 %v4833, %v4931
      %v4946 = vmul.f32 %v4834, %v4932
      %v4947 = vmul.f32 %v4835, %v4933
      %v4948 = vlaneseq
      %v4949 = vshrl.u32 %v4948, 7
      %v4950 = vsub.s32 6, %v4949
      %v4951 = vrot.slane %v459, %v4950
      %v4952 = vmul.f32 %v4934, %v4951
      %v4953 = vmul.f32 %v4935, %v4951
      %v4954 = vmul.f32 %v4936, %v4951
      %v4955 = vmul.f32 %v4937, %v4951
      %v4956 = vmul.f32 %v4938, %v4951
      %v4957 = vmul.f32 %v4939, %v4951
      %v4958 = vmul.f32 %v4940, %v4951
      %v4959 = vmul.f32 %v4941, %v4951
      %v4960 = vmul.f32 %v4942, %v4951
      %v4961 = vmul.f32 %v4943, %v4951
      %v4962 = vmul.f32 %v4944, %v4951
      %v4963 = vmul.f32 %v4945, %v4951
      %v4964 = vmul.f32 %v4946, %v4951
      %v4965 = vmul.f32 %v4947, %v4951
      %v4966 = vlaneseq
      %v4967 = vshrl.u32 %v4966, 7
      %v4968 = vsub.s32 7, %v4967
      %v4969 = vrot.slane %v459, %v4968
      %v4970 = vadd.f32 %v4952, %v4969
      %v4971 = vadd.f32 %v4953, %v4969
      %v4972 = vadd.f32 %v4954, %v4969
      %v4973 = vadd.f32 %v4955, %v4969
      %v4974 = vadd.f32 %v4956, %v4969
      %v4975 = vadd.f32 %v4957, %v4969
      %v4976 = vadd.f32 %v4958, %v4969
      %v4977 = vadd.f32 %v4959, %v4969
      %v4978 = vadd.f32 %v4960, %v4969
      %v4979 = vadd.f32 %v4961, %v4969
      %v4980 = vadd.f32 %v4962, %v4969
      %v4981 = vadd.f32 %v4963, %v4969
      %v4982 = vadd.f32 %v4964, %v4969
      %v4983 = vadd.f32 %v4965, %v4969
      %v4984 = vpack.c.bf16 %v4971, %v4970
      %v4985 = vpack.c.bf16 %v4973, %v4972
      %v4986 = vpack.c.bf16 %v4975, %v4974
      %v4987 = vpack.c.bf16 %v4977, %v4976
      %v4988 = vpack.c.bf16 %v4979, %v4978
      %v4989 = vpack.c.bf16 %v4981, %v4980
      %v4990 = vpack.c.bf16 %v4983, %v4982
      %v4991 = vld [vmem:[%s400] sm:$0xf]
      %v4992 = vld [vmem:[%s400 + $0x4] sm:$0xf]
      %v4993 = vld [vmem:[%s400 + $0x8] sm:$0xf]
      %v4994 = vld [vmem:[%s400 + $0xc] sm:$0xf]
      %v4995 = vlaneseq
      %v4996 = vshrl.u32 %v4995, 7
      %v4997 = vsub.s32 0, %v4996
      %v4998 = vrot.slane %v460, %v4997
      %v5003 = vunpack.c.l.b16 %v4991
      %v5004 = vunpack.c.l.b16 %v4992
      %v5005 = vunpack.c.l.b16 %v4993
      %v5006 = vunpack.c.l.b16 %v4994
      %v5007 = vpack.c.b16 %v5004, %v5003
      %v5008 = vpack.c.b16 %v5006, %v5005
      %v5012 = vsel %vm461, %v4984, 0
      %v5015 = vsel %vm461, %v4985, 0
      %v5018 = vsel %vm461, %v4986, 0
      %v5021 = vsel %vm461, %v4987, 0
      %v5024 = vsel %vm461, %v4988, 0
      %v5027 = vsel %vm461, %v4989, 0
      %v5030 = vsel %vm461, %v4990, 0
      %5032 = vmatprep.subr.bf16.mxu0 0
      %5033 = vmatpush1.bf16.msra.mxu0 0
      %5034 = vmatprep.subr.bf16.mxu0 0
      %5035 = vmatpush1.bf16.msra.mxu0 0
      %5036 = vmatprep.subr.bf16.mxu0 0
      %5037 = vmatpush1.bf16.msra.mxu0 0
      %5038 = vmatprep.subr.bf16.mxu0 0
      %5039 = vmatpush1.bf16.msra.mxu0 0
      %5040 = vmatprep.subr.bf16.mxu0 0
      %5041 = vmatpush1.bf16.msra.mxu0 0
      %5042 = vmatprep.subr.bf16.mxu0 0
      %5043 = vmatpush1.bf16.msra.mxu0 0
      %5044 = vmatprep.subr.bf16.mxu0 0
      %5045 = vmatpush1.bf16.msra.mxu0 %v5008
      %5046 = vmatprep.subr.bf16.mxu0 0
      %5047 = vmatpush1.bf16.msra.mxu0 %v5007
      %5048 = vmatprep.subr.bf16.mxu0 0
      %5049 = vmatpush2.bf16.msra.mxu0 0
      %5050 = vmatprep.subr.bf16.mxu0 0
      %5051 = vmatpush2.bf16.msra.mxu0 0
      %5052 = vmatprep.subr.bf16.mxu0 0
      %5053 = vmatpush2.bf16.msra.mxu0 0
      %5054 = vmatprep.subr.bf16.mxu0 0
      %5055 = vmatpush2.bf16.msra.mxu0 0
      %5056 = vmatprep.subr.bf16.mxu0 0
      %5057 = vmatpush2.bf16.msra.mxu0 0
      %5058 = vmatprep.subr.bf16.mxu0 0
      %5059 = vmatpush2.bf16.msra.mxu0 0
      %5060 = vmatprep.subr.bf16.mxu0 0
      %5061 = vmatpush2.bf16.msra.mxu0 0
      %5062 = vmatprep.subr.bf16.mxu0 0
      %5063 = vmatpush2.bf16.msra.mxu0 0
      %5064 = vmatprep.mubr.bf16.mxu0 0
      %5065 = vmatmul.mubr.bf16.gmra.mxu0 %v5012
      %v5066 = vpop.f32.mrf.mxu0
      %v5067 = vadd.f32 %v4998, %v5066
      %v5068 = vpop.f32.mrf.mxu0
      %v5069 = vpop.f32.mrf.mxu0
      %v5070 = vadd.f32 %v4998, %v5069
      %v5071 = vpop.f32.mrf.mxu0
      %5072 = vmatprep.mubr.bf16.mxu0 0
      %5073 = vmatmul.mubr.bf16.gmra.mxu0 %v5015
      %v5074 = vpop.f32.mrf.mxu0
      %v5075 = vadd.f32 %v4998, %v5074
      %v5076 = vpop.f32.mrf.mxu0
      %v5077 = vpop.f32.mrf.mxu0
      %v5078 = vadd.f32 %v4998, %v5077
      %v5079 = vpop.f32.mrf.mxu0
      %5080 = vmatprep.mubr.bf16.mxu0 0
      %5081 = vmatmul.mubr.bf16.gmra.mxu0 %v5018
      %v5082 = vpop.f32.mrf.mxu0
      %v5083 = vadd.f32 %v4998, %v5082
      %v5084 = vpop.f32.mrf.mxu0
      %v5085 = vpop.f32.mrf.mxu0
      %v5086 = vadd.f32 %v4998, %v5085
      %v5087 = vpop.f32.mrf.mxu0
      %5088 = vmatprep.mubr.bf16.mxu0 0
      %5089 = vmatmul.mubr.bf16.gmra.mxu0 %v5021
      %v5090 = vpop.f32.mrf.mxu0
      %v5091 = vadd.f32 %v4998, %v5090
      %v5092 = vpop.f32.mrf.mxu0
      %v5093 = vpop.f32.mrf.mxu0
      %v5094 = vadd.f32 %v4998, %v5093
      %v5095 = vpop.f32.mrf.mxu0
      %5096 = vmatprep.mubr.bf16.mxu0 0
      %5097 = vmatmul.mubr.bf16.gmra.mxu0 %v5024
      %v5098 = vpop.f32.mrf.mxu0
      %v5099 = vadd.f32 %v4998, %v5098
      %v5100 = vpop.f32.mrf.mxu0
      %v5101 = vpop.f32.mrf.mxu0
      %v5102 = vadd.f32 %v4998, %v5101
      %v5103 = vpop.f32.mrf.mxu0
      %5104 = vmatprep.mubr.bf16.mxu0 0
      %5105 = vmatmul.mubr.bf16.gmra.mxu0 %v5027
      %v5106 = vpop.f32.mrf.mxu0
      %v5107 = vadd.f32 %v4998, %v5106
      %v5108 = vpop.f32.mrf.mxu0
      %v5109 = vpop.f32.mrf.mxu0
      %v5110 = vadd.f32 %v4998, %v5109
      %v5111 = vpop.f32.mrf.mxu0
      %5112 = vmatprep.mubr.bf16.mxu0 0
      %5113 = vmatmul.mubr.bf16.gmra.mxu0 %v5030
      %v5114 = vpop.f32.mrf.mxu0
      %v5115 = vadd.f32 %v4998, %v5114
      %v5116 = vpop.f32.mrf.mxu0
      %v5117 = vpop.f32.mrf.mxu0
      %v5118 = vadd.f32 %v4998, %v5117
      %v5119 = vpop.f32.mrf.mxu0
      %5120 = vdwg.mxu0
      %v5121 = vmul.f32 %v5067, 0.5
      %v5122 = vmul.f32 %v5070, 0.5
      %v5123 = vmul.f32 %v5075, 0.5
      %v5124 = vmul.f32 %v5078, 0.5
      %v5125 = vmul.f32 %v5083, 0.5
      %v5126 = vmul.f32 %v5086, 0.5
      %v5127 = vmul.f32 %v5091, 0.5
      %v5128 = vmul.f32 %v5094, 0.5
      %v5129 = vmul.f32 %v5099, 0.5
      %v5130 = vmul.f32 %v5102, 0.5
      %v5131 = vmul.f32 %v5107, 0.5
      %v5132 = vmul.f32 %v5110, 0.5
      %v5133 = vmul.f32 %v5115, 0.5
      %v5134 = vmul.f32 %v5118, 0.5
      %v5135 = vmul.f32 %v5067, 0.044715
      %v5136 = vmul.f32 %v5070, 0.044715
      %v5137 = vmul.f32 %v5075, 0.044715
      %v5138 = vmul.f32 %v5078, 0.044715
      %v5139 = vmul.f32 %v5083, 0.044715
      %v5140 = vmul.f32 %v5086, 0.044715
      %v5141 = vmul.f32 %v5091, 0.044715
      %v5142 = vmul.f32 %v5094, 0.044715
      %v5143 = vmul.f32 %v5099, 0.044715
      %v5144 = vmul.f32 %v5102, 0.044715
      %v5145 = vmul.f32 %v5107, 0.044715
      %v5146 = vmul.f32 %v5110, 0.044715
      %v5147 = vmul.f32 %v5115, 0.044715
      %v5148 = vmul.f32 %v5118, 0.044715
      %v5149 = vmul.f32 %v5135, %v5067
      %v5150 = vmul.f32 %v5136, %v5070
      %v5151 = vmul.f32 %v5137, %v5075
      %v5152 = vmul.f32 %v5138, %v5078
      %v5153 = vmul.f32 %v5139, %v5083
      %v5154 = vmul.f32 %v5140, %v5086
      %v5155 = vmul.f32 %v5141, %v5091
      %v5156 = vmul.f32 %v5142, %v5094
      %v5157 = vmul.f32 %v5143, %v5099
      %v5158 = vmul.f32 %v5144, %v5102
      %v5159 = vmul.f32 %v5145, %v5107
      %v5160 = vmul.f32 %v5146, %v5110
      %v5161 = vmul.f32 %v5147, %v5115
      %v5162 = vmul.f32 %v5148, %v5118
      %v5163 = vmul.f32 %v5149, %v5067
      %v5164 = vmul.f32 %v5150, %v5070
      %v5165 = vmul.f32 %v5151, %v5075
      %v5166 = vmul.f32 %v5152, %v5078
      %v5167 = vmul.f32 %v5153, %v5083
      %v5168 = vmul.f32 %v5154, %v5086
      %v5169 = vmul.f32 %v5155, %v5091
      %v5170 = vmul.f32 %v5156, %v5094
      %v5171 = vmul.f32 %v5157, %v5099
      %v5172 = vmul.f32 %v5158, %v5102
      %v5173 = vmul.f32 %v5159, %v5107
      %v5174 = vmul.f32 %v5160, %v5110
      %v5175 = vmul.f32 %v5161, %v5115
      %v5176 = vmul.f32 %v5162, %v5118
      %v5177 = vadd.f32 %v5067, %v5163
      %v5178 = vadd.f32 %v5070, %v5164
      %v5179 = vadd.f32 %v5075, %v5165
      %v5180 = vadd.f32 %v5078, %v5166
      %v5181 = vadd.f32 %v5083, %v5167
      %v5182 = vadd.f32 %v5086, %v5168
      %v5183 = vadd.f32 %v5091, %v5169
      %v5184 = vadd.f32 %v5094, %v5170
      %v5185 = vadd.f32 %v5099, %v5171
      %v5186 = vadd.f32 %v5102, %v5172
      %v5187 = vadd.f32 %v5107, %v5173
      %v5188 = vadd.f32 %v5110, %v5174
      %v5189 = vadd.f32 %v5115, %v5175
      %v5190 = vadd.f32 %v5118, %v5176
      %v5191 = vmul.f32 %v5177, 0.7978846
      %v5192 = vmul.f32 %v5178, 0.7978846
      %v5193 = vmul.f32 %v5179, 0.7978846
      %v5194 = vmul.f32 %v5180, 0.7978846
      %v5195 = vmul.f32 %v5181, 0.7978846
      %v5196 = vmul.f32 %v5182, 0.7978846
      %v5197 = vmul.f32 %v5183, 0.7978846
      %v5198 = vmul.f32 %v5184, 0.7978846
      %v5199 = vmul.f32 %v5185, 0.7978846
      %v5200 = vmul.f32 %v5186, 0.7978846
      %v5201 = vmul.f32 %v5187, 0.7978846
      %v5202 = vmul.f32 %v5188, 0.7978846
      %v5203 = vmul.f32 %v5189, 0.7978846
      %v5204 = vmul.f32 %v5190, 0.7978846
      %v5205 = vtanh.pop %v5191
      %v5206 = vtanh.pop %v5192
      %v5207 = vtanh.pop %v5193
      %v5208 = vtanh.pop %v5194
      %v5209 = vtanh.pop %v5195
      %v5210 = vtanh.pop %v5196
      %v5211 = vtanh.pop %v5197
      %v5212 = vtanh.pop %v5198
      %v5213 = vtanh.pop %v5199
      %v5214 = vtanh.pop %v5200
      %v5215 = vtanh.pop %v5201
      %v5216 = vtanh.pop %v5202
      %v5217 = vtanh.pop %v5203
      %v5218 = vtanh.pop %v5204
      %v5219 = vadd.f32 %v5205, 1.0
      %v5220 = vadd.f32 %v5206, 1.0
      %v5221 = vadd.f32 %v5207, 1.0
      %v5222 = vadd.f32 %v5208, 1.0
      %v5223 = vadd.f32 %v5209, 1.0
      %v5224 = vadd.f32 %v5210, 1.0
      %v5225 = vadd.f32 %v5211, 1.0
      %v5226 = vadd.f32 %v5212, 1.0
      %v5227 = vadd.f32 %v5213, 1.0
      %v5228 = vadd.f32 %v5214, 1.0
      %v5229 = vadd.f32 %v5215, 1.0
      %v5230 = vadd.f32 %v5216, 1.0
      %v5231 = vadd.f32 %v5217, 1.0
      %v5232 = vadd.f32 %v5218, 1.0
      %v5233 = vmul.f32 %v5121, %v5219
      %v5234 = vmul.f32 %v5122, %v5220
      %v5235 = vmul.f32 %v5123, %v5221
      %v5236 = vmul.f32 %v5124, %v5222
      %v5237 = vmul.f32 %v5125, %v5223
      %v5238 = vmul.f32 %v5126, %v5224
      %v5239 = vmul.f32 %v5127, %v5225
      %v5240 = vmul.f32 %v5128, %v5226
      %v5241 = vmul.f32 %v5129, %v5227
      %v5242 = vmul.f32 %v5130, %v5228
      %v5243 = vmul.f32 %v5131, %v5229
      %v5244 = vmul.f32 %v5132, %v5230
      %v5245 = vmul.f32 %v5133, %v5231
      %v5246 = vmul.f32 %v5134, %v5232
      %v5247 = vpack.c.bf16 %v5234, %v5233
      %v5248 = vpack.c.bf16 %v5236, %v5235
      %v5249 = vpack.c.bf16 %v5238, %v5237
      %v5250 = vpack.c.bf16 %v5240, %v5239
      %v5251 = vpack.c.bf16 %v5242, %v5241
      %v5252 = vpack.c.bf16 %v5244, %v5243
      %v5253 = vpack.c.bf16 %v5246, %v5245
      %v5254 = vld [vmem:[%s405] sm:$0xf]
      %v5255 = vld [vmem:[%s405 + $0x4] sm:$0xf]
      %v5256 = vld [vmem:[%s405 + $0x8] sm:$0xf]
      %v5257 = vld [vmem:[%s405 + $0xc] sm:$0xf]
      %v5258 = vlaneseq
      %v5259 = vshrl.u32 %v5258, 7
      %v5260 = vsub.s32 1, %v5259
      %v5261 = vrot.slane %v460, %v5260
      %v5266 = vunpack.c.l.b16 %v5254
      %v5267 = vunpack.c.l.b16 %v5255
      %v5268 = vunpack.c.l.b16 %v5256
      %v5269 = vunpack.c.l.b16 %v5257
      %v5270 = vpack.c.b16 %v5267, %v5266
      %v5271 = vpack.c.b16 %v5269, %v5268
      %v5275 = vsel %vm461, %v5247, 0
      %v5278 = vsel %vm461, %v5248, 0
      %v5281 = vsel %vm461, %v5249, 0
      %v5284 = vsel %vm461, %v5250, 0
      %v5287 = vsel %vm461, %v5251, 0
      %v5290 = vsel %vm461, %v5252, 0
      %v5293 = vsel %vm461, %v5253, 0
      %5295 = vmatprep.subr.bf16.mxu0 0
      %5296 = vmatpush1.bf16.msra.mxu0 0
      %5297 = vmatprep.subr.bf16.mxu0 0
      %5298 = vmatpush1.bf16.msra.mxu0 0
      %5299 = vmatprep.subr.bf16.mxu0 0
      %5300 = vmatpush1.bf16.msra.mxu0 0
      %5301 = vmatprep.subr.bf16.mxu0 0
      %5302 = vmatpush1.bf16.msra.mxu0 0
      %5303 = vmatprep.subr.bf16.mxu0 0
      %5304 = vmatpush1.bf16.msra.mxu0 0
      %5305 = vmatprep.subr.bf16.mxu0 0
      %5306 = vmatpush1.bf16.msra.mxu0 0
      %5307 = vmatprep.subr.bf16.mxu0 0
      %5308 = vmatpush1.bf16.msra.mxu0 %v5271
      %5309 = vmatprep.subr.bf16.mxu0 0
      %5310 = vmatpush1.bf16.msra.mxu0 %v5270
      %5311 = vmatprep.subr.bf16.mxu0 0
      %5312 = vmatpush2.bf16.msra.mxu0 0
      %5313 = vmatprep.subr.bf16.mxu0 0
      %5314 = vmatpush2.bf16.msra.mxu0 0
      %5315 = vmatprep.subr.bf16.mxu0 0
      %5316 = vmatpush2.bf16.msra.mxu0 0
      %5317 = vmatprep.subr.bf16.mxu0 0
      %5318 = vmatpush2.bf16.msra.mxu0 0
      %5319 = vmatprep.subr.bf16.mxu0 0
      %5320 = vmatpush2.bf16.msra.mxu0 0
      %5321 = vmatprep.subr.bf16.mxu0 0
      %5322 = vmatpush2.bf16.msra.mxu0 0
      %5323 = vmatprep.subr.bf16.mxu0 0
      %5324 = vmatpush2.bf16.msra.mxu0 0
      %5325 = vmatprep.subr.bf16.mxu0 0
      %5326 = vmatpush2.bf16.msra.mxu0 0
      %5327 = vmatprep.mubr.bf16.mxu0 0
      %5328 = vmatmul.mubr.bf16.gmra.mxu0 %v5275
      %v5329 = vpop.f32.mrf.mxu0
      %v5330 = vadd.f32 %v5261, %v5329
      %v5331 = vpop.f32.mrf.mxu0
      %v5332 = vpop.f32.mrf.mxu0
      %v5333 = vadd.f32 %v5261, %v5332
      %v5334 = vpop.f32.mrf.mxu0
      %5335 = vmatprep.mubr.bf16.mxu0 0
      %5336 = vmatmul.mubr.bf16.gmra.mxu0 %v5278
      %v5337 = vpop.f32.mrf.mxu0
      %v5338 = vadd.f32 %v5261, %v5337
      %v5339 = vpop.f32.mrf.mxu0
      %v5340 = vpop.f32.mrf.mxu0
      %v5341 = vadd.f32 %v5261, %v5340
      %v5342 = vpop.f32.mrf.mxu0
      %5343 = vmatprep.mubr.bf16.mxu0 0
      %5344 = vmatmul.mubr.bf16.gmra.mxu0 %v5281
      %v5345 = vpop.f32.mrf.mxu0
      %v5346 = vadd.f32 %v5261, %v5345
      %v5347 = vpop.f32.mrf.mxu0
      %v5348 = vpop.f32.mrf.mxu0
      %v5349 = vadd.f32 %v5261, %v5348
      %v5350 = vpop.f32.mrf.mxu0
      %5351 = vmatprep.mubr.bf16.mxu0 0
      %5352 = vmatmul.mubr.bf16.gmra.mxu0 %v5284
      %v5353 = vpop.f32.mrf.mxu0
      %v5354 = vadd.f32 %v5261, %v5353
      %v5355 = vpop.f32.mrf.mxu0
      %v5356 = vpop.f32.mrf.mxu0
      %v5357 = vadd.f32 %v5261, %v5356
      %v5358 = vpop.f32.mrf.mxu0
      %5359 = vmatprep.mubr.bf16.mxu0 0
      %5360 = vmatmul.mubr.bf16.gmra.mxu0 %v5287
      %v5361 = vpop.f32.mrf.mxu0
      %v5362 = vadd.f32 %v5261, %v5361
      %v5363 = vpop.f32.mrf.mxu0
      %v5364 = vpop.f32.mrf.mxu0
      %v5365 = vadd.f32 %v5261, %v5364
      %v5366 = vpop.f32.mrf.mxu0
      %5367 = vmatprep.mubr.bf16.mxu0 0
      %5368 = vmatmul.mubr.bf16.gmra.mxu0 %v5290
      %v5369 = vpop.f32.mrf.mxu0
      %v5370 = vadd.f32 %v5261, %v5369
      %v5371 = vpop.f32.mrf.mxu0
      %v5372 = vpop.f32.mrf.mxu0
      %v5373 = vadd.f32 %v5261, %v5372
      %v5374 = vpop.f32.mrf.mxu0
      %5375 = vmatprep.mubr.bf16.mxu0 0
      %5376 = vmatmul.mubr.bf16.gmra.mxu0 %v5293
      %v5377 = vpop.f32.mrf.mxu0
      %v5378 = vadd.f32 %v5261, %v5377
      %v5379 = vpop.f32.mrf.mxu0
      %v5380 = vpop.f32.mrf.mxu0
      %v5381 = vadd.f32 %v5261, %v5380
      %v5382 = vpop.f32.mrf.mxu0
      %5383 = vdwg.mxu0
      %v5384 = vadd.f32 %v4752, %v5330
      %v5385 = vadd.f32 %v4753, %v5333
      %v5386 = vadd.f32 %v4754, %v5338
      %v5387 = vadd.f32 %v4755, %v5341
      %v5388 = vadd.f32 %v4756, %v5346
      %v5389 = vadd.f32 %v4757, %v5349
      %v5390 = vadd.f32 %v4758, %v5354
      %v5391 = vadd.f32 %v4759, %v5357
      %v5392 = vadd.f32 %v4760, %v5362
      %v5393 = vadd.f32 %v4761, %v5365
      %v5394 = vadd.f32 %v4762, %v5370
      %v5395 = vadd.f32 %v4763, %v5373
      %v5396 = vadd.f32 %v4764, %v5378
      %v5397 = vadd.f32 %v4765, %v5381
      %5398 = vst.msk [vmem:[#allocation2] sm:$0xff] %vm461, %v5384
      %5399 = vst.msk [vmem:[#allocation2 + $0x8] sm:$0xff] %vm461, %v5385
      %5400 = vst.msk [vmem:[#allocation2 + $0x10] sm:$0xff] %vm461, %v5386
      %5401 = vst.msk [vmem:[#allocation2 + $0x18] sm:$0xff] %vm461, %v5387
      %5402 = vst.msk [vmem:[#allocation2 + $0x20] sm:$0xff] %vm461, %v5388
      %5403 = vst.msk [vmem:[#allocation2 + $0x28] sm:$0xff] %vm461, %v5389
      %5404 = vst.msk [vmem:[#allocation2 + $0x30] sm:$0xff] %vm461, %v5390
      %5405 = vst.msk [vmem:[#allocation2 + $0x38] sm:$0xff] %vm461, %v5391
      %5406 = vst.msk [vmem:[#allocation2 + $0x40] sm:$0xff] %vm461, %v5392
      %5407 = vst.msk [vmem:[#allocation2 + $0x48] sm:$0xff] %vm461, %v5393
      %5408 = vst.msk [vmem:[#allocation2 + $0x50] sm:$0xff] %vm461, %v5394
      %5409 = vst.msk [vmem:[#allocation2 + $0x58] sm:$0xff] %vm461, %v5395
      %5410 = vst.msk [vmem:[#allocation2 + $0x60] sm:$0xff] %vm461, %v5396
      %5411 = vst.msk [vmem:[#allocation2 + $0x68] sm:$0xff] %vm461, %v5397
      %vm5412 = vcmask 253952
      %5413 = vst.msk [vmem:[%s8] sm:$0x1] %vm5412, %v5384
      %5414 = vst.msk [vmem:[%s8 + $0x1] sm:$0x1] %vm5412, %v5391
      // Predicated region
      $region57: #{ast_with_head_forward.1} parent=51 // pred_check
        %p5415 = pneg %p235
      $region58: #{ast_with_head_forward.1} parent=51 // pred_check_branch
        %5417 = sbr.rel (%p5415) target = $region60
      $region59: #{ast_with_head_forward.1} parent=51 // pred_region
        _
      $region60: #{ast_with_head_forward.1} parent=51 // pred_fallthru
        _
      // Predicated region
      $region61: #{ast_with_head_forward.1} parent=51 // pred_check
        %p5418 = pneg %p235
      $region62: #{ast_with_head_forward.1} parent=51 // pred_check_branch
        %5420 = sbr.rel (%p5418) target = $region64
      $region63: #{ast_with_head_forward.1} parent=51 // pred_region
        _
      $region64: #{ast_with_head_forward.1} parent=51 // pred_fallthru
        _
    $region52: #{ast_with_head_forward.1} parent=5 // pred_fallthru
      _
    %p5421 = scmp.le.s32.totalorder 2, %s14
    // Predicated region
    $region65: #{ast_with_head_forward.1} parent=5 // pred_check
      %p5422 = pneg %p5421
    $region66: #{ast_with_head_forward.1} parent=5 // pred_check_branch
      %5424 = sbr.rel (%p5422) target = $region68
    $region67: #{ast_with_head_forward.1} parent=5 // pred_region
      %s5425 = ssub.s32 %s14, 2
    $region68: #{ast_with_head_forward.1} parent=5 // pred_fallthru
      _
  $region6: #{ast_with_head_forward.1} parent=0 // loop_footer
    %s18 = sadd.s32 1, %s14
  $region7: #{ast_with_head_forward.1} parent=0 // loop_footer_branch
    %13 = sbr.rel target = $region3
  $region8: #{ast_with_head_forward.1} parent=0 // loop_exit
    _

</llo_original>
